<compile_context>
chip_gen: v7x
topology: tpu7x:2x2x1
jax: 0.10.0
libtpu: 0.0.40
codegen_flags: <defaults>
</compile_context>

<pallas_src>
import functools

import jax
import jax.numpy as jnp
import numpy as np
from jax import lax
from jax.experimental import pallas as pl
from jax.experimental.pallas import tpu as pltpu


def dense_layer_kernel(x_ref, pack_ref, w1t_ref, w2t_ref, o_ref,
                       *, H, W, cin, cmid, mm_dtype, mm_precision):
    """BN1+ReLU -> 1x1 conv -> (+shift2)+ReLU -> 3x3 conv, (C, M) dataflow."""
    Bn = x_ref.shape[0]
    M = H * W

    # Packed per-channel vectors, channel on sublanes -> broadcast along lanes.
    s1 = pack_ref[:cin, 0:1]          # (Cin, 1)  BN1 scale
    b1 = pack_ref[:cin, 1:2]          # (Cin, 1)  BN1 shift
    t2 = pack_ref[:cmid, 2:3]         # (Cmid, 1) BN2 shift (scale folded into w1)
    w1t = w1t_ref[...]                # (Cmid, Cin)   -- BN2 scale pre-folded
    w2t = w2t_ref[...]                # (Cout, 9*Cmid)

    for b in range(Bn):               # Bn is tiny (usually 1); static unroll
        # ---- BN1 (eval) + ReLU ------------------------------------------ VPU
        x = x_ref[b]                                        # (Cin, M), M on lanes
        y = jnp.maximum(x * s1 + b1, 0.0)

        # ---- conv1: 1x1 conv == channel matmul --------------------------- MXU
        h = jnp.dot(w1t, y.astype(mm_dtype),
                    preferred_element_type=jnp.float32,
                    precision=mm_precision)                 # (Cmid, M) f32

        # ---- BN2 shift + ReLU, cast early so im2col lives in mm_dtype ---- VPU
        h = jnp.maximum(h + t2, 0.0).astype(mm_dtype)

        # ---- conv2: 3x3, pad=1, as ONE im2col matmul (K = 9*Cmid) ---------
        h3 = h.reshape(cmid, H, W)
        zc = jnp.zeros((cmid, H, 1), mm_dtype)
        zr = jnp.zeros((cmid, 1, W + 2), mm_dtype)
        hp = jnp.concatenate([zc, h3, zc], axis=2)          # (Cmid, H,   W+2)
        hp = jnp.concatenate([zr, hp, zr], axis=1)          # (Cmid, H+2, W+2)
        taps = [hp[:, di:di + H, dj:dj + W]                 # (kh, kw) major,
                for di in range(3) for dj in range(3)]      # channel minor
        col = jnp.concatenate(taps, axis=0).reshape(9 * cmid, M)

        out = jnp.dot(w2t, col,
                      preferred_element_type=jnp.float32,
                      precision=mm_precision)               # (Cout, M) f32

        # ---- lane-dense store, already in NC(HW) order --------------------
        o_ref[b] = out.astype(o_ref.dtype)


def dense_layer_forward(x_nchw, params, *, drop_rate=0.0, training=False,
                        eps=1e-5, matmul_dtype=None):
    """Pallas implementation of DenseLayer.forward (eval / inference mode)."""
    if drop_rate > 0.0 and training:
        # TODO(synk): training-mode dropout (pltpu.prng_seed + stateful_bernoulli).
        raise NotImplementedError("training-mode dropout not implemented")

    if matmul_dtype is None:
        # bf16 MXU operands on every TPU generation; f32 elsewhere (CPU interp).
        matmul_dtype = (jnp.bfloat16 if jax.default_backend() == "tpu"
                        else jnp.float32)
    mm_precision = (lax.Precision.HIGHEST
                    if matmul_dtype == jnp.float32 else None)

    g1, be1, m1, v1 = params["g1"], params["b1"], params["m1"], params["v1"]
    g2, be2, m2, v2 = params["g2"], params["b2"], params["m2"], params["v2"]
    w1_t, w2_t = params["w1"], params["w2"]          # torch-shaped conv weights

    N, Cin, H, W = x_nchw.shape
    Cmid = w1_t.shape[0]
    Cout = w2_t.shape[0]
    M = H * W

    # Fold BatchNorm (eval) into per-channel scale/shift.  BN2's scale is folded
    # directly into the 1x1 conv weight (valid: BN2 is linear and applied before
    # ReLU2).  Do NOT fold scale1 through ReLU1.
    scale1 = g1 / jnp.sqrt(v1 + eps)
    shift1 = be1 - m1 * scale1
    scale2 = g2 / jnp.sqrt(v2 + eps)
    shift2 = be2 - m2 * scale2

    # One packed (Cmax, 3) f32 array: [:,0]=scale1, [:,1]=shift1, [:,2]=shift2.
    cmax = max(Cin, Cmid)
    pack = jnp.zeros((cmax, 3), jnp.float32)
    pack = pack.at[:Cin, 0].set(scale1)
    pack = pack.at[:Cin, 1].set(shift1)
    pack = pack.at[:Cmid, 2].set(shift2)

    # Weights in (out, K) form so both dots are weight_T @ activation.
    w1t = (w1_t[:, :, 0, 0] * scale2[:, None]).astype(matmul_dtype)   # (Cmid, Cin)
    w2t = jnp.transpose(w2_t, (0, 2, 3, 1)).reshape(Cout, 9 * Cmid)   # (Cout, 9*Cmid)
    w2t = w2t.astype(matmul_dtype)

    # Free HBM-level reshape: NCHW -> (N, Cin, H*W); no transpose anywhere.
    x_flat = x_nchw.reshape(N, Cin, M)

    # ---- per-step VMEM working set (sum of live buffers, not just the max) ----
    es = jnp.dtype(matmul_dtype).itemsize
    per_image = (
        2 * Cin * M * 4                         # x block (double-buffered)
        + Cin * M * (4 + es)                    # BN1+ReLU result + mm-dtype copy
        + Cmid * M * (4 + es)                   # conv1 result + mm-dtype copy
        + Cmid * (H + 2) * (W + 2) * es         # zero-padded slab
        + 2 * 9 * Cmid * M * es                 # 9 taps + im2col matrix
        + 3 * Cout * M * 4                      # f32 result + out block (x2)
    )
    weight_bytes = 2 * ((Cmid * Cin + Cout * 9 * Cmid) * es + cmax * 3 * 4)
    budget = 6 << 20                            # fits v5e's 16 MiB scoped default

    # block_n: largest divisor of N that (a) fits the budget and (b) keeps the
    # grid at >= 2 steps so v7x can shard it and DMA double-buffering engages.
    block_n = max(1, min(N // 2 if N >= 2 else 1, budget // max(per_image, 1)))
    while N % block_n:
        block_n -= 1
    n_blocks = N // block_n
    vmem_limit = int(min(max(2 * (block_n * per_image + weight_bytes), 16 << 20),
                         40 << 20))

    kernel = functools.partial(dense_layer_kernel,
                               H=H, W=W, cin=Cin, cmid=Cmid,
                               mm_dtype=matmul_dtype,
                               mm_precision=mm_precision)

    out_flat = pl.pallas_call(
        kernel,
        out_shape=jax.ShapeDtypeStruct((N, Cout, M), x_nchw.dtype),
        grid_spec=pltpu.PrefetchScalarGridSpec(
            num_scalar_prefetch=0,
            grid=(n_blocks,),
            in_specs=[
                pl.BlockSpec((block_n, Cin, M), lambda n: (n, 0, 0)),
                pl.BlockSpec((cmax, 3), lambda n: (0, 0)),
                pl.BlockSpec((Cmid, Cin), lambda n: (0, 0)),
                pl.BlockSpec((Cout, 9 * Cmid), lambda n: (0, 0)),
            ],
            out_specs=pl.BlockSpec((block_n, Cout, M), lambda n: (n, 0, 0)),
        ),
        compiler_params=pltpu.CompilerParams(
            dimension_semantics=("parallel",),
            vmem_limit_bytes=vmem_limit),
    )(x_flat, pack, w1t, w2t)

    # (N, Cout, H*W) -> NCHW, free contiguous reshape.
    return out_flat.reshape(N, Cout, H, W)


def ref_forward(x_nchw, params, eps=1e-5):
    """Pure-JAX reference mirroring the PyTorch ops (eval mode, f32-exact convs)."""
    g1, be1, m1, v1 = params["g1"], params["b1"], params["m1"], params["v1"]
    g2, be2, m2, v2 = params["g2"], params["b2"], params["m2"], params["v2"]
    w1_t, w2_t = params["w1"], params["w2"]

    def bn(x, g, b, m, v):
        inv = g / jnp.sqrt(v + eps)
        return x * inv[None, :, None, None] + (b - m * inv)[None, :, None, None]

    y = jnp.maximum(bn(x_nchw, g1, be1, m1, v1), 0.0)
    h = lax.conv_general_dilated(y, w1_t, (1, 1), "VALID",
                                 dimension_numbers=("NCHW", "OIHW", "NCHW"),
                                 precision=lax.Precision.HIGHEST)
    h = jnp.maximum(bn(h, g2, be2, m2, v2), 0.0)
    out = lax.conv_general_dilated(h, w2_t, (1, 1), ((1, 1), (1, 1)),
                                   dimension_numbers=("NCHW", "OIHW", "NCHW"),
                                   precision=lax.Precision.HIGHEST)
    return out


if __name__ == "__main__":
    # Module hyper-params: num_input_features=16, growth_rate=8, bn_size=2, drop_rate=0.
    N, Cin, H, W = 2, 16, 8, 8
    growth_rate, bn_size = 8, 2
    Cmid, Cout = bn_size * growth_rate, growth_rate

    keys = jax.random.split(jax.random.PRNGKey(0), 11)
    x = jax.random.normal(keys[0], (N, Cin, H, W), jnp.float32)

    params = {
        # BatchNorm1 (gamma, beta, running_mean, running_var)
        "g1": jax.random.uniform(keys[1], (Cin,), jnp.float32, 0.5, 1.5),
        "b1": 0.1 * jax.random.normal(keys[2], (Cin,), jnp.float32),
        "m1": 0.1 * jax.random.normal(keys[3], (Cin,), jnp.float32),
        "v1": jax.random.uniform(keys[4], (Cin,), jnp.float32, 0.5, 1.5),
        # conv1 weight, torch shape (Cmid, Cin, 1, 1)
        "w1": jax.random.normal(keys[5], (Cmid, Cin, 1, 1), jnp.float32)
              / jnp.sqrt(Cin),
        # BatchNorm2
        "g2": jax.random.uniform(keys[6], (Cmid,), jnp.float32, 0.5, 1.5),
        "b2": 0.1 * jax.random.normal(keys[7], (Cmid,), jnp.float32),
        "m2": 0.1 * jax.random.normal(keys[8], (Cmid,), jnp.float32),
        "v2": jax.random.uniform(keys[9], (Cmid,), jnp.float32, 0.5, 1.5),
        # conv2 weight, torch shape (Cout, Cmid, 3, 3)
        "w2": jax.random.normal(keys[10], (Cout, Cmid, 3, 3), jnp.float32)
              / jnp.sqrt(Cmid * 9),
    }

    ref = ref_forward(x, params)

    # Default path: bf16 MXU operands on real TPU hardware, f32 elsewhere.
    out = jax.block_until_ready(
        jax.jit(lambda a: dense_layer_forward(a, params))(x))
    assert out.shape == (N, Cout, H, W)

    tol = 2e-2 if jax.default_backend() == "tpu" else 1e-4
    np.testing.assert_allclose(np.asarray(out), np.asarray(ref),
                               rtol=tol, atol=tol)

    print("KERNEL_OK")
</pallas_src>

<mosaic_0001>
module attributes {stable_mosaic.version = 11 : i64} {
  func.func @dense_layer_kernel(%arg0: i32, %arg1: memref<1x16x64xf32, #tpu.memory_space<vmem>>, %arg2: memref<16x3xf32, #tpu.memory_space<vmem>>, %arg3: memref<16x16xf32, #tpu.memory_space<vmem>>, %arg4: memref<8x144xf32, #tpu.memory_space<vmem>>, %arg5: memref<1x8x64xf32, #tpu.memory_space<vmem>>) attributes {dimension_semantics = [#tpu.dimension_semantics<parallel>], iteration_bounds = array<i64: 2>, scalar_prefetch = 0 : i64, scratch_operands = 0 : i64, tpu.core_type = #tpu.core_type<tc>, window_params = [{transform_indices = @transform_0, window_bounds = array<i64: 1, 16, 64>}, {pipeline_mode = #tpu.pipeline_mode<synchronous>, transform_indices = @transform_1, window_bounds = array<i64: 16, 3>}, {pipeline_mode = #tpu.pipeline_mode<synchronous>, transform_indices = @transform_2, window_bounds = array<i64: 16, 16>}, {pipeline_mode = #tpu.pipeline_mode<synchronous>, transform_indices = @transform_3, window_bounds = array<i64: 8, 144>}, {transform_indices = @transform_4, window_bounds = array<i64: 1, 8, 64>}]} {
    %c0 = arith.constant 0 : index
    %c0_0 = arith.constant 0 : index
    %0 = vector.load %arg2[%c0, %c0_0] : memref<16x3xf32, #tpu.memory_space<vmem>>, vector<16x1xf32>
    %c0_1 = arith.constant 0 : index
    %c1 = arith.constant 1 : index
    %1 = vector.load %arg2[%c0_1, %c1] : memref<16x3xf32, #tpu.memory_space<vmem>>, vector<16x1xf32>
    %c0_2 = arith.constant 0 : index
    %c2 = arith.constant 2 : index
    %2 = vector.load %arg2[%c0_2, %c2] : memref<16x3xf32, #tpu.memory_space<vmem>>, vector<16x1xf32>
    %c0_3 = arith.constant 0 : index
    %c0_4 = arith.constant 0 : index
    %3 = vector.load %arg3[%c0_3, %c0_4] : memref<16x16xf32, #tpu.memory_space<vmem>>, vector<16x16xf32>
    %c0_5 = arith.constant 0 : index
    %c0_6 = arith.constant 0 : index
    %4 = vector.load %arg4[%c0_5, %c0_6] : memref<8x144xf32, #tpu.memory_space<vmem>>, vector<8x144xf32>
    %c0_7 = arith.constant 0 : index
    %c0_8 = arith.constant 0 : index
    %c0_9 = arith.constant 0 : index
    %5 = vector.load %arg1[%c0_7, %c0_8, %c0_9] : memref<1x16x64xf32, #tpu.memory_space<vmem>>, vector<1x16x64xf32>
    %6 = vector.shape_cast %5 : vector<1x16x64xf32> to vector<16x64xf32>
    %7 = vector.broadcast %0 : vector<16x1xf32> to vector<16x64xf32>
    %8 = arith.mulf %6, %7 : vector<16x64xf32>
    %9 = vector.broadcast %1 : vector<16x1xf32> to vector<16x64xf32>
    %10 = arith.addf %8, %9 : vector<16x64xf32>
    %cst = arith.constant 0.000000e+00 : f32
    %11 = vector.broadcast %cst : f32 to vector<16x64xf32>
    %12 = arith.maximumf %10, %11 : vector<16x64xf32>
    %cst_10 = arith.constant dense<0.000000e+00> : vector<16x64xf32>
    %13 = tpu.matmul %3, %12, %cst_10 {dimension_numbers = #tpu.dot_dimension_numbers<[1], [0], [0], [1], [0, 0, 1, 1], [], []>, precision = #tpu.contract_precision<fp32>} : vector<16x16xf32>, vector<16x64xf32>, vector<16x64xf32> -> vector<16x64xf32>
    %14 = vector.broadcast %2 : vector<16x1xf32> to vector<16x64xf32>
    %15 = arith.addf %13, %14 : vector<16x64xf32>
    %cst_11 = arith.constant 0.000000e+00 : f32
    %16 = vector.broadcast %cst_11 : f32 to vector<16x64xf32>
    %17 = arith.maximumf %15, %16 : vector<16x64xf32>
    %18 = vector.shape_cast %17 : vector<16x64xf32> to vector<16x8x8xf32>
    %cst_12 = arith.constant 0.000000e+00 : f32
    %19 = vector.broadcast %cst_12 : f32 to vector<16x8x1xf32>
    %cst_13 = arith.constant 0.000000e+00 : f32
    %20 = vector.broadcast %cst_13 : f32 to vector<16x1x10xf32>
    %21 = tpu.concatenate %19, %18, %19 in 2 : vector<16x8x1xf32>, vector<16x8x8xf32>, vector<16x8x1xf32> -> vector<16x8x10xf32>
    %22 = tpu.concatenate %20, %21, %20 in 1 : vector<16x1x10xf32>, vector<16x8x10xf32>, vector<16x1x10xf32> -> vector<16x10x10xf32>
    %23 = vector.extract_strided_slice %22 {offsets = [0, 0, 0], sizes = [16, 8, 8], strides = [1, 1, 1]} : vector<16x10x10xf32> to vector<16x8x8xf32>
    %24 = vector.extract_strided_slice %22 {offsets = [0, 0, 1], sizes = [16, 8, 8], strides = [1, 1, 1]} : vector<16x10x10xf32> to vector<16x8x8xf32>
    %25 = vector.extract_strided_slice %22 {offsets = [0, 0, 2], sizes = [16, 8, 8], strides = [1, 1, 1]} : vector<16x10x10xf32> to vector<16x8x8xf32>
    %26 = vector.extract_strided_slice %22 {offsets = [0, 1, 0], sizes = [16, 8, 8], strides = [1, 1, 1]} : vector<16x10x10xf32> to vector<16x8x8xf32>
    %27 = vector.extract_strided_slice %22 {offsets = [0, 1, 1], sizes = [16, 8, 8], strides = [1, 1, 1]} : vector<16x10x10xf32> to vector<16x8x8xf32>
    %28 = vector.extract_strided_slice %22 {offsets = [0, 1, 2], sizes = [16, 8, 8], strides = [1, 1, 1]} : vector<16x10x10xf32> to vector<16x8x8xf32>
    %29 = vector.extract_strided_slice %22 {offsets = [0, 2, 0], sizes = [16, 8, 8], strides = [1, 1, 1]} : vector<16x10x10xf32> to vector<16x8x8xf32>
    %30 = vector.extract_strided_slice %22 {offsets = [0, 2, 1], sizes = [16, 8, 8], strides = [1, 1, 1]} : vector<16x10x10xf32> to vector<16x8x8xf32>
    %31 = vector.extract_strided_slice %22 {offsets = [0, 2, 2], sizes = [16, 8, 8], strides = [1, 1, 1]} : vector<16x10x10xf32> to vector<16x8x8xf32>
    %32 = tpu.concatenate %23, %24, %25, %26, %27, %28, %29, %30, %31 in 0 : vector<16x8x8xf32>, vector<16x8x8xf32>, vector<16x8x8xf32>, vector<16x8x8xf32>, vector<16x8x8xf32>, vector<16x8x8xf32>, vector<16x8x8xf32>, vector<16x8x8xf32>, vector<16x8x8xf32> -> vector<144x8x8xf32>
    %33 = vector.shape_cast %32 : vector<144x8x8xf32> to vector<144x64xf32>
    %cst_14 = arith.constant dense<0.000000e+00> : vector<8x64xf32>
    %34 = tpu.matmul %4, %33, %cst_14 {dimension_numbers = #tpu.dot_dimension_numbers<[1], [0], [0], [1], [0, 0, 1, 1], [], []>, precision = #tpu.contract_precision<fp32>} : vector<8x144xf32>, vector<144x64xf32>, vector<8x64xf32> -> vector<8x64xf32>
    %c0_15 = arith.constant 0 : index
    %c0_16 = arith.constant 0 : index
    %c0_17 = arith.constant 0 : index
    %35 = vector.load %arg5[%c0_15, %c0_16, %c0_17] : memref<1x8x64xf32, #tpu.memory_space<vmem>>, vector<1x8x64xf32>
    %36 = vector.shape_cast %35 : vector<1x8x64xf32> to vector<8x64xf32>
    %37 = vector.shape_cast %34 : vector<8x64xf32> to vector<1x8x64xf32>
    tpu.vector_store %arg5[%c0_15, %c0_16, %c0_17], %37 {strides = array<i32>} : memref<1x8x64xf32, #tpu.memory_space<vmem>>, vector<1x8x64xf32>,
    return
  }
  func.func @transform_0(%arg0: i32) -> (i32, i32, i32) {
    %c0_i32 = arith.constant 0 : i32
    %c0_i32_0 = arith.constant 0 : i32
    %c0_i32_1 = arith.constant 0 : i32
    return %arg0, %c0_i32, %c0_i32_0 : i32, i32, i32
  }
  func.func @transform_1(%arg0: i32) -> (i32, i32) {
    %c0_i32 = arith.constant 0 : i32
    %c0_i32_0 = arith.constant 0 : i32
    %c0_i32_1 = arith.constant 0 : i32
    return %c0_i32, %c0_i32_0 : i32, i32
  }
  func.func @transform_2(%arg0: i32) -> (i32, i32) {
    %c0_i32 = arith.constant 0 : i32
    %c0_i32_0 = arith.constant 0 : i32
    %c0_i32_1 = arith.constant 0 : i32
    return %c0_i32, %c0_i32_0 : i32, i32
  }
  func.func @transform_3(%arg0: i32) -> (i32, i32) {
    %c0_i32 = arith.constant 0 : i32
    %c0_i32_0 = arith.constant 0 : i32
    %c0_i32_1 = arith.constant 0 : i32
    return %c0_i32, %c0_i32_0 : i32, i32
  }
  func.func @transform_4(%arg0: i32) -> (i32, i32, i32) {
    %c0_i32 = arith.constant 0 : i32
    %c0_i32_0 = arith.constant 0 : i32
    %c0_i32_1 = arith.constant 0 : i32
    return %arg0, %c0_i32, %c0_i32_0 : i32, i32, i32
  }
}

</mosaic_0001>

<llo_original>
// kernel: _lambda_.1
$region0: #{_lambda_.1}
  #allocation0 [shape = 'u32[]', space=smem, size = 0x4, offset = 0x4, fixed_abs, tag = 'smem constant byte address 0x4 - core index']
  #allocation1 [shape = 'u32[144,128]{1,0:T(1,128)}', space=vmem, size = 0x12000, scoped, tag = 'internal scratch']
  %s0 = inlined_call_operand.vmem [shape: f32[2,16,64], index: 0, kind: input, shape index: {}]
  %s1 = inlined_call_operand.vmem [shape: f32[16,3], index: 1, kind: input, shape index: {}]
  %s2 = inlined_call_operand.vmem [shape: f32[16,16], index: 2, kind: input, shape index: {}]
  %s3 = inlined_call_operand.vmem [shape: f32[8,144], index: 3, kind: input, shape index: {}]
  %s4 = inlined_call_operand.vmem [shape: f32[2,8,64], index: 4, kind: output, shape index: {}]
  %s5 = sld [smem:[#allocation0]]
  $region49: #{_lambda_.1} parent=0
    _
  %s7 = ssub.s32 1, %s5
  %s8 = scalar_select 0, %s7, %s5
  loop: start=0, step=1, limit=4
  $region2: #{_lambda_.1} parent=0 // loop_pre_header
    _
  $region3: #{_lambda_.1} parent=0 // loop_header
    %s10 = sphi 0, %s14
    %p11 = scmp.ge.s32.totalorder %s10, 4
    %s20 = sphi 0, %s22
    %s23 = sphi 0, %s20
    %s24 = sphi 0, %s23
    %s40 = sphi 0, %s24
    %s44 = sphi 0, %s44
    %s46 = sphi 0, %s44
    %s47 = sphi 0, %s46
    %s61 = sphi 0, %s47
    %s65 = sphi 0, %s65
    %s67 = sphi 0, %s65
    %s68 = sphi 0, %s67
    %s82 = sphi 0, %s68
    %s86 = sphi 0, %s86
    %s88 = sphi 0, %s86
    %s89 = sphi 0, %s88
    %s103 = sphi 0, %s89
    %s109 = sphi 0, %s111
    %s112 = sphi 0, %s109
    %s113 = sphi 0, %s112
    %s129 = sphi 0, %s113
  $region4: #{_lambda_.1} parent=0 // loop_header_branch
    %13 = sbr.rel (%p11) target = $region8
  $region5: #{_lambda_.1} parent=0 // loop_body
    %s15 = ssub.s32 %s10, 1
    %s16 = ssub.s32 %s10, 2
    %s17 = sadd.s32 %s10, 1
    %s18 = ssub.s32 %s10, %s17
    %p19 = scmp.eq.s32.totalorder %s18, 0
    %s21 = sadd.s32 %s20, 1
    %s22 = scalar_select %p19, %s20, %s21
    %p25 = pneg %p19
    %p26 = scmp.eq.s32.totalorder %s10, 1
    %p27 = por %p25, %p26
    %p28 = scmp.ne.s32.totalorder %s20, %s23
    %p29 = scmp.eq.s32.totalorder %s10, 0
    %p30 = por %p28, %p29
    %p31 = scmp.ne.s32.totalorder %s20, %s23
    %p32 = scmp.eq.s32.totalorder %s15, 1
    %p33 = por %p31, %p32
    %p34 = scmp.ne.s32.totalorder %s23, %s24
    %p35 = scmp.eq.s32.totalorder %s15, 0
    %p36 = por %p34, %p35
    %p37 = scmp.ne.s32.totalorder %s23, %s24
    %p38 = scmp.eq.s32.totalorder %s16, 1
    %p39 = por %p37, %p38
    %p41 = scmp.ne.s32.totalorder %s24, %s40
    %p42 = scmp.eq.s32.totalorder %s16, 0
    %p43 = por %p41, %p42
    %s45 = sadd.s32 %s44, 1
    %p48 = scmp.eq.s32.totalorder %s10, 1
    %p49 = scmp.ne.s32.totalorder %s44, %s46
    %p50 = scmp.eq.s32.totalorder %s10, 0
    %p51 = por %p49, %p50
    %p52 = scmp.ne.s32.totalorder %s44, %s46
    %p53 = scmp.eq.s32.totalorder %s15, 1
    %p54 = por %p52, %p53
    %p55 = scmp.ne.s32.totalorder %s46, %s47
    %p56 = scmp.eq.s32.totalorder %s15, 0
    %p57 = por %p55, %p56
    %p58 = scmp.ne.s32.totalorder %s46, %s47
    %p59 = scmp.eq.s32.totalorder %s16, 1
    %p60 = por %p58, %p59
    %p62 = scmp.ne.s32.totalorder %s47, %s61
    %p63 = scmp.eq.s32.totalorder %s16, 0
    %p64 = por %p62, %p63
    %s66 = sadd.s32 %s65, 1
    %p69 = scmp.eq.s32.totalorder %s10, 1
    %p70 = scmp.ne.s32.totalorder %s65, %s67
    %p71 = scmp.eq.s32.totalorder %s10, 0
    %p72 = por %p70, %p71
    %p73 = scmp.ne.s32.totalorder %s65, %s67
    %p74 = scmp.eq.s32.totalorder %s15, 1
    %p75 = por %p73, %p74
    %p76 = scmp.ne.s32.totalorder %s67, %s68
    %p77 = scmp.eq.s32.totalorder %s15, 0
    %p78 = por %p76, %p77
    %p79 = scmp.ne.s32.totalorder %s67, %s68
    %p80 = scmp.eq.s32.totalorder %s16, 1
    %p81 = por %p79, %p80
    %p83 = scmp.ne.s32.totalorder %s68, %s82
    %p84 = scmp.eq.s32.totalorder %s16, 0
    %p85 = por %p83, %p84
    %s87 = sadd.s32 %s86, 1
    %p90 = scmp.eq.s32.totalorder %s10, 1
    %p91 = scmp.ne.s32.totalorder %s86, %s88
    %p92 = scmp.eq.s32.totalorder %s10, 0
    %p93 = por %p91, %p92
    %p94 = scmp.ne.s32.totalorder %s86, %s88
    %p95 = scmp.eq.s32.totalorder %s15, 1
    %p96 = por %p94, %p95
    %p97 = scmp.ne.s32.totalorder %s88, %s89
    %p98 = scmp.eq.s32.totalorder %s15, 0
    %p99 = por %p97, %p98
    %p100 = scmp.ne.s32.totalorder %s88, %s89
    %p101 = scmp.eq.s32.totalorder %s16, 1
    %p102 = por %p100, %p101
    %p104 = scmp.ne.s32.totalorder %s89, %s103
    %p105 = scmp.eq.s32.totalorder %s16, 0
    %p106 = por %p104, %p105
    %s107 = ssub.s32 %s10, %s17
    %p108 = scmp.eq.s32.totalorder %s107, 0
    %s110 = sadd.s32 %s109, 1
    %s111 = scalar_select %p108, %s109, %s110
    %p114 = pneg %p108
    %p115 = scmp.eq.s32.totalorder %s10, 1
    %p116 = por %p114, %p115
    %p117 = scmp.ne.s32.totalorder %s109, %s112
    %p118 = scmp.eq.s32.totalorder %s10, 0
    %p119 = por %p117, %p118
    %p120 = scmp.ne.s32.totalorder %s109, %s112
    %p121 = scmp.eq.s32.totalorder %s15, 1
    %p122 = por %p120, %p121
    %p123 = scmp.ne.s32.totalorder %s112, %s113
    %p124 = scmp.eq.s32.totalorder %s15, 0
    %p125 = por %p123, %p124
    %p126 = scmp.ne.s32.totalorder %s112, %s113
    %p127 = scmp.eq.s32.totalorder %s16, 1
    %p128 = por %p126, %p127
    %p130 = scmp.ne.s32.totalorder %s113, %s129
    %p131 = scmp.eq.s32.totalorder %s16, 0
    %p132 = por %p130, %p131
    %p133 = scmp.le.s32.totalorder 1, %s10
    %p134 = scmp.lt.s32.totalorder %s10, 3
    %p135 = pnand %p133, %p134
    %p136 = pneg %p135
    // Predicated region
    $region9: #{_lambda_.1} parent=5 // pred_check
      _
    $region10: #{_lambda_.1} parent=5 // pred_check_branch
      %138 = sbr.rel (%p135) target = $region12
    $region11: #{_lambda_.1} parent=5 // pred_region
      %s139 = ssub.s32 %s10, 1
      // Predicated region
      $region13: #{_lambda_.1} parent=11 // pred_check
        %p140 = pneg %p57
      $region14: #{_lambda_.1} parent=11 // pred_check_branch
        %142 = sbr.rel (%p140) target = $region16
      $region15: #{_lambda_.1} parent=11 // pred_region
        _
      $region16: #{_lambda_.1} parent=11 // pred_fallthru
        _
      // Predicated region
      $region17: #{_lambda_.1} parent=11 // pred_check
        %p143 = pneg %p78
      $region18: #{_lambda_.1} parent=11 // pred_check_branch
        %145 = sbr.rel (%p143) target = $region20
      $region19: #{_lambda_.1} parent=11 // pred_region
        _
      $region20: #{_lambda_.1} parent=11 // pred_fallthru
        _
      // Predicated region
      $region21: #{_lambda_.1} parent=11 // pred_check
        %p146 = pneg %p99
      $region22: #{_lambda_.1} parent=11 // pred_check_branch
        %148 = sbr.rel (%p146) target = $region24
      $region23: #{_lambda_.1} parent=11 // pred_region
        _
      $region24: #{_lambda_.1} parent=11 // pred_fallthru
        _
    $region12: #{_lambda_.1} parent=5 // pred_fallthru
      _
    %p149 = scmp.lt.s32.totalorder %s10, 2
    // Predicated region
    $region25: #{_lambda_.1} parent=5 // pred_check
      %p150 = pneg %p149
    $region26: #{_lambda_.1} parent=5 // pred_check_branch
      %152 = sbr.rel (%p150) target = $region28
    $region27: #{_lambda_.1} parent=5 // pred_region
      // Predicated region
      $region29: #{_lambda_.1} parent=27 // pred_check
        %p153 = pneg %p30
      $region30: #{_lambda_.1} parent=27 // pred_check_branch
        %155 = sbr.rel (%p153) target = $region32
      $region31: #{_lambda_.1} parent=27 // pred_region
        %p156 = scmp.lt.s32.totalorder %s10, 1
        %s157 = scalar_select %p156, %s10, 1
        %s158 = smul.addr %s157, 2
        %s159 = smul.addr %s158, 8
        %s160 = scalar_lea.vmem %s0, %s159
      $region32: #{_lambda_.1} parent=27 // pred_fallthru
        _
    $region28: #{_lambda_.1} parent=5 // pred_fallthru
      _
    %p161 = scmp.le.s32.totalorder 1, %s10
    %p162 = scmp.lt.s32.totalorder %s10, 3
    %p163 = pnand %p161, %p162
    %p164 = pneg %p163
    // Predicated region
    $region33: #{_lambda_.1} parent=5 // pred_check
      _
    $region34: #{_lambda_.1} parent=5 // pred_check_branch
      %166 = sbr.rel (%p163) target = $region36
    $region35: #{_lambda_.1} parent=5 // pred_region
      %s167 = ssub.s32 %s10, 1
      %p168 = scmp.lt.s32.totalorder %s15, 1
      %s169 = scalar_select %p168, %s15, 1
      %s170 = smul.addr %s169, 2
      %s171 = smul.addr %s170, 8
      %s172 = scalar_lea.vmem %s0, %s171
      %p173 = pneg %p36
      %p174 = pneg %p33
      %p175 = pneg %p57
      %p176 = pneg %p54
      %p177 = pneg %p78
      %p178 = pneg %p75
      %p179 = pneg %p99
      %p180 = pneg %p96
      %p181 = pneg %p125
      %p182 = pneg %p122
      %p183 = scmp.lt.s32.totalorder %s15, 1
      %s184 = scalar_select %p183, %s15, 1
      %s185 = smul.addr %s184, 8
      %s186 = scalar_lea.vmem %s4, %s185
      %p187 = scmp.lt.s32.totalorder %s15, 1
      %s188 = scalar_select %p187, %s15, 1
      %s189 = smul.addr %s188, 2
      %s190 = smul.addr %s189, 8
      %s191 = scalar_lea.vmem %s0, %s190
      %p192 = scmp.lt.s32.totalorder %s15, 1
      %s193 = scalar_select %p192, %s15, 1
      %s194 = smul.addr %s193, 8
      %s195 = scalar_lea.vmem %s4, %s194
      %v196 = vld [vmem:[%s1] sm:$0xff]
      %v197 = vld [vmem:[%s1 + $0x8] sm:$0xff]
      %v198 = vld [vmem:[%s2] sm:$0xff]
      %v199 = vld [vmem:[%s2 + $0x8] sm:$0xff]
      %v200 = vld [vmem:[%s3] sm:$0xff]
      %v201 = vld [vmem:[%s3 + $0x8] sm:$0xff]
      %v202 = vld [vmem:[%s191] sm:$0xff]
      %v203 = vld [vmem:[%s191 + $0x8] sm:$0xff]
      %205 = vset.pattern.permute.xlu0 0
      %206 = vperm.xlu0 %205, %v196
      %v207 = vpop.permute.xlu0 %206
      %210 = vset.pattern.permute.xlu0 0
      %211 = vperm.xlu0 %210, %v197
      %v212 = vpop.permute.xlu0 %211
      %v214 = vmul.f32 %v202, %v207
      %v215 = vmul.f32 %v203, %v212
      %216 = vset.pattern.permute.xlu0 1
      %217 = vperm.xlu0 %216, %v196
      %v218 = vpop.permute.xlu0 %217
      %220 = vset.pattern.permute.xlu0 1
      %221 = vperm.xlu0 %220, %v197
      %v222 = vpop.permute.xlu0 %221
      %v224 = vadd.f32 %v214, %v218
      %v225 = vadd.f32 %v215, %v222
      %v226 = vmax.f32 %v224, 0.0
      %v227 = vmax.f32 %v225, 0.0
      %228 = vset.pattern.permute.xlu0 2
      %229 = vperm.xlu0 %228, %v196
      %v230 = vpop.permute.xlu0 %229
      %232 = vset.pattern.permute.xlu0 2
      %233 = vperm.xlu0 %232, %v197
      %v234 = vpop.permute.xlu0 %233
      %vm236 = vcmask 130048
      %v238 = vsel %vm236, %v198, 0
      %v241 = vsel %vm236, %v199, 0
      %243 = vmatprep.subr.mxu0 0.0
      %v244 = vand.u32 %v226, 4294901760
      %245 = vmatpush1.msra.mxu0 %v244
      %246 = vmatprep.subr.mxu0 0.0
      %v247 = vand.u32 %v227, 4294901760
      %248 = vmatpush1.msra.mxu0 %v247
      %249 = vmatprep.subr.mxu0 0.0
      %250 = vmatpush1.msra.mxu0 0.0
      %251 = vmatprep.subr.mxu0 0.0
      %252 = vmatpush1.msra.mxu0 0.0
      %253 = vmatprep.subr.mxu0 0.0
      %254 = vmatpush1.msra.mxu0 0.0
      %255 = vmatprep.subr.mxu0 0.0
      %256 = vmatpush1.msra.mxu0 0.0
      %257 = vmatprep.subr.mxu0 0.0
      %258 = vmatpush1.msra.mxu0 0.0
      %259 = vmatprep.subr.mxu0 0.0
      %260 = vmatpush1.msra.mxu0 0.0
      %261 = vmatprep.subr.mxu0 0.0
      %262 = vmatpush1.msra.mxu0 0.0
      %263 = vmatprep.subr.mxu0 0.0
      %264 = vmatpush1.msra.mxu0 0.0
      %265 = vmatprep.subr.mxu0 0.0
      %266 = vmatpush1.msra.mxu0 0.0
      %267 = vmatprep.subr.mxu0 0.0
      %268 = vmatpush1.msra.mxu0 0.0
      %269 = vmatprep.subr.mxu0 0.0
      %270 = vmatpush1.msra.mxu0 0.0
      %271 = vmatprep.subr.mxu0 0.0
      %272 = vmatpush1.msra.mxu0 0.0
      %273 = vmatprep.subr.mxu0 0.0
      %274 = vmatpush1.msra.mxu0 0.0
      %275 = vmatprep.subr.mxu0 0.0
      %276 = vmatpush1.msra.mxu0 0.0
      %277 = vmatprep.subr.mxu0 0.0
      %278 = vmatpush1.msra.mxu0 0.0
      %279 = vmatprep.subr.mxu0 0.0
      %280 = vmatpush1.msra.mxu0 0.0
      %281 = vmatprep.subr.mxu0 0.0
      %282 = vmatpush1.msra.mxu0 0.0
      %283 = vmatprep.subr.mxu0 0.0
      %284 = vmatpush1.msra.mxu0 0.0
      %285 = vmatprep.subr.mxu0 0.0
      %286 = vmatpush1.msra.mxu0 0.0
      %287 = vmatprep.subr.mxu0 0.0
      %288 = vmatpush1.msra.mxu0 0.0
      %289 = vmatprep.subr.mxu0 0.0
      %290 = vmatpush1.msra.mxu0 0.0
      %291 = vmatprep.subr.mxu0 0.0
      %292 = vmatpush1.msra.mxu0 0.0
      %293 = vmatprep.subr.mxu0 0.0
      %294 = vmatpush1.msra.mxu0 0.0
      %295 = vmatprep.subr.mxu0 0.0
      %296 = vmatpush1.msra.mxu0 0.0
      %297 = vmatprep.subr.mxu0 0.0
      %298 = vmatpush1.msra.mxu0 0.0
      %299 = vmatprep.subr.mxu0 0.0
      %300 = vmatpush1.msra.mxu0 0.0
      %301 = vmatprep.subr.mxu0 0.0
      %302 = vmatpush1.msra.mxu0 0.0
      %303 = vmatprep.subr.mxu0 0.0
      %304 = vmatpush1.msra.mxu0 0.0
      %305 = vmatprep.subr.mxu0 0.0
      %306 = vmatpush1.msra.mxu0 0.0
      %307 = vmatprep.subr.mxu0 0.0
      %308 = vmatpush1.msra.mxu0 0.0
      %309 = vmatprep.mubr.f32.mxu0 0.0
      %v310 = vand.u32 %v238, 4294901760
      %v311 = vsub.f32 %v238, %v310
      %v312 = vand.u32 %v311, 4294901760
      %v313 = vsub.f32 %v311, %v312
      %v314 = vand.u32 %v313, 4294901760
      %315 = vmatmul.mubr.f32.gmra.mrb[0].mxu0 %v314
      %v316 = vpop.f32.mrb[0].mxu0
      %v317 = vadd.f32 %v230, %v316
      %v318 = vpop.f32.mrb[0].mxu0
      %319 = vmatprep.mubr.f32.mxu0 0.0
      %v320 = vand.u32 %v241, 4294901760
      %v321 = vsub.f32 %v241, %v320
      %v322 = vand.u32 %v321, 4294901760
      %v323 = vsub.f32 %v321, %v322
      %v324 = vand.u32 %v323, 4294901760
      %325 = vmatmul.mubr.f32.gmra.mrb[0].mxu0 %v324
      %v326 = vpop.f32.mrb[0].mxu0
      %v327 = vadd.f32 %v234, %v326
      %v328 = vpop.f32.mrb[0].mxu0
      %329 = vdwg.mxu0
      %330 = vmatprep.subr.mxu0 0.0
      %v331 = vand.u32 %v226, 4294901760
      %v332 = vsub.f32 %v226, %v331
      %v333 = vand.u32 %v332, 4294901760
      %v334 = vsub.f32 %v332, %v333
      %v335 = vand.u32 %v334, 4294901760
      %336 = vmatpush1.msra.mxu0 %v335
      %337 = vmatprep.subr.mxu0 0.0
      %v338 = vand.u32 %v227, 4294901760
      %v339 = vsub.f32 %v227, %v338
      %v340 = vand.u32 %v339, 4294901760
      %v341 = vsub.f32 %v339, %v340
      %v342 = vand.u32 %v341, 4294901760
      %343 = vmatpush1.msra.mxu0 %v342
      %344 = vmatprep.subr.mxu0 0.0
      %345 = vmatpush1.msra.mxu0 0.0
      %346 = vmatprep.subr.mxu0 0.0
      %347 = vmatpush1.msra.mxu0 0.0
      %348 = vmatprep.subr.mxu0 0.0
      %349 = vmatpush1.msra.mxu0 0.0
      %350 = vmatprep.subr.mxu0 0.0
      %351 = vmatpush1.msra.mxu0 0.0
      %352 = vmatprep.subr.mxu0 0.0
      %353 = vmatpush1.msra.mxu0 0.0
      %354 = vmatprep.subr.mxu0 0.0
      %355 = vmatpush1.msra.mxu0 0.0
      %356 = vmatprep.subr.mxu0 0.0
      %357 = vmatpush1.msra.mxu0 0.0
      %358 = vmatprep.subr.mxu0 0.0
      %359 = vmatpush1.msra.mxu0 0.0
      %360 = vmatprep.subr.mxu0 0.0
      %361 = vmatpush1.msra.mxu0 0.0
      %362 = vmatprep.subr.mxu0 0.0
      %363 = vmatpush1.msra.mxu0 0.0
      %364 = vmatprep.subr.mxu0 0.0
      %365 = vmatpush1.msra.mxu0 0.0
      %366 = vmatprep.subr.mxu0 0.0
      %367 = vmatpush1.msra.mxu0 0.0
      %368 = vmatprep.subr.mxu0 0.0
      %369 = vmatpush1.msra.mxu0 0.0
      %370 = vmatprep.subr.mxu0 0.0
      %371 = vmatpush1.msra.mxu0 0.0
      %372 = vmatprep.subr.mxu0 0.0
      %373 = vmatpush1.msra.mxu0 0.0
      %374 = vmatprep.subr.mxu0 0.0
      %375 = vmatpush1.msra.mxu0 0.0
      %376 = vmatprep.subr.mxu0 0.0
      %377 = vmatpush1.msra.mxu0 0.0
      %378 = vmatprep.subr.mxu0 0.0
      %379 = vmatpush1.msra.mxu0 0.0
      %380 = vmatprep.subr.mxu0 0.0
      %381 = vmatpush1.msra.mxu0 0.0
      %382 = vmatprep.subr.mxu0 0.0
      %383 = vmatpush1.msra.mxu0 0.0
      %384 = vmatprep.subr.mxu0 0.0
      %385 = vmatpush1.msra.mxu0 0.0
      %386 = vmatprep.subr.mxu0 0.0
      %387 = vmatpush1.msra.mxu0 0.0
      %388 = vmatprep.subr.mxu0 0.0
      %389 = vmatpush1.msra.mxu0 0.0
      %390 = vmatprep.subr.mxu0 0.0
      %391 = vmatpush1.msra.mxu0 0.0
      %392 = vmatprep.subr.mxu0 0.0
      %393 = vmatpush1.msra.mxu0 0.0
      %394 = vmatprep.subr.mxu0 0.0
      %395 = vmatpush1.msra.mxu0 0.0
      %396 = vmatprep.subr.mxu0 0.0
      %397 = vmatpush1.msra.mxu0 0.0
      %398 = vmatprep.subr.mxu0 0.0
      %399 = vmatpush1.msra.mxu0 0.0
      %400 = vmatprep.subr.mxu0 0.0
      %401 = vmatpush1.msra.mxu0 0.0
      %402 = vmatprep.subr.mxu0 0.0
      %403 = vmatpush1.msra.mxu0 0.0
      %404 = vmatprep.mubr.f32.mxu0 0.0
      %v405 = vand.u32 %v238, 4294901760
      %406 = vmatmul.mubr.f32.gmra.mrb[0].mxu0 %v405
      %v407 = vpop.f32.mrb[0].mxu0
      %v408 = vadd.f32 %v317, %v407
      %v409 = vpop.f32.mrb[0].mxu0
      %410 = vmatprep.mubr.f32.mxu0 0.0
      %v411 = vand.u32 %v241, 4294901760
      %412 = vmatmul.mubr.f32.gmra.mrb[0].mxu0 %v411
      %v413 = vpop.f32.mrb[0].mxu0
      %v414 = vadd.f32 %v327, %v413
      %v415 = vpop.f32.mrb[0].mxu0
      %416 = vdwg.mxu0
      %417 = vmatprep.subr.mxu0 0.0
      %v418 = vand.u32 %v226, 4294901760
      %v419 = vsub.f32 %v226, %v418
      %420 = vmatpush1.msra.mxu0 %v419
      %421 = vmatprep.subr.mxu0 0.0
      %v422 = vand.u32 %v227, 4294901760
      %v423 = vsub.f32 %v227, %v422
      %424 = vmatpush1.msra.mxu0 %v423
      %425 = vmatprep.subr.mxu0 0.0
      %426 = vmatpush1.msra.mxu0 0.0
      %427 = vmatprep.subr.mxu0 0.0
      %428 = vmatpush1.msra.mxu0 0.0
      %429 = vmatprep.subr.mxu0 0.0
      %430 = vmatpush1.msra.mxu0 0.0
      %431 = vmatprep.subr.mxu0 0.0
      %432 = vmatpush1.msra.mxu0 0.0
      %433 = vmatprep.subr.mxu0 0.0
      %434 = vmatpush1.msra.mxu0 0.0
      %435 = vmatprep.subr.mxu0 0.0
      %436 = vmatpush1.msra.mxu0 0.0
      %437 = vmatprep.subr.mxu0 0.0
      %438 = vmatpush1.msra.mxu0 0.0
      %439 = vmatprep.subr.mxu0 0.0
      %440 = vmatpush1.msra.mxu0 0.0
      %441 = vmatprep.subr.mxu0 0.0
      %442 = vmatpush1.msra.mxu0 0.0
      %443 = vmatprep.subr.mxu0 0.0
      %444 = vmatpush1.msra.mxu0 0.0
      %445 = vmatprep.subr.mxu0 0.0
      %446 = vmatpush1.msra.mxu0 0.0
      %447 = vmatprep.subr.mxu0 0.0
      %448 = vmatpush1.msra.mxu0 0.0
      %449 = vmatprep.subr.mxu0 0.0
      %450 = vmatpush1.msra.mxu0 0.0
      %451 = vmatprep.subr.mxu0 0.0
      %452 = vmatpush1.msra.mxu0 0.0
      %453 = vmatprep.subr.mxu0 0.0
      %454 = vmatpush1.msra.mxu0 0.0
      %455 = vmatprep.subr.mxu0 0.0
      %456 = vmatpush1.msra.mxu0 0.0
      %457 = vmatprep.subr.mxu0 0.0
      %458 = vmatpush1.msra.mxu0 0.0
      %459 = vmatprep.subr.mxu0 0.0
      %460 = vmatpush1.msra.mxu0 0.0
      %461 = vmatprep.subr.mxu0 0.0
      %462 = vmatpush1.msra.mxu0 0.0
      %463 = vmatprep.subr.mxu0 0.0
      %464 = vmatpush1.msra.mxu0 0.0
      %465 = vmatprep.subr.mxu0 0.0
      %466 = vmatpush1.msra.mxu0 0.0
      %467 = vmatprep.subr.mxu0 0.0
      %468 = vmatpush1.msra.mxu0 0.0
      %469 = vmatprep.subr.mxu0 0.0
      %470 = vmatpush1.msra.mxu0 0.0
      %471 = vmatprep.subr.mxu0 0.0
      %472 = vmatpush1.msra.mxu0 0.0
      %473 = vmatprep.subr.mxu0 0.0
      %474 = vmatpush1.msra.mxu0 0.0
      %475 = vmatprep.subr.mxu0 0.0
      %476 = vmatpush1.msra.mxu0 0.0
      %477 = vmatprep.subr.mxu0 0.0
      %478 = vmatpush1.msra.mxu0 0.0
      %479 = vmatprep.subr.mxu0 0.0
      %480 = vmatpush1.msra.mxu0 0.0
      %481 = vmatprep.subr.mxu0 0.0
      %482 = vmatpush1.msra.mxu0 0.0
      %483 = vmatprep.subr.mxu0 0.0
      %484 = vmatpush1.msra.mxu0 0.0
      %485 = vmatprep.mubr.f32.mxu0 0.0
      %v486 = vand.u32 %v238, 4294901760
      %v487 = vsub.f32 %v238, %v486
      %488 = vmatmul.mubr.f32.gmra.mrb[0].mxu0 %v487
      %v489 = vpop.f32.mrb[0].mxu0
      %v490 = vadd.f32 %v408, %v489
      %v491 = vpop.f32.mrb[0].mxu0
      %492 = vmatprep.mubr.f32.mxu0 0.0
      %v493 = vand.u32 %v241, 4294901760
      %v494 = vsub.f32 %v241, %v493
      %495 = vmatmul.mubr.f32.gmra.mrb[0].mxu0 %v494
      %v496 = vpop.f32.mrb[0].mxu0
      %v497 = vadd.f32 %v414, %v496
      %v498 = vpop.f32.mrb[0].mxu0
      %499 = vdwg.mxu0
      %500 = vmatprep.subr.mxu0 0.0
      %v501 = vand.u32 %v226, 4294901760
      %502 = vmatpush1.msra.mxu0 %v501
      %503 = vmatprep.subr.mxu0 0.0
      %v504 = vand.u32 %v227, 4294901760
      %505 = vmatpush1.msra.mxu0 %v504
      %506 = vmatprep.subr.mxu0 0.0
      %507 = vmatpush1.msra.mxu0 0.0
      %508 = vmatprep.subr.mxu0 0.0
      %509 = vmatpush1.msra.mxu0 0.0
      %510 = vmatprep.subr.mxu0 0.0
      %511 = vmatpush1.msra.mxu0 0.0
      %512 = vmatprep.subr.mxu0 0.0
      %513 = vmatpush1.msra.mxu0 0.0
      %514 = vmatprep.subr.mxu0 0.0
      %515 = vmatpush1.msra.mxu0 0.0
      %516 = vmatprep.subr.mxu0 0.0
      %517 = vmatpush1.msra.mxu0 0.0
      %518 = vmatprep.subr.mxu0 0.0
      %519 = vmatpush1.msra.mxu0 0.0
      %520 = vmatprep.subr.mxu0 0.0
      %521 = vmatpush1.msra.mxu0 0.0
      %522 = vmatprep.subr.mxu0 0.0
      %523 = vmatpush1.msra.mxu0 0.0
      %524 = vmatprep.subr.mxu0 0.0
      %525 = vmatpush1.msra.mxu0 0.0
      %526 = vmatprep.subr.mxu0 0.0
      %527 = vmatpush1.msra.mxu0 0.0
      %528 = vmatprep.subr.mxu0 0.0
      %529 = vmatpush1.msra.mxu0 0.0
      %530 = vmatprep.subr.mxu0 0.0
      %531 = vmatpush1.msra.mxu0 0.0
      %532 = vmatprep.subr.mxu0 0.0
      %533 = vmatpush1.msra.mxu0 0.0
      %534 = vmatprep.subr.mxu0 0.0
      %535 = vmatpush1.msra.mxu0 0.0
      %536 = vmatprep.subr.mxu0 0.0
      %537 = vmatpush1.msra.mxu0 0.0
      %538 = vmatprep.subr.mxu0 0.0
      %539 = vmatpush1.msra.mxu0 0.0
      %540 = vmatprep.subr.mxu0 0.0
      %541 = vmatpush1.msra.mxu0 0.0
      %542 = vmatprep.subr.mxu0 0.0
      %543 = vmatpush1.msra.mxu0 0.0
      %544 = vmatprep.subr.mxu0 0.0
      %545 = vmatpush1.msra.mxu0 0.0
      %546 = vmatprep.subr.mxu0 0.0
      %547 = vmatpush1.msra.mxu0 0.0
      %548 = vmatprep.subr.mxu0 0.0
      %549 = vmatpush1.msra.mxu0 0.0
      %550 = vmatprep.subr.mxu0 0.0
      %551 = vmatpush1.msra.mxu0 0.0
      %552 = vmatprep.subr.mxu0 0.0
      %553 = vmatpush1.msra.mxu0 0.0
      %554 = vmatprep.subr.mxu0 0.0
      %555 = vmatpush1.msra.mxu0 0.0
      %556 = vmatprep.subr.mxu0 0.0
      %557 = vmatpush1.msra.mxu0 0.0
      %558 = vmatprep.subr.mxu0 0.0
      %559 = vmatpush1.msra.mxu0 0.0
      %560 = vmatprep.subr.mxu0 0.0
      %561 = vmatpush1.msra.mxu0 0.0
      %562 = vmatprep.subr.mxu0 0.0
      %563 = vmatpush1.msra.mxu0 0.0
      %564 = vmatprep.subr.mxu0 0.0
      %565 = vmatpush1.msra.mxu0 0.0
      %566 = vmatprep.mubr.f32.mxu0 0.0
      %v567 = vand.u32 %v238, 4294901760
      %v568 = vsub.f32 %v238, %v567
      %v569 = vand.u32 %v568, 4294901760
      %570 = vmatmul.mubr.f32.gmra.mrb[0].mxu0 %v569
      %v571 = vpop.f32.mrb[0].mxu0
      %v572 = vadd.f32 %v490, %v571
      %v573 = vpop.f32.mrb[0].mxu0
      %574 = vmatprep.mubr.f32.mxu0 0.0
      %v575 = vand.u32 %v241, 4294901760
      %v576 = vsub.f32 %v241, %v575
      %v577 = vand.u32 %v576, 4294901760
      %578 = vmatmul.mubr.f32.gmra.mrb[0].mxu0 %v577
      %v579 = vpop.f32.mrb[0].mxu0
      %v580 = vadd.f32 %v497, %v579
      %v581 = vpop.f32.mrb[0].mxu0
      %582 = vdwg.mxu0
      %583 = vmatprep.subr.mxu0 0.0
      %v584 = vand.u32 %v226, 4294901760
      %v585 = vsub.f32 %v226, %v584
      %v586 = vand.u32 %v585, 4294901760
      %587 = vmatpush1.msra.mxu0 %v586
      %588 = vmatprep.subr.mxu0 0.0
      %v589 = vand.u32 %v227, 4294901760
      %v590 = vsub.f32 %v227, %v589
      %v591 = vand.u32 %v590, 4294901760
      %592 = vmatpush1.msra.mxu0 %v591
      %593 = vmatprep.subr.mxu0 0.0
      %594 = vmatpush1.msra.mxu0 0.0
      %595 = vmatprep.subr.mxu0 0.0
      %596 = vmatpush1.msra.mxu0 0.0
      %597 = vmatprep.subr.mxu0 0.0
      %598 = vmatpush1.msra.mxu0 0.0
      %599 = vmatprep.subr.mxu0 0.0
      %600 = vmatpush1.msra.mxu0 0.0
      %601 = vmatprep.subr.mxu0 0.0
      %602 = vmatpush1.msra.mxu0 0.0
      %603 = vmatprep.subr.mxu0 0.0
      %604 = vmatpush1.msra.mxu0 0.0
      %605 = vmatprep.subr.mxu0 0.0
      %606 = vmatpush1.msra.mxu0 0.0
      %607 = vmatprep.subr.mxu0 0.0
      %608 = vmatpush1.msra.mxu0 0.0
      %609 = vmatprep.subr.mxu0 0.0
      %610 = vmatpush1.msra.mxu0 0.0
      %611 = vmatprep.subr.mxu0 0.0
      %612 = vmatpush1.msra.mxu0 0.0
      %613 = vmatprep.subr.mxu0 0.0
      %614 = vmatpush1.msra.mxu0 0.0
      %615 = vmatprep.subr.mxu0 0.0
      %616 = vmatpush1.msra.mxu0 0.0
      %617 = vmatprep.subr.mxu0 0.0
      %618 = vmatpush1.msra.mxu0 0.0
      %619 = vmatprep.subr.mxu0 0.0
      %620 = vmatpush1.msra.mxu0 0.0
      %621 = vmatprep.subr.mxu0 0.0
      %622 = vmatpush1.msra.mxu0 0.0
      %623 = vmatprep.subr.mxu0 0.0
      %624 = vmatpush1.msra.mxu0 0.0
      %625 = vmatprep.subr.mxu0 0.0
      %626 = vmatpush1.msra.mxu0 0.0
      %627 = vmatprep.subr.mxu0 0.0
      %628 = vmatpush1.msra.mxu0 0.0
      %629 = vmatprep.subr.mxu0 0.0
      %630 = vmatpush1.msra.mxu0 0.0
      %631 = vmatprep.subr.mxu0 0.0
      %632 = vmatpush1.msra.mxu0 0.0
      %633 = vmatprep.subr.mxu0 0.0
      %634 = vmatpush1.msra.mxu0 0.0
      %635 = vmatprep.subr.mxu0 0.0
      %636 = vmatpush1.msra.mxu0 0.0
      %637 = vmatprep.subr.mxu0 0.0
      %638 = vmatpush1.msra.mxu0 0.0
      %639 = vmatprep.subr.mxu0 0.0
      %640 = vmatpush1.msra.mxu0 0.0
      %641 = vmatprep.subr.mxu0 0.0
      %642 = vmatpush1.msra.mxu0 0.0
      %643 = vmatprep.subr.mxu0 0.0
      %644 = vmatpush1.msra.mxu0 0.0
      %645 = vmatprep.subr.mxu0 0.0
      %646 = vmatpush1.msra.mxu0 0.0
      %647 = vmatprep.subr.mxu0 0.0
      %648 = vmatpush1.msra.mxu0 0.0
      %649 = vmatprep.subr.mxu0 0.0
      %650 = vmatpush1.msra.mxu0 0.0
      %651 = vmatprep.subr.mxu0 0.0
      %652 = vmatpush1.msra.mxu0 0.0
      %653 = vmatprep.mubr.f32.mxu0 0.0
      %v654 = vand.u32 %v238, 4294901760
      %655 = vmatmul.mubr.f32.gmra.mrb[0].mxu0 %v654
      %v656 = vpop.f32.mrb[0].mxu0
      %v657 = vadd.f32 %v572, %v656
      %v658 = vpop.f32.mrb[0].mxu0
      %659 = vmatprep.mubr.f32.mxu0 0.0
      %v660 = vand.u32 %v241, 4294901760
      %661 = vmatmul.mubr.f32.gmra.mrb[0].mxu0 %v660
      %v662 = vpop.f32.mrb[0].mxu0
      %v663 = vadd.f32 %v580, %v662
      %v664 = vpop.f32.mrb[0].mxu0
      %665 = vdwg.mxu0
      %666 = vmatprep.subr.mxu0 0.0
      %v667 = vand.u32 %v226, 4294901760
      %668 = vmatpush1.msra.mxu0 %v667
      %669 = vmatprep.subr.mxu0 0.0
      %v670 = vand.u32 %v227, 4294901760
      %671 = vmatpush1.msra.mxu0 %v670
      %672 = vmatprep.subr.mxu0 0.0
      %673 = vmatpush1.msra.mxu0 0.0
      %674 = vmatprep.subr.mxu0 0.0
      %675 = vmatpush1.msra.mxu0 0.0
      %676 = vmatprep.subr.mxu0 0.0
      %677 = vmatpush1.msra.mxu0 0.0
      %678 = vmatprep.subr.mxu0 0.0
      %679 = vmatpush1.msra.mxu0 0.0
      %680 = vmatprep.subr.mxu0 0.0
      %681 = vmatpush1.msra.mxu0 0.0
      %682 = vmatprep.subr.mxu0 0.0
      %683 = vmatpush1.msra.mxu0 0.0
      %684 = vmatprep.subr.mxu0 0.0
      %685 = vmatpush1.msra.mxu0 0.0
      %686 = vmatprep.subr.mxu0 0.0
      %687 = vmatpush1.msra.mxu0 0.0
      %688 = vmatprep.subr.mxu0 0.0
      %689 = vmatpush1.msra.mxu0 0.0
      %690 = vmatprep.subr.mxu0 0.0
      %691 = vmatpush1.msra.mxu0 0.0
      %692 = vmatprep.subr.mxu0 0.0
      %693 = vmatpush1.msra.mxu0 0.0
      %694 = vmatprep.subr.mxu0 0.0
      %695 = vmatpush1.msra.mxu0 0.0
      %696 = vmatprep.subr.mxu0 0.0
      %697 = vmatpush1.msra.mxu0 0.0
      %698 = vmatprep.subr.mxu0 0.0
      %699 = vmatpush1.msra.mxu0 0.0
      %700 = vmatprep.subr.mxu0 0.0
      %701 = vmatpush1.msra.mxu0 0.0
      %702 = vmatprep.subr.mxu0 0.0
      %703 = vmatpush1.msra.mxu0 0.0
      %704 = vmatprep.subr.mxu0 0.0
      %705 = vmatpush1.msra.mxu0 0.0
      %706 = vmatprep.subr.mxu0 0.0
      %707 = vmatpush1.msra.mxu0 0.0
      %708 = vmatprep.subr.mxu0 0.0
      %709 = vmatpush1.msra.mxu0 0.0
      %710 = vmatprep.subr.mxu0 0.0
      %711 = vmatpush1.msra.mxu0 0.0
      %712 = vmatprep.subr.mxu0 0.0
      %713 = vmatpush1.msra.mxu0 0.0
      %714 = vmatprep.subr.mxu0 0.0
      %715 = vmatpush1.msra.mxu0 0.0
      %716 = vmatprep.subr.mxu0 0.0
      %717 = vmatpush1.msra.mxu0 0.0
      %718 = vmatprep.subr.mxu0 0.0
      %719 = vmatpush1.msra.mxu0 0.0
      %720 = vmatprep.subr.mxu0 0.0
      %721 = vmatpush1.msra.mxu0 0.0
      %722 = vmatprep.subr.mxu0 0.0
      %723 = vmatpush1.msra.mxu0 0.0
      %724 = vmatprep.subr.mxu0 0.0
      %725 = vmatpush1.msra.mxu0 0.0
      %726 = vmatprep.subr.mxu0 0.0
      %727 = vmatpush1.msra.mxu0 0.0
      %728 = vmatprep.subr.mxu0 0.0
      %729 = vmatpush1.msra.mxu0 0.0
      %730 = vmatprep.subr.mxu0 0.0
      %731 = vmatpush1.msra.mxu0 0.0
      %732 = vmatprep.mubr.f32.mxu0 0.0
      %v733 = vand.u32 %v238, 4294901760
      %734 = vmatmul.mubr.f32.gmra.mrb[0].mxu0 %v733
      %v735 = vpop.f32.mrb[0].mxu0
      %v736 = vadd.f32 %v657, %v735
      %v737 = vpop.f32.mrb[0].mxu0
      %738 = vmatprep.mubr.f32.mxu0 0.0
      %v739 = vand.u32 %v241, 4294901760
      %740 = vmatmul.mubr.f32.gmra.mrb[0].mxu0 %v739
      %v741 = vpop.f32.mrb[0].mxu0
      %v742 = vadd.f32 %v663, %v741
      %v743 = vpop.f32.mrb[0].mxu0
      %744 = vdwg.mxu0
      %v745 = vmax.f32 %v736, 0.0
      %v746 = vmax.f32 %v742, 0.0
      %749 = vrot.lane.b32.xlu0 %v745, 120
      %v750 = vpop.permute.xlu0 %749
      %751 = vrot.lane.b32.xlu0 %v746, 120
      %v752 = vpop.permute.xlu0 %751
      %755 = vrot.lane.b32.xlu0 %v745, 112
      %v756 = vpop.permute.xlu0 %755
      %757 = vrot.lane.b32.xlu0 %v746, 112
      %v758 = vpop.permute.xlu0 %757
      %761 = vrot.lane.b32.xlu0 %v745, 104
      %v762 = vpop.permute.xlu0 %761
      %763 = vrot.lane.b32.xlu0 %v746, 104
      %v764 = vpop.permute.xlu0 %763
      %767 = vrot.lane.b32.xlu0 %v745, 96
      %v768 = vpop.permute.xlu0 %767
      %769 = vrot.lane.b32.xlu0 %v746, 96
      %v770 = vpop.permute.xlu0 %769
      %773 = vrot.lane.b32.xlu0 %v745, 88
      %v774 = vpop.permute.xlu0 %773
      %775 = vrot.lane.b32.xlu0 %v746, 88
      %v776 = vpop.permute.xlu0 %775
      %779 = vrot.lane.b32.xlu0 %v745, 80
      %v780 = vpop.permute.xlu0 %779
      %781 = vrot.lane.b32.xlu0 %v746, 80
      %v782 = vpop.permute.xlu0 %781
      %785 = vrot.lane.b32.xlu0 %v745, 72
      %v786 = vpop.permute.xlu0 %785
      %787 = vrot.lane.b32.xlu0 %v746, 72
      %v788 = vpop.permute.xlu0 %787
      %v791 = vcombine.low %v745, %v756
      %v792 = vcombine.high %v745, %v756
      %v794 = vunpack.c.l.s4 1983009808
      %v795 = vunpack.c.0.s8 %v794
      %v796 = vlaneseq
      %v797 = vshrl.u32 %v796, 7
      %v798 = vsub.s32 %v795, %v797
      %v799 = vrot.slane %v791, %v798
      %v801 = vunpack.c.l.s4 1983009808
      %v802 = vunpack.c.0.s8 %v801
      %v803 = vlaneseq
      %v804 = vshrl.u32 %v803, 7
      %v805 = vsub.s32 %v802, %v804
      %v806 = vrot.slane %v792, %v805
      %v807 = vcombine.low %v750, %v762
      %v808 = vcombine.high %v750, %v762
      %v810 = vunpack.c.l.s4 1983009808
      %v811 = vunpack.c.0.s8 %v810
      %v812 = vlaneseq
      %v813 = vshrl.u32 %v812, 7
      %v814 = vsub.s32 %v811, %v813
      %v815 = vrot.slane %v807, %v814
      %v817 = vunpack.c.l.s4 1983009808
      %v818 = vunpack.c.0.s8 %v817
      %v819 = vlaneseq
      %v820 = vshrl.u32 %v819, 7
      %v821 = vsub.s32 %v818, %v820
      %v822 = vrot.slane %v808, %v821
      %v823 = vcombine.low %v768, %v780
      %v824 = vcombine.high %v768, %v780
      %v826 = vunpack.c.l.s4 1983009808
      %v827 = vunpack.c.0.s8 %v826
      %v828 = vlaneseq
      %v829 = vshrl.u32 %v828, 7
      %v830 = vsub.s32 %v827, %v829
      %v831 = vrot.slane %v823, %v830
      %v833 = vunpack.c.l.s4 1983009808
      %v834 = vunpack.c.0.s8 %v833
      %v835 = vlaneseq
      %v836 = vshrl.u32 %v835, 7
      %v837 = vsub.s32 %v834, %v836
      %v838 = vrot.slane %v824, %v837
      %v839 = vcombine.low %v774, %v786
      %v840 = vcombine.high %v774, %v786
      %v842 = vunpack.c.l.s4 1983009808
      %v843 = vunpack.c.0.s8 %v842
      %v844 = vlaneseq
      %v845 = vshrl.u32 %v844, 7
      %v846 = vsub.s32 %v843, %v845
      %v847 = vrot.slane %v839, %v846
      %v849 = vunpack.c.l.s4 1983009808
      %v850 = vunpack.c.0.s8 %v849
      %v851 = vlaneseq
      %v852 = vshrl.u32 %v851, 7
      %v853 = vsub.s32 %v850, %v852
      %v854 = vrot.slane %v840, %v853
      %v855 = vcombine.low %v799, %v815
      %v856 = vcombine.high %v799, %v815
      %v858 = vunpack.c.l.s4 1934713408
      %v859 = vunpack.c.0.s8 %v858
      %v860 = vlaneseq
      %v861 = vshrl.u32 %v860, 7
      %v862 = vsub.s32 %v859, %v861
      %v863 = vrot.slane %v855, %v862
      %v865 = vunpack.c.l.s4 1934713408
      %v866 = vunpack.c.0.s8 %v865
      %v867 = vlaneseq
      %v868 = vshrl.u32 %v867, 7
      %v869 = vsub.s32 %v866, %v868
      %v870 = vrot.slane %v856, %v869
      %v871 = vcombine.low %v806, %v822
      %v872 = vcombine.high %v806, %v822
      %v874 = vunpack.c.l.s4 1934713408
      %v875 = vunpack.c.0.s8 %v874
      %v876 = vlaneseq
      %v877 = vshrl.u32 %v876, 7
      %v878 = vsub.s32 %v875, %v877
      %v879 = vrot.slane %v871, %v878
      %v881 = vunpack.c.l.s4 1934713408
      %v882 = vunpack.c.0.s8 %v881
      %v883 = vlaneseq
      %v884 = vshrl.u32 %v883, 7
      %v885 = vsub.s32 %v882, %v884
      %v886 = vrot.slane %v872, %v885
      %v887 = vcombine.low %v831, %v847
      %v888 = vcombine.high %v831, %v847
      %v890 = vunpack.c.l.s4 1934713408
      %v891 = vunpack.c.0.s8 %v890
      %v892 = vlaneseq
      %v893 = vshrl.u32 %v892, 7
      %v894 = vsub.s32 %v891, %v893
      %v895 = vrot.slane %v887, %v894
      %v897 = vunpack.c.l.s4 1934713408
      %v898 = vunpack.c.0.s8 %v897
      %v899 = vlaneseq
      %v900 = vshrl.u32 %v899, 7
      %v901 = vsub.s32 %v898, %v900
      %v902 = vrot.slane %v888, %v901
      %v903 = vcombine.low %v838, %v854
      %v904 = vcombine.high %v838, %v854
      %v906 = vunpack.c.l.s4 1934713408
      %v907 = vunpack.c.0.s8 %v906
      %v908 = vlaneseq
      %v909 = vshrl.u32 %v908, 7
      %v910 = vsub.s32 %v907, %v909
      %v911 = vrot.slane %v903, %v910
      %v913 = vunpack.c.l.s4 1934713408
      %v914 = vunpack.c.0.s8 %v913
      %v915 = vlaneseq
      %v916 = vshrl.u32 %v915, 7
      %v917 = vsub.s32 %v914, %v916
      %v918 = vrot.slane %v904, %v917
      %v919 = vcombine.low %v863, %v895
      %v920 = vcombine.high %v863, %v895
      %v921 = vcombine.low %v870, %v902
      %v922 = vcombine.high %v870, %v902
      %v923 = vcombine.low %v879, %v911
      %v924 = vcombine.high %v879, %v911
      %v925 = vcombine.low %v886, %v918
      %v926 = vcombine.high %v886, %v918
      %v927 = vcombine.low %v746, %v758
      %v928 = vcombine.high %v746, %v758
      %v930 = vunpack.c.l.s4 1983009808
      %v931 = vunpack.c.0.s8 %v930
      %v932 = vlaneseq
      %v933 = vshrl.u32 %v932, 7
      %v934 = vsub.s32 %v931, %v933
      %v935 = vrot.slane %v927, %v934
      %v937 = vunpack.c.l.s4 1983009808
      %v938 = vunpack.c.0.s8 %v937
      %v939 = vlaneseq
      %v940 = vshrl.u32 %v939, 7
      %v941 = vsub.s32 %v938, %v940
      %v942 = vrot.slane %v928, %v941
      %v943 = vcombine.low %v752, %v764
      %v944 = vcombine.high %v752, %v764
      %v946 = vunpack.c.l.s4 1983009808
      %v947 = vunpack.c.0.s8 %v946
      %v948 = vlaneseq
      %v949 = vshrl.u32 %v948, 7
      %v950 = vsub.s32 %v947, %v949
      %v951 = vrot.slane %v943, %v950
      %v953 = vunpack.c.l.s4 1983009808
      %v954 = vunpack.c.0.s8 %v953
      %v955 = vlaneseq
      %v956 = vshrl.u32 %v955, 7
      %v957 = vsub.s32 %v954, %v956
      %v958 = vrot.slane %v944, %v957
      %v959 = vcombine.low %v770, %v782
      %v960 = vcombine.high %v770, %v782
      %v962 = vunpack.c.l.s4 1983009808
      %v963 = vunpack.c.0.s8 %v962
      %v964 = vlaneseq
      %v965 = vshrl.u32 %v964, 7
      %v966 = vsub.s32 %v963, %v965
      %v967 = vrot.slane %v959, %v966
      %v969 = vunpack.c.l.s4 1983009808
      %v970 = vunpack.c.0.s8 %v969
      %v971 = vlaneseq
      %v972 = vshrl.u32 %v971, 7
      %v973 = vsub.s32 %v970, %v972
      %v974 = vrot.slane %v960, %v973
      %v975 = vcombine.low %v776, %v788
      %v976 = vcombine.high %v776, %v788
      %v978 = vunpack.c.l.s4 1983009808
      %v979 = vunpack.c.0.s8 %v978
      %v980 = vlaneseq
      %v981 = vshrl.u32 %v980, 7
      %v982 = vsub.s32 %v979, %v981
      %v983 = vrot.slane %v975, %v982
      %v985 = vunpack.c.l.s4 1983009808
      %v986 = vunpack.c.0.s8 %v985
      %v987 = vlaneseq
      %v988 = vshrl.u32 %v987, 7
      %v989 = vsub.s32 %v986, %v988
      %v990 = vrot.slane %v976, %v989
      %v991 = vcombine.low %v935, %v951
      %v992 = vcombine.high %v935, %v951
      %v994 = vunpack.c.l.s4 1934713408
      %v995 = vunpack.c.0.s8 %v994
      %v996 = vlaneseq
      %v997 = vshrl.u32 %v996, 7
      %v998 = vsub.s32 %v995, %v997
      %v999 = vrot.slane %v991, %v998
      %v1001 = vunpack.c.l.s4 1934713408
      %v1002 = vunpack.c.0.s8 %v1001
      %v1003 = vlaneseq
      %v1004 = vshrl.u32 %v1003, 7
      %v1005 = vsub.s32 %v1002, %v1004
      %v1006 = vrot.slane %v992, %v1005
      %v1007 = vcombine.low %v942, %v958
      %v1008 = vcombine.high %v942, %v958
      %v1010 = vunpack.c.l.s4 1934713408
      %v1011 = vunpack.c.0.s8 %v1010
      %v1012 = vlaneseq
      %v1013 = vshrl.u32 %v1012, 7
      %v1014 = vsub.s32 %v1011, %v1013
      %v1015 = vrot.slane %v1007, %v1014
      %v1017 = vunpack.c.l.s4 1934713408
      %v1018 = vunpack.c.0.s8 %v1017
      %v1019 = vlaneseq
      %v1020 = vshrl.u32 %v1019, 7
      %v1021 = vsub.s32 %v1018, %v1020
      %v1022 = vrot.slane %v1008, %v1021
      %v1023 = vcombine.low %v967, %v983
      %v1024 = vcombine.high %v967, %v983
      %v1026 = vunpack.c.l.s4 1934713408
      %v1027 = vunpack.c.0.s8 %v1026
      %v1028 = vlaneseq
      %v1029 = vshrl.u32 %v1028, 7
      %v1030 = vsub.s32 %v1027, %v1029
      %v1031 = vrot.slane %v1023, %v1030
      %v1033 = vunpack.c.l.s4 1934713408
      %v1034 = vunpack.c.0.s8 %v1033
      %v1035 = vlaneseq
      %v1036 = vshrl.u32 %v1035, 7
      %v1037 = vsub.s32 %v1034, %v1036
      %v1038 = vrot.slane %v1024, %v1037
      %v1039 = vcombine.low %v974, %v990
      %v1040 = vcombine.high %v974, %v990
      %v1042 = vunpack.c.l.s4 1934713408
      %v1043 = vunpack.c.0.s8 %v1042
      %v1044 = vlaneseq
      %v1045 = vshrl.u32 %v1044, 7
      %v1046 = vsub.s32 %v1043, %v1045
      %v1047 = vrot.slane %v1039, %v1046
      %v1049 = vunpack.c.l.s4 1934713408
      %v1050 = vunpack.c.0.s8 %v1049
      %v1051 = vlaneseq
      %v1052 = vshrl.u32 %v1051, 7
      %v1053 = vsub.s32 %v1050, %v1052
      %v1054 = vrot.slane %v1040, %v1053
      %v1055 = vcombine.low %v999, %v1031
      %v1056 = vcombine.high %v999, %v1031
      %v1057 = vcombine.low %v1006, %v1038
      %v1058 = vcombine.high %v1006, %v1038
      %v1059 = vcombine.low %v1015, %v1047
      %v1060 = vcombine.high %v1015, %v1047
      %v1061 = vcombine.low %v1022, %v1054
      %v1062 = vcombine.high %v1022, %v1054
      %1079 = vrot.lane.b32.xlu0 %v919, 1
      %v1080 = vpop.permute.xlu0 %1079
      %1081 = vrot.lane.b32.xlu0 %v920, 1
      %v1082 = vpop.permute.xlu0 %1081
      %1083 = vrot.lane.b32.xlu0 %v921, 1
      %v1084 = vpop.permute.xlu0 %1083
      %1085 = vrot.lane.b32.xlu0 %v922, 1
      %v1086 = vpop.permute.xlu0 %1085
      %1087 = vrot.lane.b32.xlu0 %v923, 1
      %v1088 = vpop.permute.xlu0 %1087
      %1089 = vrot.lane.b32.xlu0 %v924, 1
      %v1090 = vpop.permute.xlu0 %1089
      %1091 = vrot.lane.b32.xlu0 %v925, 1
      %v1092 = vpop.permute.xlu0 %1091
      %1093 = vrot.lane.b32.xlu0 %v926, 1
      %v1094 = vpop.permute.xlu0 %1093
      %1095 = vrot.lane.b32.xlu0 %v1055, 1
      %v1096 = vpop.permute.xlu0 %1095
      %1097 = vrot.lane.b32.xlu0 %v1056, 1
      %v1098 = vpop.permute.xlu0 %1097
      %1099 = vrot.lane.b32.xlu0 %v1057, 1
      %v1100 = vpop.permute.xlu0 %1099
      %1101 = vrot.lane.b32.xlu0 %v1058, 1
      %v1102 = vpop.permute.xlu0 %1101
      %1103 = vrot.lane.b32.xlu0 %v1059, 1
      %v1104 = vpop.permute.xlu0 %1103
      %1105 = vrot.lane.b32.xlu0 %v1060, 1
      %v1106 = vpop.permute.xlu0 %1105
      %1107 = vrot.lane.b32.xlu0 %v1061, 1
      %v1108 = vpop.permute.xlu0 %1107
      %1109 = vrot.lane.b32.xlu0 %v1062, 1
      %v1110 = vpop.permute.xlu0 %1109
      %vm1127 = vcmask 7168
      %v1128 = vsel %vm1127, 0.0, %v1080
      %v1129 = vsel %vm1127, 0.0, %v1082
      %v1130 = vsel %vm1127, 0.0, %v1084
      %v1131 = vsel %vm1127, 0.0, %v1086
      %v1132 = vsel %vm1127, 0.0, %v1088
      %v1133 = vsel %vm1127, 0.0, %v1090
      %v1134 = vsel %vm1127, 0.0, %v1092
      %v1135 = vsel %vm1127, 0.0, %v1094
      %v1136 = vsel %vm1127, 0.0, %v1096
      %v1137 = vsel %vm1127, 0.0, %v1098
      %v1138 = vsel %vm1127, 0.0, %v1100
      %v1139 = vsel %vm1127, 0.0, %v1102
      %v1140 = vsel %vm1127, 0.0, %v1104
      %v1141 = vsel %vm1127, 0.0, %v1106
      %v1142 = vsel %vm1127, 0.0, %v1108
      %v1143 = vsel %vm1127, 0.0, %v1110
      %vm1144 = vcmask 72704
      %v1145 = vsel %vm1144, %v1128, 0.0
      %v1146 = vsel %vm1144, %v1129, 0.0
      %v1147 = vsel %vm1144, %v1130, 0.0
      %v1148 = vsel %vm1144, %v1131, 0.0
      %v1149 = vsel %vm1144, %v1132, 0.0
      %v1150 = vsel %vm1144, %v1133, 0.0
      %v1151 = vsel %vm1144, %v1134, 0.0
      %v1152 = vsel %vm1144, %v1135, 0.0
      %v1153 = vsel %vm1144, %v1136, 0.0
      %v1154 = vsel %vm1144, %v1137, 0.0
      %v1155 = vsel %vm1144, %v1138, 0.0
      %v1156 = vsel %vm1144, %v1139, 0.0
      %v1157 = vsel %vm1144, %v1140, 0.0
      %v1158 = vsel %vm1144, %v1141, 0.0
      %v1159 = vsel %vm1144, %v1142, 0.0
      %v1160 = vsel %vm1144, %v1143, 0.0
      %v1177 = vrot.slane %v1145, 7
      %v1178 = vrot.slane %v1146, 7
      %v1179 = vrot.slane %v1147, 7
      %v1180 = vrot.slane %v1148, 7
      %v1181 = vrot.slane %v1149, 7
      %v1182 = vrot.slane %v1150, 7
      %v1183 = vrot.slane %v1151, 7
      %v1184 = vrot.slane %v1152, 7
      %v1185 = vrot.slane %v1153, 7
      %v1186 = vrot.slane %v1154, 7
      %v1187 = vrot.slane %v1155, 7
      %v1188 = vrot.slane %v1156, 7
      %v1189 = vrot.slane %v1157, 7
      %v1190 = vrot.slane %v1158, 7
      %v1191 = vrot.slane %v1159, 7
      %v1192 = vrot.slane %v1160, 7
      %vm1209 = vcmask 1040384
      %v1210 = vsel %vm1209, 0.0, %v1177
      %v1211 = vsel %vm1209, 0.0, %v1178
      %v1212 = vsel %vm1209, 0.0, %v1179
      %v1213 = vsel %vm1209, 0.0, %v1180
      %v1214 = vsel %vm1209, 0.0, %v1181
      %v1215 = vsel %vm1209, 0.0, %v1182
      %v1216 = vsel %vm1209, 0.0, %v1183
      %v1217 = vsel %vm1209, 0.0, %v1184
      %v1218 = vsel %vm1209, 0.0, %v1185
      %v1219 = vsel %vm1209, 0.0, %v1186
      %v1220 = vsel %vm1209, 0.0, %v1187
      %v1221 = vsel %vm1209, 0.0, %v1188
      %v1222 = vsel %vm1209, 0.0, %v1189
      %v1223 = vsel %vm1209, 0.0, %v1190
      %v1224 = vsel %vm1209, 0.0, %v1191
      %v1225 = vsel %vm1209, 0.0, %v1192
      %v1226 = vsel %vm1209, %v1177, 0.0
      %v1227 = vsel %vm1209, %v1178, 0.0
      %v1228 = vsel %vm1209, %v1179, 0.0
      %v1229 = vsel %vm1209, %v1180, 0.0
      %v1230 = vsel %vm1209, %v1181, 0.0
      %v1231 = vsel %vm1209, %v1182, 0.0
      %v1232 = vsel %vm1209, %v1183, 0.0
      %v1233 = vsel %vm1209, %v1184, 0.0
      %v1234 = vsel %vm1209, %v1185, 0.0
      %v1235 = vsel %vm1209, %v1186, 0.0
      %v1236 = vsel %vm1209, %v1187, 0.0
      %v1237 = vsel %vm1209, %v1188, 0.0
      %v1238 = vsel %vm1209, %v1189, 0.0
      %v1239 = vsel %vm1209, %v1190, 0.0
      %v1240 = vsel %vm1209, %v1191, 0.0
      %v1241 = vsel %vm1209, %v1192, 0.0
      %1258 = vrot.lane.b32.xlu0 %v1210, 127
      %v1259 = vpop.permute.xlu0 %1258
      %1260 = vrot.lane.b32.xlu0 %v1211, 127
      %v1261 = vpop.permute.xlu0 %1260
      %1262 = vrot.lane.b32.xlu0 %v1212, 127
      %v1263 = vpop.permute.xlu0 %1262
      %1264 = vrot.lane.b32.xlu0 %v1213, 127
      %v1265 = vpop.permute.xlu0 %1264
      %1266 = vrot.lane.b32.xlu0 %v1214, 127
      %v1267 = vpop.permute.xlu0 %1266
      %1268 = vrot.lane.b32.xlu0 %v1215, 127
      %v1269 = vpop.permute.xlu0 %1268
      %1270 = vrot.lane.b32.xlu0 %v1216, 127
      %v1271 = vpop.permute.xlu0 %1270
      %1272 = vrot.lane.b32.xlu0 %v1217, 127
      %v1273 = vpop.permute.xlu0 %1272
      %1274 = vrot.lane.b32.xlu0 %v1218, 127
      %v1275 = vpop.permute.xlu0 %1274
      %1276 = vrot.lane.b32.xlu0 %v1219, 127
      %v1277 = vpop.permute.xlu0 %1276
      %1278 = vrot.lane.b32.xlu0 %v1220, 127
      %v1279 = vpop.permute.xlu0 %1278
      %1280 = vrot.lane.b32.xlu0 %v1221, 127
      %v1281 = vpop.permute.xlu0 %1280
      %1282 = vrot.lane.b32.xlu0 %v1222, 127
      %v1283 = vpop.permute.xlu0 %1282
      %1284 = vrot.lane.b32.xlu0 %v1223, 127
      %v1285 = vpop.permute.xlu0 %1284
      %1286 = vrot.lane.b32.xlu0 %v1224, 127
      %v1287 = vpop.permute.xlu0 %1286
      %1288 = vrot.lane.b32.xlu0 %v1225, 127
      %v1289 = vpop.permute.xlu0 %1288
      %1306 = vrot.lane.b32.xlu0 %v1210, 126
      %v1307 = vpop.permute.xlu0 %1306
      %1308 = vrot.lane.b32.xlu0 %v1211, 126
      %v1309 = vpop.permute.xlu0 %1308
      %1310 = vrot.lane.b32.xlu0 %v1212, 126
      %v1311 = vpop.permute.xlu0 %1310
      %1312 = vrot.lane.b32.xlu0 %v1213, 126
      %v1313 = vpop.permute.xlu0 %1312
      %1314 = vrot.lane.b32.xlu0 %v1214, 126
      %v1315 = vpop.permute.xlu0 %1314
      %1316 = vrot.lane.b32.xlu0 %v1215, 126
      %v1317 = vpop.permute.xlu0 %1316
      %1318 = vrot.lane.b32.xlu0 %v1216, 126
      %v1319 = vpop.permute.xlu0 %1318
      %1320 = vrot.lane.b32.xlu0 %v1217, 126
      %v1321 = vpop.permute.xlu0 %1320
      %1322 = vrot.lane.b32.xlu0 %v1218, 126
      %v1323 = vpop.permute.xlu0 %1322
      %1324 = vrot.lane.b32.xlu0 %v1219, 126
      %v1325 = vpop.permute.xlu0 %1324
      %1326 = vrot.lane.b32.xlu0 %v1220, 126
      %v1327 = vpop.permute.xlu0 %1326
      %1328 = vrot.lane.b32.xlu0 %v1221, 126
      %v1329 = vpop.permute.xlu0 %1328
      %1330 = vrot.lane.b32.xlu0 %v1222, 126
      %v1331 = vpop.permute.xlu0 %1330
      %1332 = vrot.lane.b32.xlu0 %v1223, 126
      %v1333 = vpop.permute.xlu0 %1332
      %1334 = vrot.lane.b32.xlu0 %v1224, 126
      %v1335 = vpop.permute.xlu0 %1334
      %1336 = vrot.lane.b32.xlu0 %v1225, 126
      %v1337 = vpop.permute.xlu0 %1336
      %vm1370 = vcmask 1046528
      %v1371 = vrot.slane %v1210, 1
      %v1372 = vrot.slane %v1226, 1
      %v1373 = vsel %vm1370, %v1371, %v1372
      %v1374 = vrot.slane %v1211, 1
      %v1375 = vrot.slane %v1227, 1
      %v1376 = vsel %vm1370, %v1374, %v1375
      %v1377 = vrot.slane %v1212, 1
      %v1378 = vrot.slane %v1228, 1
      %v1379 = vsel %vm1370, %v1377, %v1378
      %v1380 = vrot.slane %v1213, 1
      %v1381 = vrot.slane %v1229, 1
      %v1382 = vsel %vm1370, %v1380, %v1381
      %v1383 = vrot.slane %v1214, 1
      %v1384 = vrot.slane %v1230, 1
      %v1385 = vsel %vm1370, %v1383, %v1384
      %v1386 = vrot.slane %v1215, 1
      %v1387 = vrot.slane %v1231, 1
      %v1388 = vsel %vm1370, %v1386, %v1387
      %v1389 = vrot.slane %v1216, 1
      %v1390 = vrot.slane %v1232, 1
      %v1391 = vsel %vm1370, %v1389, %v1390
      %v1392 = vrot.slane %v1217, 1
      %v1393 = vrot.slane %v1233, 1
      %v1394 = vsel %vm1370, %v1392, %v1393
      %v1395 = vrot.slane %v1218, 1
      %v1396 = vrot.slane %v1234, 1
      %v1397 = vsel %vm1370, %v1395, %v1396
      %v1398 = vrot.slane %v1219, 1
      %v1399 = vrot.slane %v1235, 1
      %v1400 = vsel %vm1370, %v1398, %v1399
      %v1401 = vrot.slane %v1220, 1
      %v1402 = vrot.slane %v1236, 1
      %v1403 = vsel %vm1370, %v1401, %v1402
      %v1404 = vrot.slane %v1221, 1
      %v1405 = vrot.slane %v1237, 1
      %v1406 = vsel %vm1370, %v1404, %v1405
      %v1407 = vrot.slane %v1222, 1
      %v1408 = vrot.slane %v1238, 1
      %v1409 = vsel %vm1370, %v1407, %v1408
      %v1410 = vrot.slane %v1223, 1
      %v1411 = vrot.slane %v1239, 1
      %v1412 = vsel %vm1370, %v1410, %v1411
      %v1413 = vrot.slane %v1224, 1
      %v1414 = vrot.slane %v1240, 1
      %v1415 = vsel %vm1370, %v1413, %v1414
      %v1416 = vrot.slane %v1225, 1
      %v1417 = vrot.slane %v1241, 1
      %v1418 = vsel %vm1370, %v1416, %v1417
      %1435 = vrot.lane.b32.xlu0 %v1373, 127
      %v1436 = vpop.permute.xlu0 %1435
      %1437 = vrot.lane.b32.xlu0 %v1376, 127
      %v1438 = vpop.permute.xlu0 %1437
      %1439 = vrot.lane.b32.xlu0 %v1379, 127
      %v1440 = vpop.permute.xlu0 %1439
      %1441 = vrot.lane.b32.xlu0 %v1382, 127
      %v1442 = vpop.permute.xlu0 %1441
      %1443 = vrot.lane.b32.xlu0 %v1385, 127
      %v1444 = vpop.permute.xlu0 %1443
      %1445 = vrot.lane.b32.xlu0 %v1388, 127
      %v1446 = vpop.permute.xlu0 %1445
      %1447 = vrot.lane.b32.xlu0 %v1391, 127
      %v1448 = vpop.permute.xlu0 %1447
      %1449 = vrot.lane.b32.xlu0 %v1394, 127
      %v1450 = vpop.permute.xlu0 %1449
      %1451 = vrot.lane.b32.xlu0 %v1397, 127
      %v1452 = vpop.permute.xlu0 %1451
      %1453 = vrot.lane.b32.xlu0 %v1400, 127
      %v1454 = vpop.permute.xlu0 %1453
      %1455 = vrot.lane.b32.xlu0 %v1403, 127
      %v1456 = vpop.permute.xlu0 %1455
      %1457 = vrot.lane.b32.xlu0 %v1406, 127
      %v1458 = vpop.permute.xlu0 %1457
      %1459 = vrot.lane.b32.xlu0 %v1409, 127
      %v1460 = vpop.permute.xlu0 %1459
      %1461 = vrot.lane.b32.xlu0 %v1412, 127
      %v1462 = vpop.permute.xlu0 %1461
      %1463 = vrot.lane.b32.xlu0 %v1415, 127
      %v1464 = vpop.permute.xlu0 %1463
      %1465 = vrot.lane.b32.xlu0 %v1418, 127
      %v1466 = vpop.permute.xlu0 %1465
      %1483 = vrot.lane.b32.xlu0 %v1373, 126
      %v1484 = vpop.permute.xlu0 %1483
      %1485 = vrot.lane.b32.xlu0 %v1376, 126
      %v1486 = vpop.permute.xlu0 %1485
      %1487 = vrot.lane.b32.xlu0 %v1379, 126
      %v1488 = vpop.permute.xlu0 %1487
      %1489 = vrot.lane.b32.xlu0 %v1382, 126
      %v1490 = vpop.permute.xlu0 %1489
      %1491 = vrot.lane.b32.xlu0 %v1385, 126
      %v1492 = vpop.permute.xlu0 %1491
      %1493 = vrot.lane.b32.xlu0 %v1388, 126
      %v1494 = vpop.permute.xlu0 %1493
      %1495 = vrot.lane.b32.xlu0 %v1391, 126
      %v1496 = vpop.permute.xlu0 %1495
      %1497 = vrot.lane.b32.xlu0 %v1394, 126
      %v1498 = vpop.permute.xlu0 %1497
      %1499 = vrot.lane.b32.xlu0 %v1397, 126
      %v1500 = vpop.permute.xlu0 %1499
      %1501 = vrot.lane.b32.xlu0 %v1400, 126
      %v1502 = vpop.permute.xlu0 %1501
      %1503 = vrot.lane.b32.xlu0 %v1403, 126
      %v1504 = vpop.permute.xlu0 %1503
      %1505 = vrot.lane.b32.xlu0 %v1406, 126
      %v1506 = vpop.permute.xlu0 %1505
      %1507 = vrot.lane.b32.xlu0 %v1409, 126
      %v1508 = vpop.permute.xlu0 %1507
      %1509 = vrot.lane.b32.xlu0 %v1412, 126
      %v1510 = vpop.permute.xlu0 %1509
      %1511 = vrot.lane.b32.xlu0 %v1415, 126
      %v1512 = vpop.permute.xlu0 %1511
      %1513 = vrot.lane.b32.xlu0 %v1418, 126
      %v1514 = vpop.permute.xlu0 %1513
      %vm1531 = vcmask 1045504
      %v1532 = vrot.slane %v1210, 2
      %v1533 = vrot.slane %v1226, 2
      %v1534 = vsel %vm1531, %v1532, %v1533
      %v1535 = vrot.slane %v1211, 2
      %v1536 = vrot.slane %v1227, 2
      %v1537 = vsel %vm1531, %v1535, %v1536
      %v1538 = vrot.slane %v1212, 2
      %v1539 = vrot.slane %v1228, 2
      %v1540 = vsel %vm1531, %v1538, %v1539
      %v1541 = vrot.slane %v1213, 2
      %v1542 = vrot.slane %v1229, 2
      %v1543 = vsel %vm1531, %v1541, %v1542
      %v1544 = vrot.slane %v1214, 2
      %v1545 = vrot.slane %v1230, 2
      %v1546 = vsel %vm1531, %v1544, %v1545
      %v1547 = vrot.slane %v1215, 2
      %v1548 = vrot.slane %v1231, 2
      %v1549 = vsel %vm1531, %v1547, %v1548
      %v1550 = vrot.slane %v1216, 2
      %v1551 = vrot.slane %v1232, 2
      %v1552 = vsel %vm1531, %v1550, %v1551
      %v1553 = vrot.slane %v1217, 2
      %v1554 = vrot.slane %v1233, 2
      %v1555 = vsel %vm1531, %v1553, %v1554
      %v1556 = vrot.slane %v1218, 2
      %v1557 = vrot.slane %v1234, 2
      %v1558 = vsel %vm1531, %v1556, %v1557
      %v1559 = vrot.slane %v1219, 2
      %v1560 = vrot.slane %v1235, 2
      %v1561 = vsel %vm1531, %v1559, %v1560
      %v1562 = vrot.slane %v1220, 2
      %v1563 = vrot.slane %v1236, 2
      %v1564 = vsel %vm1531, %v1562, %v1563
      %v1565 = vrot.slane %v1221, 2
      %v1566 = vrot.slane %v1237, 2
      %v1567 = vsel %vm1531, %v1565, %v1566
      %v1568 = vrot.slane %v1222, 2
      %v1569 = vrot.slane %v1238, 2
      %v1570 = vsel %vm1531, %v1568, %v1569
      %v1571 = vrot.slane %v1223, 2
      %v1572 = vrot.slane %v1239, 2
      %v1573 = vsel %vm1531, %v1571, %v1572
      %v1574 = vrot.slane %v1224, 2
      %v1575 = vrot.slane %v1240, 2
      %v1576 = vsel %vm1531, %v1574, %v1575
      %v1577 = vrot.slane %v1225, 2
      %v1578 = vrot.slane %v1241, 2
      %v1579 = vsel %vm1531, %v1577, %v1578
      %1596 = vrot.lane.b32.xlu0 %v1534, 127
      %v1597 = vpop.permute.xlu0 %1596
      %1598 = vrot.lane.b32.xlu0 %v1537, 127
      %v1599 = vpop.permute.xlu0 %1598
      %1600 = vrot.lane.b32.xlu0 %v1540, 127
      %v1601 = vpop.permute.xlu0 %1600
      %1602 = vrot.lane.b32.xlu0 %v1543, 127
      %v1603 = vpop.permute.xlu0 %1602
      %1604 = vrot.lane.b32.xlu0 %v1546, 127
      %v1605 = vpop.permute.xlu0 %1604
      %1606 = vrot.lane.b32.xlu0 %v1549, 127
      %v1607 = vpop.permute.xlu0 %1606
      %1608 = vrot.lane.b32.xlu0 %v1552, 127
      %v1609 = vpop.permute.xlu0 %1608
      %1610 = vrot.lane.b32.xlu0 %v1555, 127
      %v1611 = vpop.permute.xlu0 %1610
      %1612 = vrot.lane.b32.xlu0 %v1558, 127
      %v1613 = vpop.permute.xlu0 %1612
      %1614 = vrot.lane.b32.xlu0 %v1561, 127
      %v1615 = vpop.permute.xlu0 %1614
      %1616 = vrot.lane.b32.xlu0 %v1564, 127
      %v1617 = vpop.permute.xlu0 %1616
      %1618 = vrot.lane.b32.xlu0 %v1567, 127
      %v1619 = vpop.permute.xlu0 %1618
      %1620 = vrot.lane.b32.xlu0 %v1570, 127
      %v1621 = vpop.permute.xlu0 %1620
      %1622 = vrot.lane.b32.xlu0 %v1573, 127
      %v1623 = vpop.permute.xlu0 %1622
      %1624 = vrot.lane.b32.xlu0 %v1576, 127
      %v1625 = vpop.permute.xlu0 %1624
      %1626 = vrot.lane.b32.xlu0 %v1579, 127
      %v1627 = vpop.permute.xlu0 %1626
      %1644 = vrot.lane.b32.xlu0 %v1534, 126
      %v1645 = vpop.permute.xlu0 %1644
      %1646 = vrot.lane.b32.xlu0 %v1537, 126
      %v1647 = vpop.permute.xlu0 %1646
      %1648 = vrot.lane.b32.xlu0 %v1540, 126
      %v1649 = vpop.permute.xlu0 %1648
      %1650 = vrot.lane.b32.xlu0 %v1543, 126
      %v1651 = vpop.permute.xlu0 %1650
      %1652 = vrot.lane.b32.xlu0 %v1546, 126
      %v1653 = vpop.permute.xlu0 %1652
      %1654 = vrot.lane.b32.xlu0 %v1549, 126
      %v1655 = vpop.permute.xlu0 %1654
      %1656 = vrot.lane.b32.xlu0 %v1552, 126
      %v1657 = vpop.permute.xlu0 %1656
      %1658 = vrot.lane.b32.xlu0 %v1555, 126
      %v1659 = vpop.permute.xlu0 %1658
      %1660 = vrot.lane.b32.xlu0 %v1558, 126
      %v1661 = vpop.permute.xlu0 %1660
      %1662 = vrot.lane.b32.xlu0 %v1561, 126
      %v1663 = vpop.permute.xlu0 %1662
      %1664 = vrot.lane.b32.xlu0 %v1564, 126
      %v1665 = vpop.permute.xlu0 %1664
      %1666 = vrot.lane.b32.xlu0 %v1567, 126
      %v1667 = vpop.permute.xlu0 %1666
      %1668 = vrot.lane.b32.xlu0 %v1570, 126
      %v1669 = vpop.permute.xlu0 %1668
      %1670 = vrot.lane.b32.xlu0 %v1573, 126
      %v1671 = vpop.permute.xlu0 %1670
      %1672 = vrot.lane.b32.xlu0 %v1576, 126
      %v1673 = vpop.permute.xlu0 %1672
      %1674 = vrot.lane.b32.xlu0 %v1579, 126
      %v1675 = vpop.permute.xlu0 %1674
      %v1692 = vcombine.low %v1210, %v1212
      %v1693 = vcombine.high %v1210, %v1212
      %v1695 = vunpack.c.l.s4 1983009808
      %v1696 = vunpack.c.0.s8 %v1695
      %v1697 = vlaneseq
      %v1698 = vshrl.u32 %v1697, 7
      %v1699 = vsub.s32 %v1696, %v1698
      %v1700 = vrot.slane %v1692, %v1699
      %v1702 = vunpack.c.l.s4 1983009808
      %v1703 = vunpack.c.0.s8 %v1702
      %v1704 = vlaneseq
      %v1705 = vshrl.u32 %v1704, 7
      %v1706 = vsub.s32 %v1703, %v1705
      %v1707 = vrot.slane %v1693, %v1706
      %v1708 = vcombine.low %v1211, %v1213
      %v1709 = vcombine.high %v1211, %v1213
      %v1711 = vunpack.c.l.s4 1983009808
      %v1712 = vunpack.c.0.s8 %v1711
      %v1713 = vlaneseq
      %v1714 = vshrl.u32 %v1713, 7
      %v1715 = vsub.s32 %v1712, %v1714
      %v1716 = vrot.slane %v1708, %v1715
      %v1718 = vunpack.c.l.s4 1983009808
      %v1719 = vunpack.c.0.s8 %v1718
      %v1720 = vlaneseq
      %v1721 = vshrl.u32 %v1720, 7
      %v1722 = vsub.s32 %v1719, %v1721
      %v1723 = vrot.slane %v1709, %v1722
      %v1724 = vcombine.low %v1214, %v1216
      %v1725 = vcombine.high %v1214, %v1216
      %v1727 = vunpack.c.l.s4 1983009808
      %v1728 = vunpack.c.0.s8 %v1727
      %v1729 = vlaneseq
      %v1730 = vshrl.u32 %v1729, 7
      %v1731 = vsub.s32 %v1728, %v1730
      %v1732 = vrot.slane %v1724, %v1731
      %v1734 = vunpack.c.l.s4 1983009808
      %v1735 = vunpack.c.0.s8 %v1734
      %v1736 = vlaneseq
      %v1737 = vshrl.u32 %v1736, 7
      %v1738 = vsub.s32 %v1735, %v1737
      %v1739 = vrot.slane %v1725, %v1738
      %v1740 = vcombine.low %v1215, %v1217
      %v1741 = vcombine.high %v1215, %v1217
      %v1743 = vunpack.c.l.s4 1983009808
      %v1744 = vunpack.c.0.s8 %v1743
      %v1745 = vlaneseq
      %v1746 = vshrl.u32 %v1745, 7
      %v1747 = vsub.s32 %v1744, %v1746
      %v1748 = vrot.slane %v1740, %v1747
      %v1750 = vunpack.c.l.s4 1983009808
      %v1751 = vunpack.c.0.s8 %v1750
      %v1752 = vlaneseq
      %v1753 = vshrl.u32 %v1752, 7
      %v1754 = vsub.s32 %v1751, %v1753
      %v1755 = vrot.slane %v1741, %v1754
      %v1756 = vcombine.low %v1700, %v1716
      %v1757 = vcombine.high %v1700, %v1716
      %v1759 = vunpack.c.l.s4 1934713408
      %v1760 = vunpack.c.0.s8 %v1759
      %v1761 = vlaneseq
      %v1762 = vshrl.u32 %v1761, 7
      %v1763 = vsub.s32 %v1760, %v1762
      %v1764 = vrot.slane %v1756, %v1763
      %v1766 = vunpack.c.l.s4 1934713408
      %v1767 = vunpack.c.0.s8 %v1766
      %v1768 = vlaneseq
      %v1769 = vshrl.u32 %v1768, 7
      %v1770 = vsub.s32 %v1767, %v1769
      %v1771 = vrot.slane %v1757, %v1770
      %v1772 = vcombine.low %v1707, %v1723
      %v1773 = vcombine.high %v1707, %v1723
      %v1775 = vunpack.c.l.s4 1934713408
      %v1776 = vunpack.c.0.s8 %v1775
      %v1777 = vlaneseq
      %v1778 = vshrl.u32 %v1777, 7
      %v1779 = vsub.s32 %v1776, %v1778
      %v1780 = vrot.slane %v1772, %v1779
      %v1782 = vunpack.c.l.s4 1934713408
      %v1783 = vunpack.c.0.s8 %v1782
      %v1784 = vlaneseq
      %v1785 = vshrl.u32 %v1784, 7
      %v1786 = vsub.s32 %v1783, %v1785
      %v1787 = vrot.slane %v1773, %v1786
      %v1788 = vcombine.low %v1732, %v1748
      %v1789 = vcombine.high %v1732, %v1748
      %v1791 = vunpack.c.l.s4 1934713408
      %v1792 = vunpack.c.0.s8 %v1791
      %v1793 = vlaneseq
      %v1794 = vshrl.u32 %v1793, 7
      %v1795 = vsub.s32 %v1792, %v1794
      %v1796 = vrot.slane %v1788, %v1795
      %v1798 = vunpack.c.l.s4 1934713408
      %v1799 = vunpack.c.0.s8 %v1798
      %v1800 = vlaneseq
      %v1801 = vshrl.u32 %v1800, 7
      %v1802 = vsub.s32 %v1799, %v1801
      %v1803 = vrot.slane %v1789, %v1802
      %v1804 = vcombine.low %v1739, %v1755
      %v1805 = vcombine.high %v1739, %v1755
      %v1807 = vunpack.c.l.s4 1934713408
      %v1808 = vunpack.c.0.s8 %v1807
      %v1809 = vlaneseq
      %v1810 = vshrl.u32 %v1809, 7
      %v1811 = vsub.s32 %v1808, %v1810
      %v1812 = vrot.slane %v1804, %v1811
      %v1814 = vunpack.c.l.s4 1934713408
      %v1815 = vunpack.c.0.s8 %v1814
      %v1816 = vlaneseq
      %v1817 = vshrl.u32 %v1816, 7
      %v1818 = vsub.s32 %v1815, %v1817
      %v1819 = vrot.slane %v1805, %v1818
      %v1820 = vcombine.low %v1764, %v1796
      %v1821 = vcombine.high %v1764, %v1796
      %v1822 = vcombine.low %v1771, %v1803
      %v1823 = vcombine.high %v1771, %v1803
      %v1824 = vcombine.low %v1780, %v1812
      %v1825 = vcombine.high %v1780, %v1812
      %v1826 = vcombine.low %v1787, %v1819
      %v1827 = vcombine.high %v1787, %v1819
      %v1828 = vcombine.low %v1218, %v1220
      %v1829 = vcombine.high %v1218, %v1220
      %v1831 = vunpack.c.l.s4 1983009808
      %v1832 = vunpack.c.0.s8 %v1831
      %v1833 = vlaneseq
      %v1834 = vshrl.u32 %v1833, 7
      %v1835 = vsub.s32 %v1832, %v1834
      %v1836 = vrot.slane %v1828, %v1835
      %v1838 = vunpack.c.l.s4 1983009808
      %v1839 = vunpack.c.0.s8 %v1838
      %v1840 = vlaneseq
      %v1841 = vshrl.u32 %v1840, 7
      %v1842 = vsub.s32 %v1839, %v1841
      %v1843 = vrot.slane %v1829, %v1842
      %v1844 = vcombine.low %v1219, %v1221
      %v1845 = vcombine.high %v1219, %v1221
      %v1847 = vunpack.c.l.s4 1983009808
      %v1848 = vunpack.c.0.s8 %v1847
      %v1849 = vlaneseq
      %v1850 = vshrl.u32 %v1849, 7
      %v1851 = vsub.s32 %v1848, %v1850
      %v1852 = vrot.slane %v1844, %v1851
      %v1854 = vunpack.c.l.s4 1983009808
      %v1855 = vunpack.c.0.s8 %v1854
      %v1856 = vlaneseq
      %v1857 = vshrl.u32 %v1856, 7
      %v1858 = vsub.s32 %v1855, %v1857
      %v1859 = vrot.slane %v1845, %v1858
      %v1860 = vcombine.low %v1222, %v1224
      %v1861 = vcombine.high %v1222, %v1224
      %v1863 = vunpack.c.l.s4 1983009808
      %v1864 = vunpack.c.0.s8 %v1863
      %v1865 = vlaneseq
      %v1866 = vshrl.u32 %v1865, 7
      %v1867 = vsub.s32 %v1864, %v1866
      %v1868 = vrot.slane %v1860, %v1867
      %v1870 = vunpack.c.l.s4 1983009808
      %v1871 = vunpack.c.0.s8 %v1870
      %v1872 = vlaneseq
      %v1873 = vshrl.u32 %v1872, 7
      %v1874 = vsub.s32 %v1871, %v1873
      %v1875 = vrot.slane %v1861, %v1874
      %v1876 = vcombine.low %v1223, %v1225
      %v1877 = vcombine.high %v1223, %v1225
      %v1879 = vunpack.c.l.s4 1983009808
      %v1880 = vunpack.c.0.s8 %v1879
      %v1881 = vlaneseq
      %v1882 = vshrl.u32 %v1881, 7
      %v1883 = vsub.s32 %v1880, %v1882
      %v1884 = vrot.slane %v1876, %v1883
      %v1886 = vunpack.c.l.s4 1983009808
      %v1887 = vunpack.c.0.s8 %v1886
      %v1888 = vlaneseq
      %v1889 = vshrl.u32 %v1888, 7
      %v1890 = vsub.s32 %v1887, %v1889
      %v1891 = vrot.slane %v1877, %v1890
      %v1892 = vcombine.low %v1836, %v1852
      %v1893 = vcombine.high %v1836, %v1852
      %v1895 = vunpack.c.l.s4 1934713408
      %v1896 = vunpack.c.0.s8 %v1895
      %v1897 = vlaneseq
      %v1898 = vshrl.u32 %v1897, 7
      %v1899 = vsub.s32 %v1896, %v1898
      %v1900 = vrot.slane %v1892, %v1899
      %v1902 = vunpack.c.l.s4 1934713408
      %v1903 = vunpack.c.0.s8 %v1902
      %v1904 = vlaneseq
      %v1905 = vshrl.u32 %v1904, 7
      %v1906 = vsub.s32 %v1903, %v1905
      %v1907 = vrot.slane %v1893, %v1906
      %v1908 = vcombine.low %v1843, %v1859
      %v1909 = vcombine.high %v1843, %v1859
      %v1911 = vunpack.c.l.s4 1934713408
      %v1912 = vunpack.c.0.s8 %v1911
      %v1913 = vlaneseq
      %v1914 = vshrl.u32 %v1913, 7
      %v1915 = vsub.s32 %v1912, %v1914
      %v1916 = vrot.slane %v1908, %v1915
      %v1918 = vunpack.c.l.s4 1934713408
      %v1919 = vunpack.c.0.s8 %v1918
      %v1920 = vlaneseq
      %v1921 = vshrl.u32 %v1920, 7
      %v1922 = vsub.s32 %v1919, %v1921
      %v1923 = vrot.slane %v1909, %v1922
      %v1924 = vcombine.low %v1868, %v1884
      %v1925 = vcombine.high %v1868, %v1884
      %v1927 = vunpack.c.l.s4 1934713408
      %v1928 = vunpack.c.0.s8 %v1927
      %v1929 = vlaneseq
      %v1930 = vshrl.u32 %v1929, 7
      %v1931 = vsub.s32 %v1928, %v1930
      %v1932 = vrot.slane %v1924, %v1931
      %v1934 = vunpack.c.l.s4 1934713408
      %v1935 = vunpack.c.0.s8 %v1934
      %v1936 = vlaneseq
      %v1937 = vshrl.u32 %v1936, 7
      %v1938 = vsub.s32 %v1935, %v1937
      %v1939 = vrot.slane %v1925, %v1938
      %v1940 = vcombine.low %v1875, %v1891
      %v1941 = vcombine.high %v1875, %v1891
      %v1943 = vunpack.c.l.s4 1934713408
      %v1944 = vunpack.c.0.s8 %v1943
      %v1945 = vlaneseq
      %v1946 = vshrl.u32 %v1945, 7
      %v1947 = vsub.s32 %v1944, %v1946
      %v1948 = vrot.slane %v1940, %v1947
      %v1950 = vunpack.c.l.s4 1934713408
      %v1951 = vunpack.c.0.s8 %v1950
      %v1952 = vlaneseq
      %v1953 = vshrl.u32 %v1952, 7
      %v1954 = vsub.s32 %v1951, %v1953
      %v1955 = vrot.slane %v1941, %v1954
      %v1956 = vcombine.low %v1900, %v1932
      %v1957 = vcombine.high %v1900, %v1932
      %v1958 = vcombine.low %v1907, %v1939
      %v1959 = vcombine.high %v1907, %v1939
      %v1960 = vcombine.low %v1916, %v1948
      %v1961 = vcombine.high %v1916, %v1948
      %v1962 = vcombine.low %v1923, %v1955
      %v1963 = vcombine.high %v1923, %v1955
      %v1964 = vcombine.low %v1259, %v1263
      %v1965 = vcombine.high %v1259, %v1263
      %v1967 = vunpack.c.l.s4 1983009808
      %v1968 = vunpack.c.0.s8 %v1967
      %v1969 = vlaneseq
      %v1970 = vshrl.u32 %v1969, 7
      %v1971 = vsub.s32 %v1968, %v1970
      %v1972 = vrot.slane %v1964, %v1971
      %v1974 = vunpack.c.l.s4 1983009808
      %v1975 = vunpack.c.0.s8 %v1974
      %v1976 = vlaneseq
      %v1977 = vshrl.u32 %v1976, 7
      %v1978 = vsub.s32 %v1975, %v1977
      %v1979 = vrot.slane %v1965, %v1978
      %v1980 = vcombine.low %v1261, %v1265
      %v1981 = vcombine.high %v1261, %v1265
      %v1983 = vunpack.c.l.s4 1983009808
      %v1984 = vunpack.c.0.s8 %v1983
      %v1985 = vlaneseq
      %v1986 = vshrl.u32 %v1985, 7
      %v1987 = vsub.s32 %v1984, %v1986
      %v1988 = vrot.slane %v1980, %v1987
      %v1990 = vunpack.c.l.s4 1983009808
      %v1991 = vunpack.c.0.s8 %v1990
      %v1992 = vlaneseq
      %v1993 = vshrl.u32 %v1992, 7
      %v1994 = vsub.s32 %v1991, %v1993
      %v1995 = vrot.slane %v1981, %v1994
      %v1996 = vcombine.low %v1267, %v1271
      %v1997 = vcombine.high %v1267, %v1271
      %v1999 = vunpack.c.l.s4 1983009808
      %v2000 = vunpack.c.0.s8 %v1999
      %v2001 = vlaneseq
      %v2002 = vshrl.u32 %v2001, 7
      %v2003 = vsub.s32 %v2000, %v2002
      %v2004 = vrot.slane %v1996, %v2003
      %v2006 = vunpack.c.l.s4 1983009808
      %v2007 = vunpack.c.0.s8 %v2006
      %v2008 = vlaneseq
      %v2009 = vshrl.u32 %v2008, 7
      %v2010 = vsub.s32 %v2007, %v2009
      %v2011 = vrot.slane %v1997, %v2010
      %v2012 = vcombine.low %v1269, %v1273
      %v2013 = vcombine.high %v1269, %v1273
      %v2015 = vunpack.c.l.s4 1983009808
      %v2016 = vunpack.c.0.s8 %v2015
      %v2017 = vlaneseq
      %v2018 = vshrl.u32 %v2017, 7
      %v2019 = vsub.s32 %v2016, %v2018
      %v2020 = vrot.slane %v2012, %v2019
      %v2022 = vunpack.c.l.s4 1983009808
      %v2023 = vunpack.c.0.s8 %v2022
      %v2024 = vlaneseq
      %v2025 = vshrl.u32 %v2024, 7
      %v2026 = vsub.s32 %v2023, %v2025
      %v2027 = vrot.slane %v2013, %v2026
      %v2028 = vcombine.low %v1972, %v1988
      %v2029 = vcombine.high %v1972, %v1988
      %v2031 = vunpack.c.l.s4 1934713408
      %v2032 = vunpack.c.0.s8 %v2031
      %v2033 = vlaneseq
      %v2034 = vshrl.u32 %v2033, 7
      %v2035 = vsub.s32 %v2032, %v2034
      %v2036 = vrot.slane %v2028, %v2035
      %v2038 = vunpack.c.l.s4 1934713408
      %v2039 = vunpack.c.0.s8 %v2038
      %v2040 = vlaneseq
      %v2041 = vshrl.u32 %v2040, 7
      %v2042 = vsub.s32 %v2039, %v2041
      %v2043 = vrot.slane %v2029, %v2042
      %v2044 = vcombine.low %v1979, %v1995
      %v2045 = vcombine.high %v1979, %v1995
      %v2047 = vunpack.c.l.s4 1934713408
      %v2048 = vunpack.c.0.s8 %v2047
      %v2049 = vlaneseq
      %v2050 = vshrl.u32 %v2049, 7
      %v2051 = vsub.s32 %v2048, %v2050
      %v2052 = vrot.slane %v2044, %v2051
      %v2054 = vunpack.c.l.s4 1934713408
      %v2055 = vunpack.c.0.s8 %v2054
      %v2056 = vlaneseq
      %v2057 = vshrl.u32 %v2056, 7
      %v2058 = vsub.s32 %v2055, %v2057
      %v2059 = vrot.slane %v2045, %v2058
      %v2060 = vcombine.low %v2004, %v2020
      %v2061 = vcombine.high %v2004, %v2020
      %v2063 = vunpack.c.l.s4 1934713408
      %v2064 = vunpack.c.0.s8 %v2063
      %v2065 = vlaneseq
      %v2066 = vshrl.u32 %v2065, 7
      %v2067 = vsub.s32 %v2064, %v2066
      %v2068 = vrot.slane %v2060, %v2067
      %v2070 = vunpack.c.l.s4 1934713408
      %v2071 = vunpack.c.0.s8 %v2070
      %v2072 = vlaneseq
      %v2073 = vshrl.u32 %v2072, 7
      %v2074 = vsub.s32 %v2071, %v2073
      %v2075 = vrot.slane %v2061, %v2074
      %v2076 = vcombine.low %v2011, %v2027
      %v2077 = vcombine.high %v2011, %v2027
      %v2079 = vunpack.c.l.s4 1934713408
      %v2080 = vunpack.c.0.s8 %v2079
      %v2081 = vlaneseq
      %v2082 = vshrl.u32 %v2081, 7
      %v2083 = vsub.s32 %v2080, %v2082
      %v2084 = vrot.slane %v2076, %v2083
      %v2086 = vunpack.c.l.s4 1934713408
      %v2087 = vunpack.c.0.s8 %v2086
      %v2088 = vlaneseq
      %v2089 = vshrl.u32 %v2088, 7
      %v2090 = vsub.s32 %v2087, %v2089
      %v2091 = vrot.slane %v2077, %v2090
      %v2092 = vcombine.low %v2036, %v2068
      %v2093 = vcombine.high %v2036, %v2068
      %v2094 = vcombine.low %v2043, %v2075
      %v2095 = vcombine.high %v2043, %v2075
      %v2096 = vcombine.low %v2052, %v2084
      %v2097 = vcombine.high %v2052, %v2084
      %v2098 = vcombine.low %v2059, %v2091
      %v2099 = vcombine.high %v2059, %v2091
      %v2100 = vcombine.low %v1275, %v1279
      %v2101 = vcombine.high %v1275, %v1279
      %v2103 = vunpack.c.l.s4 1983009808
      %v2104 = vunpack.c.0.s8 %v2103
      %v2105 = vlaneseq
      %v2106 = vshrl.u32 %v2105, 7
      %v2107 = vsub.s32 %v2104, %v2106
      %v2108 = vrot.slane %v2100, %v2107
      %v2110 = vunpack.c.l.s4 1983009808
      %v2111 = vunpack.c.0.s8 %v2110
      %v2112 = vlaneseq
      %v2113 = vshrl.u32 %v2112, 7
      %v2114 = vsub.s32 %v2111, %v2113
      %v2115 = vrot.slane %v2101, %v2114
      %v2116 = vcombine.low %v1277, %v1281
      %v2117 = vcombine.high %v1277, %v1281
      %v2119 = vunpack.c.l.s4 1983009808
      %v2120 = vunpack.c.0.s8 %v2119
      %v2121 = vlaneseq
      %v2122 = vshrl.u32 %v2121, 7
      %v2123 = vsub.s32 %v2120, %v2122
      %v2124 = vrot.slane %v2116, %v2123
      %v2126 = vunpack.c.l.s4 1983009808
      %v2127 = vunpack.c.0.s8 %v2126
      %v2128 = vlaneseq
      %v2129 = vshrl.u32 %v2128, 7
      %v2130 = vsub.s32 %v2127, %v2129
      %v2131 = vrot.slane %v2117, %v2130
      %v2132 = vcombine.low %v1283, %v1287
      %v2133 = vcombine.high %v1283, %v1287
      %v2135 = vunpack.c.l.s4 1983009808
      %v2136 = vunpack.c.0.s8 %v2135
      %v2137 = vlaneseq
      %v2138 = vshrl.u32 %v2137, 7
      %v2139 = vsub.s32 %v2136, %v2138
      %v2140 = vrot.slane %v2132, %v2139
      %v2142 = vunpack.c.l.s4 1983009808
      %v2143 = vunpack.c.0.s8 %v2142
      %v2144 = vlaneseq
      %v2145 = vshrl.u32 %v2144, 7
      %v2146 = vsub.s32 %v2143, %v2145
      %v2147 = vrot.slane %v2133, %v2146
      %v2148 = vcombine.low %v1285, %v1289
      %v2149 = vcombine.high %v1285, %v1289
      %v2151 = vunpack.c.l.s4 1983009808
      %v2152 = vunpack.c.0.s8 %v2151
      %v2153 = vlaneseq
      %v2154 = vshrl.u32 %v2153, 7
      %v2155 = vsub.s32 %v2152, %v2154
      %v2156 = vrot.slane %v2148, %v2155
      %v2158 = vunpack.c.l.s4 1983009808
      %v2159 = vunpack.c.0.s8 %v2158
      %v2160 = vlaneseq
      %v2161 = vshrl.u32 %v2160, 7
      %v2162 = vsub.s32 %v2159, %v2161
      %v2163 = vrot.slane %v2149, %v2162
      %v2164 = vcombine.low %v2108, %v2124
      %v2165 = vcombine.high %v2108, %v2124
      %v2167 = vunpack.c.l.s4 1934713408
      %v2168 = vunpack.c.0.s8 %v2167
      %v2169 = vlaneseq
      %v2170 = vshrl.u32 %v2169, 7
      %v2171 = vsub.s32 %v2168, %v2170
      %v2172 = vrot.slane %v2164, %v2171
      %v2174 = vunpack.c.l.s4 1934713408
      %v2175 = vunpack.c.0.s8 %v2174
      %v2176 = vlaneseq
      %v2177 = vshrl.u32 %v2176, 7
      %v2178 = vsub.s32 %v2175, %v2177
      %v2179 = vrot.slane %v2165, %v2178
      %v2180 = vcombine.low %v2115, %v2131
      %v2181 = vcombine.high %v2115, %v2131
      %v2183 = vunpack.c.l.s4 1934713408
      %v2184 = vunpack.c.0.s8 %v2183
      %v2185 = vlaneseq
      %v2186 = vshrl.u32 %v2185, 7
      %v2187 = vsub.s32 %v2184, %v2186
      %v2188 = vrot.slane %v2180, %v2187
      %v2190 = vunpack.c.l.s4 1934713408
      %v2191 = vunpack.c.0.s8 %v2190
      %v2192 = vlaneseq
      %v2193 = vshrl.u32 %v2192, 7
      %v2194 = vsub.s32 %v2191, %v2193
      %v2195 = vrot.slane %v2181, %v2194
      %v2196 = vcombine.low %v2140, %v2156
      %v2197 = vcombine.high %v2140, %v2156
      %v2199 = vunpack.c.l.s4 1934713408
      %v2200 = vunpack.c.0.s8 %v2199
      %v2201 = vlaneseq
      %v2202 = vshrl.u32 %v2201, 7
      %v2203 = vsub.s32 %v2200, %v2202
      %v2204 = vrot.slane %v2196, %v2203
      %v2206 = vunpack.c.l.s4 1934713408
      %v2207 = vunpack.c.0.s8 %v2206
      %v2208 = vlaneseq
      %v2209 = vshrl.u32 %v2208, 7
      %v2210 = vsub.s32 %v2207, %v2209
      %v2211 = vrot.slane %v2197, %v2210
      %v2212 = vcombine.low %v2147, %v2163
      %v2213 = vcombine.high %v2147, %v2163
      %v2215 = vunpack.c.l.s4 1934713408
      %v2216 = vunpack.c.0.s8 %v2215
      %v2217 = vlaneseq
      %v2218 = vshrl.u32 %v2217, 7
      %v2219 = vsub.s32 %v2216, %v2218
      %v2220 = vrot.slane %v2212, %v2219
      %v2222 = vunpack.c.l.s4 1934713408
      %v2223 = vunpack.c.0.s8 %v2222
      %v2224 = vlaneseq
      %v2225 = vshrl.u32 %v2224, 7
      %v2226 = vsub.s32 %v2223, %v2225
      %v2227 = vrot.slane %v2213, %v2226
      %v2228 = vcombine.low %v2172, %v2204
      %v2229 = vcombine.high %v2172, %v2204
      %v2230 = vcombine.low %v2179, %v2211
      %v2231 = vcombine.high %v2179, %v2211
      %v2232 = vcombine.low %v2188, %v2220
      %v2233 = vcombine.high %v2188, %v2220
      %v2234 = vcombine.low %v2195, %v2227
      %v2235 = vcombine.high %v2195, %v2227
      %v2236 = vcombine.low %v1307, %v1311
      %v2237 = vcombine.high %v1307, %v1311
      %v2239 = vunpack.c.l.s4 1983009808
      %v2240 = vunpack.c.0.s8 %v2239
      %v2241 = vlaneseq
      %v2242 = vshrl.u32 %v2241, 7
      %v2243 = vsub.s32 %v2240, %v2242
      %v2244 = vrot.slane %v2236, %v2243
      %v2246 = vunpack.c.l.s4 1983009808
      %v2247 = vunpack.c.0.s8 %v2246
      %v2248 = vlaneseq
      %v2249 = vshrl.u32 %v2248, 7
      %v2250 = vsub.s32 %v2247, %v2249
      %v2251 = vrot.slane %v2237, %v2250
      %v2252 = vcombine.low %v1309, %v1313
      %v2253 = vcombine.high %v1309, %v1313
      %v2255 = vunpack.c.l.s4 1983009808
      %v2256 = vunpack.c.0.s8 %v2255
      %v2257 = vlaneseq
      %v2258 = vshrl.u32 %v2257, 7
      %v2259 = vsub.s32 %v2256, %v2258
      %v2260 = vrot.slane %v2252, %v2259
      %v2262 = vunpack.c.l.s4 1983009808
      %v2263 = vunpack.c.0.s8 %v2262
      %v2264 = vlaneseq
      %v2265 = vshrl.u32 %v2264, 7
      %v2266 = vsub.s32 %v2263, %v2265
      %v2267 = vrot.slane %v2253, %v2266
      %v2268 = vcombine.low %v1315, %v1319
      %v2269 = vcombine.high %v1315, %v1319
      %v2271 = vunpack.c.l.s4 1983009808
      %v2272 = vunpack.c.0.s8 %v2271
      %v2273 = vlaneseq
      %v2274 = vshrl.u32 %v2273, 7
      %v2275 = vsub.s32 %v2272, %v2274
      %v2276 = vrot.slane %v2268, %v2275
      %v2278 = vunpack.c.l.s4 1983009808
      %v2279 = vunpack.c.0.s8 %v2278
      %v2280 = vlaneseq
      %v2281 = vshrl.u32 %v2280, 7
      %v2282 = vsub.s32 %v2279, %v2281
      %v2283 = vrot.slane %v2269, %v2282
      %v2284 = vcombine.low %v1317, %v1321
      %v2285 = vcombine.high %v1317, %v1321
      %v2287 = vunpack.c.l.s4 1983009808
      %v2288 = vunpack.c.0.s8 %v2287
      %v2289 = vlaneseq
      %v2290 = vshrl.u32 %v2289, 7
      %v2291 = vsub.s32 %v2288, %v2290
      %v2292 = vrot.slane %v2284, %v2291
      %v2294 = vunpack.c.l.s4 1983009808
      %v2295 = vunpack.c.0.s8 %v2294
      %v2296 = vlaneseq
      %v2297 = vshrl.u32 %v2296, 7
      %v2298 = vsub.s32 %v2295, %v2297
      %v2299 = vrot.slane %v2285, %v2298
      %v2300 = vcombine.low %v2244, %v2260
      %v2301 = vcombine.high %v2244, %v2260
      %v2303 = vunpack.c.l.s4 1934713408
      %v2304 = vunpack.c.0.s8 %v2303
      %v2305 = vlaneseq
      %v2306 = vshrl.u32 %v2305, 7
      %v2307 = vsub.s32 %v2304, %v2306
      %v2308 = vrot.slane %v2300, %v2307
      %v2310 = vunpack.c.l.s4 1934713408
      %v2311 = vunpack.c.0.s8 %v2310
      %v2312 = vlaneseq
      %v2313 = vshrl.u32 %v2312, 7
      %v2314 = vsub.s32 %v2311, %v2313
      %v2315 = vrot.slane %v2301, %v2314
      %v2316 = vcombine.low %v2251, %v2267
      %v2317 = vcombine.high %v2251, %v2267
      %v2319 = vunpack.c.l.s4 1934713408
      %v2320 = vunpack.c.0.s8 %v2319
      %v2321 = vlaneseq
      %v2322 = vshrl.u32 %v2321, 7
      %v2323 = vsub.s32 %v2320, %v2322
      %v2324 = vrot.slane %v2316, %v2323
      %v2326 = vunpack.c.l.s4 1934713408
      %v2327 = vunpack.c.0.s8 %v2326
      %v2328 = vlaneseq
      %v2329 = vshrl.u32 %v2328, 7
      %v2330 = vsub.s32 %v2327, %v2329
      %v2331 = vrot.slane %v2317, %v2330
      %v2332 = vcombine.low %v2276, %v2292
      %v2333 = vcombine.high %v2276, %v2292
      %v2335 = vunpack.c.l.s4 1934713408
      %v2336 = vunpack.c.0.s8 %v2335
      %v2337 = vlaneseq
      %v2338 = vshrl.u32 %v2337, 7
      %v2339 = vsub.s32 %v2336, %v2338
      %v2340 = vrot.slane %v2332, %v2339
      %v2342 = vunpack.c.l.s4 1934713408
      %v2343 = vunpack.c.0.s8 %v2342
      %v2344 = vlaneseq
      %v2345 = vshrl.u32 %v2344, 7
      %v2346 = vsub.s32 %v2343, %v2345
      %v2347 = vrot.slane %v2333, %v2346
      %v2348 = vcombine.low %v2283, %v2299
      %v2349 = vcombine.high %v2283, %v2299
      %v2351 = vunpack.c.l.s4 1934713408
      %v2352 = vunpack.c.0.s8 %v2351
      %v2353 = vlaneseq
      %v2354 = vshrl.u32 %v2353, 7
      %v2355 = vsub.s32 %v2352, %v2354
      %v2356 = vrot.slane %v2348, %v2355
      %v2358 = vunpack.c.l.s4 1934713408
      %v2359 = vunpack.c.0.s8 %v2358
      %v2360 = vlaneseq
      %v2361 = vshrl.u32 %v2360, 7
      %v2362 = vsub.s32 %v2359, %v2361
      %v2363 = vrot.slane %v2349, %v2362
      %v2364 = vcombine.low %v2308, %v2340
      %v2365 = vcombine.high %v2308, %v2340
      %v2366 = vcombine.low %v2315, %v2347
      %v2367 = vcombine.high %v2315, %v2347
      %v2368 = vcombine.low %v2324, %v2356
      %v2369 = vcombine.high %v2324, %v2356
      %v2370 = vcombine.low %v2331, %v2363
      %v2371 = vcombine.high %v2331, %v2363
      %v2372 = vcombine.low %v1323, %v1327
      %v2373 = vcombine.high %v1323, %v1327
      %v2375 = vunpack.c.l.s4 1983009808
      %v2376 = vunpack.c.0.s8 %v2375
      %v2377 = vlaneseq
      %v2378 = vshrl.u32 %v2377, 7
      %v2379 = vsub.s32 %v2376, %v2378
      %v2380 = vrot.slane %v2372, %v2379
      %v2382 = vunpack.c.l.s4 1983009808
      %v2383 = vunpack.c.0.s8 %v2382
      %v2384 = vlaneseq
      %v2385 = vshrl.u32 %v2384, 7
      %v2386 = vsub.s32 %v2383, %v2385
      %v2387 = vrot.slane %v2373, %v2386
      %v2388 = vcombine.low %v1325, %v1329
      %v2389 = vcombine.high %v1325, %v1329
      %v2391 = vunpack.c.l.s4 1983009808
      %v2392 = vunpack.c.0.s8 %v2391
      %v2393 = vlaneseq
      %v2394 = vshrl.u32 %v2393, 7
      %v2395 = vsub.s32 %v2392, %v2394
      %v2396 = vrot.slane %v2388, %v2395
      %v2398 = vunpack.c.l.s4 1983009808
      %v2399 = vunpack.c.0.s8 %v2398
      %v2400 = vlaneseq
      %v2401 = vshrl.u32 %v2400, 7
      %v2402 = vsub.s32 %v2399, %v2401
      %v2403 = vrot.slane %v2389, %v2402
      %v2404 = vcombine.low %v1331, %v1335
      %v2405 = vcombine.high %v1331, %v1335
      %v2407 = vunpack.c.l.s4 1983009808
      %v2408 = vunpack.c.0.s8 %v2407
      %v2409 = vlaneseq
      %v2410 = vshrl.u32 %v2409, 7
      %v2411 = vsub.s32 %v2408, %v2410
      %v2412 = vrot.slane %v2404, %v2411
      %v2414 = vunpack.c.l.s4 1983009808
      %v2415 = vunpack.c.0.s8 %v2414
      %v2416 = vlaneseq
      %v2417 = vshrl.u32 %v2416, 7
      %v2418 = vsub.s32 %v2415, %v2417
      %v2419 = vrot.slane %v2405, %v2418
      %v2420 = vcombine.low %v1333, %v1337
      %v2421 = vcombine.high %v1333, %v1337
      %v2423 = vunpack.c.l.s4 1983009808
      %v2424 = vunpack.c.0.s8 %v2423
      %v2425 = vlaneseq
      %v2426 = vshrl.u32 %v2425, 7
      %v2427 = vsub.s32 %v2424, %v2426
      %v2428 = vrot.slane %v2420, %v2427
      %v2430 = vunpack.c.l.s4 1983009808
      %v2431 = vunpack.c.0.s8 %v2430
      %v2432 = vlaneseq
      %v2433 = vshrl.u32 %v2432, 7
      %v2434 = vsub.s32 %v2431, %v2433
      %v2435 = vrot.slane %v2421, %v2434
      %v2436 = vcombine.low %v2380, %v2396
      %v2437 = vcombine.high %v2380, %v2396
      %v2439 = vunpack.c.l.s4 1934713408
      %v2440 = vunpack.c.0.s8 %v2439
      %v2441 = vlaneseq
      %v2442 = vshrl.u32 %v2441, 7
      %v2443 = vsub.s32 %v2440, %v2442
      %v2444 = vrot.slane %v2436, %v2443
      %v2446 = vunpack.c.l.s4 1934713408
      %v2447 = vunpack.c.0.s8 %v2446
      %v2448 = vlaneseq
      %v2449 = vshrl.u32 %v2448, 7
      %v2450 = vsub.s32 %v2447, %v2449
      %v2451 = vrot.slane %v2437, %v2450
      %v2452 = vcombine.low %v2387, %v2403
      %v2453 = vcombine.high %v2387, %v2403
      %v2455 = vunpack.c.l.s4 1934713408
      %v2456 = vunpack.c.0.s8 %v2455
      %v2457 = vlaneseq
      %v2458 = vshrl.u32 %v2457, 7
      %v2459 = vsub.s32 %v2456, %v2458
      %v2460 = vrot.slane %v2452, %v2459
      %v2462 = vunpack.c.l.s4 1934713408
      %v2463 = vunpack.c.0.s8 %v2462
      %v2464 = vlaneseq
      %v2465 = vshrl.u32 %v2464, 7
      %v2466 = vsub.s32 %v2463, %v2465
      %v2467 = vrot.slane %v2453, %v2466
      %v2468 = vcombine.low %v2412, %v2428
      %v2469 = vcombine.high %v2412, %v2428
      %v2471 = vunpack.c.l.s4 1934713408
      %v2472 = vunpack.c.0.s8 %v2471
      %v2473 = vlaneseq
      %v2474 = vshrl.u32 %v2473, 7
      %v2475 = vsub.s32 %v2472, %v2474
      %v2476 = vrot.slane %v2468, %v2475
      %v2478 = vunpack.c.l.s4 1934713408
      %v2479 = vunpack.c.0.s8 %v2478
      %v2480 = vlaneseq
      %v2481 = vshrl.u32 %v2480, 7
      %v2482 = vsub.s32 %v2479, %v2481
      %v2483 = vrot.slane %v2469, %v2482
      %v2484 = vcombine.low %v2419, %v2435
      %v2485 = vcombine.high %v2419, %v2435
      %v2487 = vunpack.c.l.s4 1934713408
      %v2488 = vunpack.c.0.s8 %v2487
      %v2489 = vlaneseq
      %v2490 = vshrl.u32 %v2489, 7
      %v2491 = vsub.s32 %v2488, %v2490
      %v2492 = vrot.slane %v2484, %v2491
      %v2494 = vunpack.c.l.s4 1934713408
      %v2495 = vunpack.c.0.s8 %v2494
      %v2496 = vlaneseq
      %v2497 = vshrl.u32 %v2496, 7
      %v2498 = vsub.s32 %v2495, %v2497
      %v2499 = vrot.slane %v2485, %v2498
      %v2500 = vcombine.low %v2444, %v2476
      %v2501 = vcombine.high %v2444, %v2476
      %v2502 = vcombine.low %v2451, %v2483
      %v2503 = vcombine.high %v2451, %v2483
      %v2504 = vcombine.low %v2460, %v2492
      %v2505 = vcombine.high %v2460, %v2492
      %v2506 = vcombine.low %v2467, %v2499
      %v2507 = vcombine.high %v2467, %v2499
      %v2508 = vcombine.low %v1373, %v1379
      %v2509 = vcombine.high %v1373, %v1379
      %v2511 = vunpack.c.l.s4 1983009808
      %v2512 = vunpack.c.0.s8 %v2511
      %v2513 = vlaneseq
      %v2514 = vshrl.u32 %v2513, 7
      %v2515 = vsub.s32 %v2512, %v2514
      %v2516 = vrot.slane %v2508, %v2515
      %v2518 = vunpack.c.l.s4 1983009808
      %v2519 = vunpack.c.0.s8 %v2518
      %v2520 = vlaneseq
      %v2521 = vshrl.u32 %v2520, 7
      %v2522 = vsub.s32 %v2519, %v2521
      %v2523 = vrot.slane %v2509, %v2522
      %v2524 = vcombine.low %v1376, %v1382
      %v2525 = vcombine.high %v1376, %v1382
      %v2527 = vunpack.c.l.s4 1983009808
      %v2528 = vunpack.c.0.s8 %v2527
      %v2529 = vlaneseq
      %v2530 = vshrl.u32 %v2529, 7
      %v2531 = vsub.s32 %v2528, %v2530
      %v2532 = vrot.slane %v2524, %v2531
      %v2534 = vunpack.c.l.s4 1983009808
      %v2535 = vunpack.c.0.s8 %v2534
      %v2536 = vlaneseq
      %v2537 = vshrl.u32 %v2536, 7
      %v2538 = vsub.s32 %v2535, %v2537
      %v2539 = vrot.slane %v2525, %v2538
      %v2540 = vcombine.low %v1385, %v1391
      %v2541 = vcombine.high %v1385, %v1391
      %v2543 = vunpack.c.l.s4 1983009808
      %v2544 = vunpack.c.0.s8 %v2543
      %v2545 = vlaneseq
      %v2546 = vshrl.u32 %v2545, 7
      %v2547 = vsub.s32 %v2544, %v2546
      %v2548 = vrot.slane %v2540, %v2547
      %v2550 = vunpack.c.l.s4 1983009808
      %v2551 = vunpack.c.0.s8 %v2550
      %v2552 = vlaneseq
      %v2553 = vshrl.u32 %v2552, 7
      %v2554 = vsub.s32 %v2551, %v2553
      %v2555 = vrot.slane %v2541, %v2554
      %v2556 = vcombine.low %v1388, %v1394
      %v2557 = vcombine.high %v1388, %v1394
      %v2559 = vunpack.c.l.s4 1983009808
      %v2560 = vunpack.c.0.s8 %v2559
      %v2561 = vlaneseq
      %v2562 = vshrl.u32 %v2561, 7
      %v2563 = vsub.s32 %v2560, %v2562
      %v2564 = vrot.slane %v2556, %v2563
      %v2566 = vunpack.c.l.s4 1983009808
      %v2567 = vunpack.c.0.s8 %v2566
      %v2568 = vlaneseq
      %v2569 = vshrl.u32 %v2568, 7
      %v2570 = vsub.s32 %v2567, %v2569
      %v2571 = vrot.slane %v2557, %v2570
      %v2572 = vcombine.low %v2516, %v2532
      %v2573 = vcombine.high %v2516, %v2532
      %v2575 = vunpack.c.l.s4 1934713408
      %v2576 = vunpack.c.0.s8 %v2575
      %v2577 = vlaneseq
      %v2578 = vshrl.u32 %v2577, 7
      %v2579 = vsub.s32 %v2576, %v2578
      %v2580 = vrot.slane %v2572, %v2579
      %v2582 = vunpack.c.l.s4 1934713408
      %v2583 = vunpack.c.0.s8 %v2582
      %v2584 = vlaneseq
      %v2585 = vshrl.u32 %v2584, 7
      %v2586 = vsub.s32 %v2583, %v2585
      %v2587 = vrot.slane %v2573, %v2586
      %v2588 = vcombine.low %v2523, %v2539
      %v2589 = vcombine.high %v2523, %v2539
      %v2591 = vunpack.c.l.s4 1934713408
      %v2592 = vunpack.c.0.s8 %v2591
      %v2593 = vlaneseq
      %v2594 = vshrl.u32 %v2593, 7
      %v2595 = vsub.s32 %v2592, %v2594
      %v2596 = vrot.slane %v2588, %v2595
      %v2598 = vunpack.c.l.s4 1934713408
      %v2599 = vunpack.c.0.s8 %v2598
      %v2600 = vlaneseq
      %v2601 = vshrl.u32 %v2600, 7
      %v2602 = vsub.s32 %v2599, %v2601
      %v2603 = vrot.slane %v2589, %v2602
      %v2604 = vcombine.low %v2548, %v2564
      %v2605 = vcombine.high %v2548, %v2564
      %v2607 = vunpack.c.l.s4 1934713408
      %v2608 = vunpack.c.0.s8 %v2607
      %v2609 = vlaneseq
      %v2610 = vshrl.u32 %v2609, 7
      %v2611 = vsub.s32 %v2608, %v2610
      %v2612 = vrot.slane %v2604, %v2611
      %v2614 = vunpack.c.l.s4 1934713408
      %v2615 = vunpack.c.0.s8 %v2614
      %v2616 = vlaneseq
      %v2617 = vshrl.u32 %v2616, 7
      %v2618 = vsub.s32 %v2615, %v2617
      %v2619 = vrot.slane %v2605, %v2618
      %v2620 = vcombine.low %v2555, %v2571
      %v2621 = vcombine.high %v2555, %v2571
      %v2623 = vunpack.c.l.s4 1934713408
      %v2624 = vunpack.c.0.s8 %v2623
      %v2625 = vlaneseq
      %v2626 = vshrl.u32 %v2625, 7
      %v2627 = vsub.s32 %v2624, %v2626
      %v2628 = vrot.slane %v2620, %v2627
      %v2630 = vunpack.c.l.s4 1934713408
      %v2631 = vunpack.c.0.s8 %v2630
      %v2632 = vlaneseq
      %v2633 = vshrl.u32 %v2632, 7
      %v2634 = vsub.s32 %v2631, %v2633
      %v2635 = vrot.slane %v2621, %v2634
      %v2636 = vcombine.low %v2580, %v2612
      %v2637 = vcombine.high %v2580, %v2612
      %v2638 = vcombine.low %v2587, %v2619
      %v2639 = vcombine.high %v2587, %v2619
      %v2640 = vcombine.low %v2596, %v2628
      %v2641 = vcombine.high %v2596, %v2628
      %v2642 = vcombine.low %v2603, %v2635
      %v2643 = vcombine.high %v2603, %v2635
      %v2644 = vcombine.low %v1397, %v1403
      %v2645 = vcombine.high %v1397, %v1403
      %v2647 = vunpack.c.l.s4 1983009808
      %v2648 = vunpack.c.0.s8 %v2647
      %v2649 = vlaneseq
      %v2650 = vshrl.u32 %v2649, 7
      %v2651 = vsub.s32 %v2648, %v2650
      %v2652 = vrot.slane %v2644, %v2651
      %v2654 = vunpack.c.l.s4 1983009808
      %v2655 = vunpack.c.0.s8 %v2654
      %v2656 = vlaneseq
      %v2657 = vshrl.u32 %v2656, 7
      %v2658 = vsub.s32 %v2655, %v2657
      %v2659 = vrot.slane %v2645, %v2658
      %v2660 = vcombine.low %v1400, %v1406
      %v2661 = vcombine.high %v1400, %v1406
      %v2663 = vunpack.c.l.s4 1983009808
      %v2664 = vunpack.c.0.s8 %v2663
      %v2665 = vlaneseq
      %v2666 = vshrl.u32 %v2665, 7
      %v2667 = vsub.s32 %v2664, %v2666
      %v2668 = vrot.slane %v2660, %v2667
      %v2670 = vunpack.c.l.s4 1983009808
      %v2671 = vunpack.c.0.s8 %v2670
      %v2672 = vlaneseq
      %v2673 = vshrl.u32 %v2672, 7
      %v2674 = vsub.s32 %v2671, %v2673
      %v2675 = vrot.slane %v2661, %v2674
      %v2676 = vcombine.low %v1409, %v1415
      %v2677 = vcombine.high %v1409, %v1415
      %v2679 = vunpack.c.l.s4 1983009808
      %v2680 = vunpack.c.0.s8 %v2679
      %v2681 = vlaneseq
      %v2682 = vshrl.u32 %v2681, 7
      %v2683 = vsub.s32 %v2680, %v2682
      %v2684 = vrot.slane %v2676, %v2683
      %v2686 = vunpack.c.l.s4 1983009808
      %v2687 = vunpack.c.0.s8 %v2686
      %v2688 = vlaneseq
      %v2689 = vshrl.u32 %v2688, 7
      %v2690 = vsub.s32 %v2687, %v2689
      %v2691 = vrot.slane %v2677, %v2690
      %v2692 = vcombine.low %v1412, %v1418
      %v2693 = vcombine.high %v1412, %v1418
      %v2695 = vunpack.c.l.s4 1983009808
      %v2696 = vunpack.c.0.s8 %v2695
      %v2697 = vlaneseq
      %v2698 = vshrl.u32 %v2697, 7
      %v2699 = vsub.s32 %v2696, %v2698
      %v2700 = vrot.slane %v2692, %v2699
      %v2702 = vunpack.c.l.s4 1983009808
      %v2703 = vunpack.c.0.s8 %v2702
      %v2704 = vlaneseq
      %v2705 = vshrl.u32 %v2704, 7
      %v2706 = vsub.s32 %v2703, %v2705
      %v2707 = vrot.slane %v2693, %v2706
      %v2708 = vcombine.low %v2652, %v2668
      %v2709 = vcombine.high %v2652, %v2668
      %v2711 = vunpack.c.l.s4 1934713408
      %v2712 = vunpack.c.0.s8 %v2711
      %v2713 = vlaneseq
      %v2714 = vshrl.u32 %v2713, 7
      %v2715 = vsub.s32 %v2712, %v2714
      %v2716 = vrot.slane %v2708, %v2715
      %v2718 = vunpack.c.l.s4 1934713408
      %v2719 = vunpack.c.0.s8 %v2718
      %v2720 = vlaneseq
      %v2721 = vshrl.u32 %v2720, 7
      %v2722 = vsub.s32 %v2719, %v2721
      %v2723 = vrot.slane %v2709, %v2722
      %v2724 = vcombine.low %v2659, %v2675
      %v2725 = vcombine.high %v2659, %v2675
      %v2727 = vunpack.c.l.s4 1934713408
      %v2728 = vunpack.c.0.s8 %v2727
      %v2729 = vlaneseq
      %v2730 = vshrl.u32 %v2729, 7
      %v2731 = vsub.s32 %v2728, %v2730
      %v2732 = vrot.slane %v2724, %v2731
      %v2734 = vunpack.c.l.s4 1934713408
      %v2735 = vunpack.c.0.s8 %v2734
      %v2736 = vlaneseq
      %v2737 = vshrl.u32 %v2736, 7
      %v2738 = vsub.s32 %v2735, %v2737
      %v2739 = vrot.slane %v2725, %v2738
      %v2740 = vcombine.low %v2684, %v2700
      %v2741 = vcombine.high %v2684, %v2700
      %v2743 = vunpack.c.l.s4 1934713408
      %v2744 = vunpack.c.0.s8 %v2743
      %v2745 = vlaneseq
      %v2746 = vshrl.u32 %v2745, 7
      %v2747 = vsub.s32 %v2744, %v2746
      %v2748 = vrot.slane %v2740, %v2747
      %v2750 = vunpack.c.l.s4 1934713408
      %v2751 = vunpack.c.0.s8 %v2750
      %v2752 = vlaneseq
      %v2753 = vshrl.u32 %v2752, 7
      %v2754 = vsub.s32 %v2751, %v2753
      %v2755 = vrot.slane %v2741, %v2754
      %v2756 = vcombine.low %v2691, %v2707
      %v2757 = vcombine.high %v2691, %v2707
      %v2759 = vunpack.c.l.s4 1934713408
      %v2760 = vunpack.c.0.s8 %v2759
      %v2761 = vlaneseq
      %v2762 = vshrl.u32 %v2761, 7
      %v2763 = vsub.s32 %v2760, %v2762
      %v2764 = vrot.slane %v2756, %v2763
      %v2766 = vunpack.c.l.s4 1934713408
      %v2767 = vunpack.c.0.s8 %v2766
      %v2768 = vlaneseq
      %v2769 = vshrl.u32 %v2768, 7
      %v2770 = vsub.s32 %v2767, %v2769
      %v2771 = vrot.slane %v2757, %v2770
      %v2772 = vcombine.low %v2716, %v2748
      %v2773 = vcombine.high %v2716, %v2748
      %v2774 = vcombine.low %v2723, %v2755
      %v2775 = vcombine.high %v2723, %v2755
      %v2776 = vcombine.low %v2732, %v2764
      %v2777 = vcombine.high %v2732, %v2764
      %v2778 = vcombine.low %v2739, %v2771
      %v2779 = vcombine.high %v2739, %v2771
      %v2780 = vcombine.low %v1436, %v1440
      %v2781 = vcombine.high %v1436, %v1440
      %v2783 = vunpack.c.l.s4 1983009808
      %v2784 = vunpack.c.0.s8 %v2783
      %v2785 = vlaneseq
      %v2786 = vshrl.u32 %v2785, 7
      %v2787 = vsub.s32 %v2784, %v2786
      %v2788 = vrot.slane %v2780, %v2787
      %v2790 = vunpack.c.l.s4 1983009808
      %v2791 = vunpack.c.0.s8 %v2790
      %v2792 = vlaneseq
      %v2793 = vshrl.u32 %v2792, 7
      %v2794 = vsub.s32 %v2791, %v2793
      %v2795 = vrot.slane %v2781, %v2794
      %v2796 = vcombine.low %v1438, %v1442
      %v2797 = vcombine.high %v1438, %v1442
      %v2799 = vunpack.c.l.s4 1983009808
      %v2800 = vunpack.c.0.s8 %v2799
      %v2801 = vlaneseq
      %v2802 = vshrl.u32 %v2801, 7
      %v2803 = vsub.s32 %v2800, %v2802
      %v2804 = vrot.slane %v2796, %v2803
      %v2806 = vunpack.c.l.s4 1983009808
      %v2807 = vunpack.c.0.s8 %v2806
      %v2808 = vlaneseq
      %v2809 = vshrl.u32 %v2808, 7
      %v2810 = vsub.s32 %v2807, %v2809
      %v2811 = vrot.slane %v2797, %v2810
      %v2812 = vcombine.low %v1444, %v1448
      %v2813 = vcombine.high %v1444, %v1448
      %v2815 = vunpack.c.l.s4 1983009808
      %v2816 = vunpack.c.0.s8 %v2815
      %v2817 = vlaneseq
      %v2818 = vshrl.u32 %v2817, 7
      %v2819 = vsub.s32 %v2816, %v2818
      %v2820 = vrot.slane %v2812, %v2819
      %v2822 = vunpack.c.l.s4 1983009808
      %v2823 = vunpack.c.0.s8 %v2822
      %v2824 = vlaneseq
      %v2825 = vshrl.u32 %v2824, 7
      %v2826 = vsub.s32 %v2823, %v2825
      %v2827 = vrot.slane %v2813, %v2826
      %v2828 = vcombine.low %v1446, %v1450
      %v2829 = vcombine.high %v1446, %v1450
      %v2831 = vunpack.c.l.s4 1983009808
      %v2832 = vunpack.c.0.s8 %v2831
      %v2833 = vlaneseq
      %v2834 = vshrl.u32 %v2833, 7
      %v2835 = vsub.s32 %v2832, %v2834
      %v2836 = vrot.slane %v2828, %v2835
      %v2838 = vunpack.c.l.s4 1983009808
      %v2839 = vunpack.c.0.s8 %v2838
      %v2840 = vlaneseq
      %v2841 = vshrl.u32 %v2840, 7
      %v2842 = vsub.s32 %v2839, %v2841
      %v2843 = vrot.slane %v2829, %v2842
      %v2844 = vcombine.low %v2788, %v2804
      %v2845 = vcombine.high %v2788, %v2804
      %v2847 = vunpack.c.l.s4 1934713408
      %v2848 = vunpack.c.0.s8 %v2847
      %v2849 = vlaneseq
      %v2850 = vshrl.u32 %v2849, 7
      %v2851 = vsub.s32 %v2848, %v2850
      %v2852 = vrot.slane %v2844, %v2851
      %v2854 = vunpack.c.l.s4 1934713408
      %v2855 = vunpack.c.0.s8 %v2854
      %v2856 = vlaneseq
      %v2857 = vshrl.u32 %v2856, 7
      %v2858 = vsub.s32 %v2855, %v2857
      %v2859 = vrot.slane %v2845, %v2858
      %v2860 = vcombine.low %v2795, %v2811
      %v2861 = vcombine.high %v2795, %v2811
      %v2863 = vunpack.c.l.s4 1934713408
      %v2864 = vunpack.c.0.s8 %v2863
      %v2865 = vlaneseq
      %v2866 = vshrl.u32 %v2865, 7
      %v2867 = vsub.s32 %v2864, %v2866
      %v2868 = vrot.slane %v2860, %v2867
      %v2870 = vunpack.c.l.s4 1934713408
      %v2871 = vunpack.c.0.s8 %v2870
      %v2872 = vlaneseq
      %v2873 = vshrl.u32 %v2872, 7
      %v2874 = vsub.s32 %v2871, %v2873
      %v2875 = vrot.slane %v2861, %v2874
      %v2876 = vcombine.low %v2820, %v2836
      %v2877 = vcombine.high %v2820, %v2836
      %v2879 = vunpack.c.l.s4 1934713408
      %v2880 = vunpack.c.0.s8 %v2879
      %v2881 = vlaneseq
      %v2882 = vshrl.u32 %v2881, 7
      %v2883 = vsub.s32 %v2880, %v2882
      %v2884 = vrot.slane %v2876, %v2883
      %v2886 = vunpack.c.l.s4 1934713408
      %v2887 = vunpack.c.0.s8 %v2886
      %v2888 = vlaneseq
      %v2889 = vshrl.u32 %v2888, 7
      %v2890 = vsub.s32 %v2887, %v2889
      %v2891 = vrot.slane %v2877, %v2890
      %v2892 = vcombine.low %v2827, %v2843
      %v2893 = vcombine.high %v2827, %v2843
      %v2895 = vunpack.c.l.s4 1934713408
      %v2896 = vunpack.c.0.s8 %v2895
      %v2897 = vlaneseq
      %v2898 = vshrl.u32 %v2897, 7
      %v2899 = vsub.s32 %v2896, %v2898
      %v2900 = vrot.slane %v2892, %v2899
      %v2902 = vunpack.c.l.s4 1934713408
      %v2903 = vunpack.c.0.s8 %v2902
      %v2904 = vlaneseq
      %v2905 = vshrl.u32 %v2904, 7
      %v2906 = vsub.s32 %v2903, %v2905
      %v2907 = vrot.slane %v2893, %v2906
      %v2908 = vcombine.low %v2852, %v2884
      %v2909 = vcombine.high %v2852, %v2884
      %v2910 = vcombine.low %v2859, %v2891
      %v2911 = vcombine.high %v2859, %v2891
      %v2912 = vcombine.low %v2868, %v2900
      %v2913 = vcombine.high %v2868, %v2900
      %v2914 = vcombine.low %v2875, %v2907
      %v2915 = vcombine.high %v2875, %v2907
      %v2916 = vcombine.low %v1452, %v1456
      %v2917 = vcombine.high %v1452, %v1456
      %v2919 = vunpack.c.l.s4 1983009808
      %v2920 = vunpack.c.0.s8 %v2919
      %v2921 = vlaneseq
      %v2922 = vshrl.u32 %v2921, 7
      %v2923 = vsub.s32 %v2920, %v2922
      %v2924 = vrot.slane %v2916, %v2923
      %v2926 = vunpack.c.l.s4 1983009808
      %v2927 = vunpack.c.0.s8 %v2926
      %v2928 = vlaneseq
      %v2929 = vshrl.u32 %v2928, 7
      %v2930 = vsub.s32 %v2927, %v2929
      %v2931 = vrot.slane %v2917, %v2930
      %v2932 = vcombine.low %v1454, %v1458
      %v2933 = vcombine.high %v1454, %v1458
      %v2935 = vunpack.c.l.s4 1983009808
      %v2936 = vunpack.c.0.s8 %v2935
      %v2937 = vlaneseq
      %v2938 = vshrl.u32 %v2937, 7
      %v2939 = vsub.s32 %v2936, %v2938
      %v2940 = vrot.slane %v2932, %v2939
      %v2942 = vunpack.c.l.s4 1983009808
      %v2943 = vunpack.c.0.s8 %v2942
      %v2944 = vlaneseq
      %v2945 = vshrl.u32 %v2944, 7
      %v2946 = vsub.s32 %v2943, %v2945
      %v2947 = vrot.slane %v2933, %v2946
      %v2948 = vcombine.low %v1460, %v1464
      %v2949 = vcombine.high %v1460, %v1464
      %v2951 = vunpack.c.l.s4 1983009808
      %v2952 = vunpack.c.0.s8 %v2951
      %v2953 = vlaneseq
      %v2954 = vshrl.u32 %v2953, 7
      %v2955 = vsub.s32 %v2952, %v2954
      %v2956 = vrot.slane %v2948, %v2955
      %v2958 = vunpack.c.l.s4 1983009808
      %v2959 = vunpack.c.0.s8 %v2958
      %v2960 = vlaneseq
      %v2961 = vshrl.u32 %v2960, 7
      %v2962 = vsub.s32 %v2959, %v2961
      %v2963 = vrot.slane %v2949, %v2962
      %v2964 = vcombine.low %v1462, %v1466
      %v2965 = vcombine.high %v1462, %v1466
      %v2967 = vunpack.c.l.s4 1983009808
      %v2968 = vunpack.c.0.s8 %v2967
      %v2969 = vlaneseq
      %v2970 = vshrl.u32 %v2969, 7
      %v2971 = vsub.s32 %v2968, %v2970
      %v2972 = vrot.slane %v2964, %v2971
      %v2974 = vunpack.c.l.s4 1983009808
      %v2975 = vunpack.c.0.s8 %v2974
      %v2976 = vlaneseq
      %v2977 = vshrl.u32 %v2976, 7
      %v2978 = vsub.s32 %v2975, %v2977
      %v2979 = vrot.slane %v2965, %v2978
      %v2980 = vcombine.low %v2924, %v2940
      %v2981 = vcombine.high %v2924, %v2940
      %v2983 = vunpack.c.l.s4 1934713408
      %v2984 = vunpack.c.0.s8 %v2983
      %v2985 = vlaneseq
      %v2986 = vshrl.u32 %v2985, 7
      %v2987 = vsub.s32 %v2984, %v2986
      %v2988 = vrot.slane %v2980, %v2987
      %v2990 = vunpack.c.l.s4 1934713408
      %v2991 = vunpack.c.0.s8 %v2990
      %v2992 = vlaneseq
      %v2993 = vshrl.u32 %v2992, 7
      %v2994 = vsub.s32 %v2991, %v2993
      %v2995 = vrot.slane %v2981, %v2994
      %v2996 = vcombine.low %v2931, %v2947
      %v2997 = vcombine.high %v2931, %v2947
      %v2999 = vunpack.c.l.s4 1934713408
      %v3000 = vunpack.c.0.s8 %v2999
      %v3001 = vlaneseq
      %v3002 = vshrl.u32 %v3001, 7
      %v3003 = vsub.s32 %v3000, %v3002
      %v3004 = vrot.slane %v2996, %v3003
      %v3006 = vunpack.c.l.s4 1934713408
      %v3007 = vunpack.c.0.s8 %v3006
      %v3008 = vlaneseq
      %v3009 = vshrl.u32 %v3008, 7
      %v3010 = vsub.s32 %v3007, %v3009
      %v3011 = vrot.slane %v2997, %v3010
      %v3012 = vcombine.low %v2956, %v2972
      %v3013 = vcombine.high %v2956, %v2972
      %v3015 = vunpack.c.l.s4 1934713408
      %v3016 = vunpack.c.0.s8 %v3015
      %v3017 = vlaneseq
      %v3018 = vshrl.u32 %v3017, 7
      %v3019 = vsub.s32 %v3016, %v3018
      %v3020 = vrot.slane %v3012, %v3019
      %v3022 = vunpack.c.l.s4 1934713408
      %v3023 = vunpack.c.0.s8 %v3022
      %v3024 = vlaneseq
      %v3025 = vshrl.u32 %v3024, 7
      %v3026 = vsub.s32 %v3023, %v3025
      %v3027 = vrot.slane %v3013, %v3026
      %v3028 = vcombine.low %v2963, %v2979
      %v3029 = vcombine.high %v2963, %v2979
      %v3031 = vunpack.c.l.s4 1934713408
      %v3032 = vunpack.c.0.s8 %v3031
      %v3033 = vlaneseq
      %v3034 = vshrl.u32 %v3033, 7
      %v3035 = vsub.s32 %v3032, %v3034
      %v3036 = vrot.slane %v3028, %v3035
      %v3038 = vunpack.c.l.s4 1934713408
      %v3039 = vunpack.c.0.s8 %v3038
      %v3040 = vlaneseq
      %v3041 = vshrl.u32 %v3040, 7
      %v3042 = vsub.s32 %v3039, %v3041
      %v3043 = vrot.slane %v3029, %v3042
      %v3044 = vcombine.low %v2988, %v3020
      %v3045 = vcombine.high %v2988, %v3020
      %v3046 = vcombine.low %v2995, %v3027
      %v3047 = vcombine.high %v2995, %v3027
      %v3048 = vcombine.low %v3004, %v3036
      %v3049 = vcombine.high %v3004, %v3036
      %v3050 = vcombine.low %v3011, %v3043
      %v3051 = vcombine.high %v3011, %v3043
      %v3052 = vcombine.low %v1484, %v1488
      %v3053 = vcombine.high %v1484, %v1488
      %v3055 = vunpack.c.l.s4 1983009808
      %v3056 = vunpack.c.0.s8 %v3055
      %v3057 = vlaneseq
      %v3058 = vshrl.u32 %v3057, 7
      %v3059 = vsub.s32 %v3056, %v3058
      %v3060 = vrot.slane %v3052, %v3059
      %v3062 = vunpack.c.l.s4 1983009808
      %v3063 = vunpack.c.0.s8 %v3062
      %v3064 = vlaneseq
      %v3065 = vshrl.u32 %v3064, 7
      %v3066 = vsub.s32 %v3063, %v3065
      %v3067 = vrot.slane %v3053, %v3066
      %v3068 = vcombine.low %v1486, %v1490
      %v3069 = vcombine.high %v1486, %v1490
      %v3071 = vunpack.c.l.s4 1983009808
      %v3072 = vunpack.c.0.s8 %v3071
      %v3073 = vlaneseq
      %v3074 = vshrl.u32 %v3073, 7
      %v3075 = vsub.s32 %v3072, %v3074
      %v3076 = vrot.slane %v3068, %v3075
      %v3078 = vunpack.c.l.s4 1983009808
      %v3079 = vunpack.c.0.s8 %v3078
      %v3080 = vlaneseq
      %v3081 = vshrl.u32 %v3080, 7
      %v3082 = vsub.s32 %v3079, %v3081
      %v3083 = vrot.slane %v3069, %v3082
      %v3084 = vcombine.low %v1492, %v1496
      %v3085 = vcombine.high %v1492, %v1496
      %v3087 = vunpack.c.l.s4 1983009808
      %v3088 = vunpack.c.0.s8 %v3087
      %v3089 = vlaneseq
      %v3090 = vshrl.u32 %v3089, 7
      %v3091 = vsub.s32 %v3088, %v3090
      %v3092 = vrot.slane %v3084, %v3091
      %v3094 = vunpack.c.l.s4 1983009808
      %v3095 = vunpack.c.0.s8 %v3094
      %v3096 = vlaneseq
      %v3097 = vshrl.u32 %v3096, 7
      %v3098 = vsub.s32 %v3095, %v3097
      %v3099 = vrot.slane %v3085, %v3098
      %v3100 = vcombine.low %v1494, %v1498
      %v3101 = vcombine.high %v1494, %v1498
      %v3103 = vunpack.c.l.s4 1983009808
      %v3104 = vunpack.c.0.s8 %v3103
      %v3105 = vlaneseq
      %v3106 = vshrl.u32 %v3105, 7
      %v3107 = vsub.s32 %v3104, %v3106
      %v3108 = vrot.slane %v3100, %v3107
      %v3110 = vunpack.c.l.s4 1983009808
      %v3111 = vunpack.c.0.s8 %v3110
      %v3112 = vlaneseq
      %v3113 = vshrl.u32 %v3112, 7
      %v3114 = vsub.s32 %v3111, %v3113
      %v3115 = vrot.slane %v3101, %v3114
      %v3116 = vcombine.low %v3060, %v3076
      %v3117 = vcombine.high %v3060, %v3076
      %v3119 = vunpack.c.l.s4 1934713408
      %v3120 = vunpack.c.0.s8 %v3119
      %v3121 = vlaneseq
      %v3122 = vshrl.u32 %v3121, 7
      %v3123 = vsub.s32 %v3120, %v3122
      %v3124 = vrot.slane %v3116, %v3123
      %v3126 = vunpack.c.l.s4 1934713408
      %v3127 = vunpack.c.0.s8 %v3126
      %v3128 = vlaneseq
      %v3129 = vshrl.u32 %v3128, 7
      %v3130 = vsub.s32 %v3127, %v3129
      %v3131 = vrot.slane %v3117, %v3130
      %v3132 = vcombine.low %v3067, %v3083
      %v3133 = vcombine.high %v3067, %v3083
      %v3135 = vunpack.c.l.s4 1934713408
      %v3136 = vunpack.c.0.s8 %v3135
      %v3137 = vlaneseq
      %v3138 = vshrl.u32 %v3137, 7
      %v3139 = vsub.s32 %v3136, %v3138
      %v3140 = vrot.slane %v3132, %v3139
      %v3142 = vunpack.c.l.s4 1934713408
      %v3143 = vunpack.c.0.s8 %v3142
      %v3144 = vlaneseq
      %v3145 = vshrl.u32 %v3144, 7
      %v3146 = vsub.s32 %v3143, %v3145
      %v3147 = vrot.slane %v3133, %v3146
      %v3148 = vcombine.low %v3092, %v3108
      %v3149 = vcombine.high %v3092, %v3108
      %v3151 = vunpack.c.l.s4 1934713408
      %v3152 = vunpack.c.0.s8 %v3151
      %v3153 = vlaneseq
      %v3154 = vshrl.u32 %v3153, 7
      %v3155 = vsub.s32 %v3152, %v3154
      %v3156 = vrot.slane %v3148, %v3155
      %v3158 = vunpack.c.l.s4 1934713408
      %v3159 = vunpack.c.0.s8 %v3158
      %v3160 = vlaneseq
      %v3161 = vshrl.u32 %v3160, 7
      %v3162 = vsub.s32 %v3159, %v3161
      %v3163 = vrot.slane %v3149, %v3162
      %v3164 = vcombine.low %v3099, %v3115
      %v3165 = vcombine.high %v3099, %v3115
      %v3167 = vunpack.c.l.s4 1934713408
      %v3168 = vunpack.c.0.s8 %v3167
      %v3169 = vlaneseq
      %v3170 = vshrl.u32 %v3169, 7
      %v3171 = vsub.s32 %v3168, %v3170
      %v3172 = vrot.slane %v3164, %v3171
      %v3174 = vunpack.c.l.s4 1934713408
      %v3175 = vunpack.c.0.s8 %v3174
      %v3176 = vlaneseq
      %v3177 = vshrl.u32 %v3176, 7
      %v3178 = vsub.s32 %v3175, %v3177
      %v3179 = vrot.slane %v3165, %v3178
      %v3180 = vcombine.low %v3124, %v3156
      %v3181 = vcombine.high %v3124, %v3156
      %v3182 = vcombine.low %v3131, %v3163
      %v3183 = vcombine.high %v3131, %v3163
      %v3184 = vcombine.low %v3140, %v3172
      %v3185 = vcombine.high %v3140, %v3172
      %v3186 = vcombine.low %v3147, %v3179
      %v3187 = vcombine.high %v3147, %v3179
      %v3188 = vcombine.low %v1500, %v1504
      %v3189 = vcombine.high %v1500, %v1504
      %v3191 = vunpack.c.l.s4 1983009808
      %v3192 = vunpack.c.0.s8 %v3191
      %v3193 = vlaneseq
      %v3194 = vshrl.u32 %v3193, 7
      %v3195 = vsub.s32 %v3192, %v3194
      %v3196 = vrot.slane %v3188, %v3195
      %v3198 = vunpack.c.l.s4 1983009808
      %v3199 = vunpack.c.0.s8 %v3198
      %v3200 = vlaneseq
      %v3201 = vshrl.u32 %v3200, 7
      %v3202 = vsub.s32 %v3199, %v3201
      %v3203 = vrot.slane %v3189, %v3202
      %v3204 = vcombine.low %v1502, %v1506
      %v3205 = vcombine.high %v1502, %v1506
      %v3207 = vunpack.c.l.s4 1983009808
      %v3208 = vunpack.c.0.s8 %v3207
      %v3209 = vlaneseq
      %v3210 = vshrl.u32 %v3209, 7
      %v3211 = vsub.s32 %v3208, %v3210
      %v3212 = vrot.slane %v3204, %v3211
      %v3214 = vunpack.c.l.s4 1983009808
      %v3215 = vunpack.c.0.s8 %v3214
      %v3216 = vlaneseq
      %v3217 = vshrl.u32 %v3216, 7
      %v3218 = vsub.s32 %v3215, %v3217
      %v3219 = vrot.slane %v3205, %v3218
      %v3220 = vcombine.low %v1508, %v1512
      %v3221 = vcombine.high %v1508, %v1512
      %v3223 = vunpack.c.l.s4 1983009808
      %v3224 = vunpack.c.0.s8 %v3223
      %v3225 = vlaneseq
      %v3226 = vshrl.u32 %v3225, 7
      %v3227 = vsub.s32 %v3224, %v3226
      %v3228 = vrot.slane %v3220, %v3227
      %v3230 = vunpack.c.l.s4 1983009808
      %v3231 = vunpack.c.0.s8 %v3230
      %v3232 = vlaneseq
      %v3233 = vshrl.u32 %v3232, 7
      %v3234 = vsub.s32 %v3231, %v3233
      %v3235 = vrot.slane %v3221, %v3234
      %v3236 = vcombine.low %v1510, %v1514
      %v3237 = vcombine.high %v1510, %v1514
      %v3239 = vunpack.c.l.s4 1983009808
      %v3240 = vunpack.c.0.s8 %v3239
      %v3241 = vlaneseq
      %v3242 = vshrl.u32 %v3241, 7
      %v3243 = vsub.s32 %v3240, %v3242
      %v3244 = vrot.slane %v3236, %v3243
      %v3246 = vunpack.c.l.s4 1983009808
      %v3247 = vunpack.c.0.s8 %v3246
      %v3248 = vlaneseq
      %v3249 = vshrl.u32 %v3248, 7
      %v3250 = vsub.s32 %v3247, %v3249
      %v3251 = vrot.slane %v3237, %v3250
      %v3252 = vcombine.low %v3196, %v3212
      %v3253 = vcombine.high %v3196, %v3212
      %v3255 = vunpack.c.l.s4 1934713408
      %v3256 = vunpack.c.0.s8 %v3255
      %v3257 = vlaneseq
      %v3258 = vshrl.u32 %v3257, 7
      %v3259 = vsub.s32 %v3256, %v3258
      %v3260 = vrot.slane %v3252, %v3259
      %v3262 = vunpack.c.l.s4 1934713408
      %v3263 = vunpack.c.0.s8 %v3262
      %v3264 = vlaneseq
      %v3265 = vshrl.u32 %v3264, 7
      %v3266 = vsub.s32 %v3263, %v3265
      %v3267 = vrot.slane %v3253, %v3266
      %v3268 = vcombine.low %v3203, %v3219
      %v3269 = vcombine.high %v3203, %v3219
      %v3271 = vunpack.c.l.s4 1934713408
      %v3272 = vunpack.c.0.s8 %v3271
      %v3273 = vlaneseq
      %v3274 = vshrl.u32 %v3273, 7
      %v3275 = vsub.s32 %v3272, %v3274
      %v3276 = vrot.slane %v3268, %v3275
      %v3278 = vunpack.c.l.s4 1934713408
      %v3279 = vunpack.c.0.s8 %v3278
      %v3280 = vlaneseq
      %v3281 = vshrl.u32 %v3280, 7
      %v3282 = vsub.s32 %v3279, %v3281
      %v3283 = vrot.slane %v3269, %v3282
      %v3284 = vcombine.low %v3228, %v3244
      %v3285 = vcombine.high %v3228, %v3244
      %v3287 = vunpack.c.l.s4 1934713408
      %v3288 = vunpack.c.0.s8 %v3287
      %v3289 = vlaneseq
      %v3290 = vshrl.u32 %v3289, 7
      %v3291 = vsub.s32 %v3288, %v3290
      %v3292 = vrot.slane %v3284, %v3291
      %v3294 = vunpack.c.l.s4 1934713408
      %v3295 = vunpack.c.0.s8 %v3294
      %v3296 = vlaneseq
      %v3297 = vshrl.u32 %v3296, 7
      %v3298 = vsub.s32 %v3295, %v3297
      %v3299 = vrot.slane %v3285, %v3298
      %v3300 = vcombine.low %v3235, %v3251
      %v3301 = vcombine.high %v3235, %v3251
      %v3303 = vunpack.c.l.s4 1934713408
      %v3304 = vunpack.c.0.s8 %v3303
      %v3305 = vlaneseq
      %v3306 = vshrl.u32 %v3305, 7
      %v3307 = vsub.s32 %v3304, %v3306
      %v3308 = vrot.slane %v3300, %v3307
      %v3310 = vunpack.c.l.s4 1934713408
      %v3311 = vunpack.c.0.s8 %v3310
      %v3312 = vlaneseq
      %v3313 = vshrl.u32 %v3312, 7
      %v3314 = vsub.s32 %v3311, %v3313
      %v3315 = vrot.slane %v3301, %v3314
      %v3316 = vcombine.low %v3260, %v3292
      %v3317 = vcombine.high %v3260, %v3292
      %v3318 = vcombine.low %v3267, %v3299
      %v3319 = vcombine.high %v3267, %v3299
      %v3320 = vcombine.low %v3276, %v3308
      %v3321 = vcombine.high %v3276, %v3308
      %v3322 = vcombine.low %v3283, %v3315
      %v3323 = vcombine.high %v3283, %v3315
      %v3324 = vcombine.low %v1534, %v1540
      %v3325 = vcombine.high %v1534, %v1540
      %v3327 = vunpack.c.l.s4 1983009808
      %v3328 = vunpack.c.0.s8 %v3327
      %v3329 = vlaneseq
      %v3330 = vshrl.u32 %v3329, 7
      %v3331 = vsub.s32 %v3328, %v3330
      %v3332 = vrot.slane %v3324, %v3331
      %v3334 = vunpack.c.l.s4 1983009808
      %v3335 = vunpack.c.0.s8 %v3334
      %v3336 = vlaneseq
      %v3337 = vshrl.u32 %v3336, 7
      %v3338 = vsub.s32 %v3335, %v3337
      %v3339 = vrot.slane %v3325, %v3338
      %v3340 = vcombine.low %v1537, %v1543
      %v3341 = vcombine.high %v1537, %v1543
      %v3343 = vunpack.c.l.s4 1983009808
      %v3344 = vunpack.c.0.s8 %v3343
      %v3345 = vlaneseq
      %v3346 = vshrl.u32 %v3345, 7
      %v3347 = vsub.s32 %v3344, %v3346
      %v3348 = vrot.slane %v3340, %v3347
      %v3350 = vunpack.c.l.s4 1983009808
      %v3351 = vunpack.c.0.s8 %v3350
      %v3352 = vlaneseq
      %v3353 = vshrl.u32 %v3352, 7
      %v3354 = vsub.s32 %v3351, %v3353
      %v3355 = vrot.slane %v3341, %v3354
      %v3356 = vcombine.low %v1546, %v1552
      %v3357 = vcombine.high %v1546, %v1552
      %v3359 = vunpack.c.l.s4 1983009808
      %v3360 = vunpack.c.0.s8 %v3359
      %v3361 = vlaneseq
      %v3362 = vshrl.u32 %v3361, 7
      %v3363 = vsub.s32 %v3360, %v3362
      %v3364 = vrot.slane %v3356, %v3363
      %v3366 = vunpack.c.l.s4 1983009808
      %v3367 = vunpack.c.0.s8 %v3366
      %v3368 = vlaneseq
      %v3369 = vshrl.u32 %v3368, 7
      %v3370 = vsub.s32 %v3367, %v3369
      %v3371 = vrot.slane %v3357, %v3370
      %v3372 = vcombine.low %v1549, %v1555
      %v3373 = vcombine.high %v1549, %v1555
      %v3375 = vunpack.c.l.s4 1983009808
      %v3376 = vunpack.c.0.s8 %v3375
      %v3377 = vlaneseq
      %v3378 = vshrl.u32 %v3377, 7
      %v3379 = vsub.s32 %v3376, %v3378
      %v3380 = vrot.slane %v3372, %v3379
      %v3382 = vunpack.c.l.s4 1983009808
      %v3383 = vunpack.c.0.s8 %v3382
      %v3384 = vlaneseq
      %v3385 = vshrl.u32 %v3384, 7
      %v3386 = vsub.s32 %v3383, %v3385
      %v3387 = vrot.slane %v3373, %v3386
      %v3388 = vcombine.low %v3332, %v3348
      %v3389 = vcombine.high %v3332, %v3348
      %v3391 = vunpack.c.l.s4 1934713408
      %v3392 = vunpack.c.0.s8 %v3391
      %v3393 = vlaneseq
      %v3394 = vshrl.u32 %v3393, 7
      %v3395 = vsub.s32 %v3392, %v3394
      %v3396 = vrot.slane %v3388, %v3395
      %v3398 = vunpack.c.l.s4 1934713408
      %v3399 = vunpack.c.0.s8 %v3398
      %v3400 = vlaneseq
      %v3401 = vshrl.u32 %v3400, 7
      %v3402 = vsub.s32 %v3399, %v3401
      %v3403 = vrot.slane %v3389, %v3402
      %v3404 = vcombine.low %v3339, %v3355
      %v3405 = vcombine.high %v3339, %v3355
      %v3407 = vunpack.c.l.s4 1934713408
      %v3408 = vunpack.c.0.s8 %v3407
      %v3409 = vlaneseq
      %v3410 = vshrl.u32 %v3409, 7
      %v3411 = vsub.s32 %v3408, %v3410
      %v3412 = vrot.slane %v3404, %v3411
      %v3414 = vunpack.c.l.s4 1934713408
      %v3415 = vunpack.c.0.s8 %v3414
      %v3416 = vlaneseq
      %v3417 = vshrl.u32 %v3416, 7
      %v3418 = vsub.s32 %v3415, %v3417
      %v3419 = vrot.slane %v3405, %v3418
      %v3420 = vcombine.low %v3364, %v3380
      %v3421 = vcombine.high %v3364, %v3380
      %v3423 = vunpack.c.l.s4 1934713408
      %v3424 = vunpack.c.0.s8 %v3423
      %v3425 = vlaneseq
      %v3426 = vshrl.u32 %v3425, 7
      %v3427 = vsub.s32 %v3424, %v3426
      %v3428 = vrot.slane %v3420, %v3427
      %v3430 = vunpack.c.l.s4 1934713408
      %v3431 = vunpack.c.0.s8 %v3430
      %v3432 = vlaneseq
      %v3433 = vshrl.u32 %v3432, 7
      %v3434 = vsub.s32 %v3431, %v3433
      %v3435 = vrot.slane %v3421, %v3434
      %v3436 = vcombine.low %v3371, %v3387
      %v3437 = vcombine.high %v3371, %v3387
      %v3439 = vunpack.c.l.s4 1934713408
      %v3440 = vunpack.c.0.s8 %v3439
      %v3441 = vlaneseq
      %v3442 = vshrl.u32 %v3441, 7
      %v3443 = vsub.s32 %v3440, %v3442
      %v3444 = vrot.slane %v3436, %v3443
      %v3446 = vunpack.c.l.s4 1934713408
      %v3447 = vunpack.c.0.s8 %v3446
      %v3448 = vlaneseq
      %v3449 = vshrl.u32 %v3448, 7
      %v3450 = vsub.s32 %v3447, %v3449
      %v3451 = vrot.slane %v3437, %v3450
      %v3452 = vcombine.low %v3396, %v3428
      %v3453 = vcombine.high %v3396, %v3428
      %v3454 = vcombine.low %v3403, %v3435
      %v3455 = vcombine.high %v3403, %v3435
      %v3456 = vcombine.low %v3412, %v3444
      %v3457 = vcombine.high %v3412, %v3444
      %v3458 = vcombine.low %v3419, %v3451
      %v3459 = vcombine.high %v3419, %v3451
      %v3460 = vcombine.low %v1558, %v1564
      %v3461 = vcombine.high %v1558, %v1564
      %v3463 = vunpack.c.l.s4 1983009808
      %v3464 = vunpack.c.0.s8 %v3463
      %v3465 = vlaneseq
      %v3466 = vshrl.u32 %v3465, 7
      %v3467 = vsub.s32 %v3464, %v3466
      %v3468 = vrot.slane %v3460, %v3467
      %v3470 = vunpack.c.l.s4 1983009808
      %v3471 = vunpack.c.0.s8 %v3470
      %v3472 = vlaneseq
      %v3473 = vshrl.u32 %v3472, 7
      %v3474 = vsub.s32 %v3471, %v3473
      %v3475 = vrot.slane %v3461, %v3474
      %v3476 = vcombine.low %v1561, %v1567
      %v3477 = vcombine.high %v1561, %v1567
      %v3479 = vunpack.c.l.s4 1983009808
      %v3480 = vunpack.c.0.s8 %v3479
      %v3481 = vlaneseq
      %v3482 = vshrl.u32 %v3481, 7
      %v3483 = vsub.s32 %v3480, %v3482
      %v3484 = vrot.slane %v3476, %v3483
      %v3486 = vunpack.c.l.s4 1983009808
      %v3487 = vunpack.c.0.s8 %v3486
      %v3488 = vlaneseq
      %v3489 = vshrl.u32 %v3488, 7
      %v3490 = vsub.s32 %v3487, %v3489
      %v3491 = vrot.slane %v3477, %v3490
      %v3492 = vcombine.low %v1570, %v1576
      %v3493 = vcombine.high %v1570, %v1576
      %v3495 = vunpack.c.l.s4 1983009808
      %v3496 = vunpack.c.0.s8 %v3495
      %v3497 = vlaneseq
      %v3498 = vshrl.u32 %v3497, 7
      %v3499 = vsub.s32 %v3496, %v3498
      %v3500 = vrot.slane %v3492, %v3499
      %v3502 = vunpack.c.l.s4 1983009808
      %v3503 = vunpack.c.0.s8 %v3502
      %v3504 = vlaneseq
      %v3505 = vshrl.u32 %v3504, 7
      %v3506 = vsub.s32 %v3503, %v3505
      %v3507 = vrot.slane %v3493, %v3506
      %v3508 = vcombine.low %v1573, %v1579
      %v3509 = vcombine.high %v1573, %v1579
      %v3511 = vunpack.c.l.s4 1983009808
      %v3512 = vunpack.c.0.s8 %v3511
      %v3513 = vlaneseq
      %v3514 = vshrl.u32 %v3513, 7
      %v3515 = vsub.s32 %v3512, %v3514
      %v3516 = vrot.slane %v3508, %v3515
      %v3518 = vunpack.c.l.s4 1983009808
      %v3519 = vunpack.c.0.s8 %v3518
      %v3520 = vlaneseq
      %v3521 = vshrl.u32 %v3520, 7
      %v3522 = vsub.s32 %v3519, %v3521
      %v3523 = vrot.slane %v3509, %v3522
      %v3524 = vcombine.low %v3468, %v3484
      %v3525 = vcombine.high %v3468, %v3484
      %v3527 = vunpack.c.l.s4 1934713408
      %v3528 = vunpack.c.0.s8 %v3527
      %v3529 = vlaneseq
      %v3530 = vshrl.u32 %v3529, 7
      %v3531 = vsub.s32 %v3528, %v3530
      %v3532 = vrot.slane %v3524, %v3531
      %v3534 = vunpack.c.l.s4 1934713408
      %v3535 = vunpack.c.0.s8 %v3534
      %v3536 = vlaneseq
      %v3537 = vshrl.u32 %v3536, 7
      %v3538 = vsub.s32 %v3535, %v3537
      %v3539 = vrot.slane %v3525, %v3538
      %v3540 = vcombine.low %v3475, %v3491
      %v3541 = vcombine.high %v3475, %v3491
      %v3543 = vunpack.c.l.s4 1934713408
      %v3544 = vunpack.c.0.s8 %v3543
      %v3545 = vlaneseq
      %v3546 = vshrl.u32 %v3545, 7
      %v3547 = vsub.s32 %v3544, %v3546
      %v3548 = vrot.slane %v3540, %v3547
      %v3550 = vunpack.c.l.s4 1934713408
      %v3551 = vunpack.c.0.s8 %v3550
      %v3552 = vlaneseq
      %v3553 = vshrl.u32 %v3552, 7
      %v3554 = vsub.s32 %v3551, %v3553
      %v3555 = vrot.slane %v3541, %v3554
      %v3556 = vcombine.low %v3500, %v3516
      %v3557 = vcombine.high %v3500, %v3516
      %v3559 = vunpack.c.l.s4 1934713408
      %v3560 = vunpack.c.0.s8 %v3559
      %v3561 = vlaneseq
      %v3562 = vshrl.u32 %v3561, 7
      %v3563 = vsub.s32 %v3560, %v3562
      %v3564 = vrot.slane %v3556, %v3563
      %v3566 = vunpack.c.l.s4 1934713408
      %v3567 = vunpack.c.0.s8 %v3566
      %v3568 = vlaneseq
      %v3569 = vshrl.u32 %v3568, 7
      %v3570 = vsub.s32 %v3567, %v3569
      %v3571 = vrot.slane %v3557, %v3570
      %v3572 = vcombine.low %v3507, %v3523
      %v3573 = vcombine.high %v3507, %v3523
      %v3575 = vunpack.c.l.s4 1934713408
      %v3576 = vunpack.c.0.s8 %v3575
      %v3577 = vlaneseq
      %v3578 = vshrl.u32 %v3577, 7
      %v3579 = vsub.s32 %v3576, %v3578
      %v3580 = vrot.slane %v3572, %v3579
      %v3582 = vunpack.c.l.s4 1934713408
      %v3583 = vunpack.c.0.s8 %v3582
      %v3584 = vlaneseq
      %v3585 = vshrl.u32 %v3584, 7
      %v3586 = vsub.s32 %v3583, %v3585
      %v3587 = vrot.slane %v3573, %v3586
      %v3588 = vcombine.low %v3532, %v3564
      %v3589 = vcombine.high %v3532, %v3564
      %v3590 = vcombine.low %v3539, %v3571
      %v3591 = vcombine.high %v3539, %v3571
      %v3592 = vcombine.low %v3548, %v3580
      %v3593 = vcombine.high %v3548, %v3580
      %v3594 = vcombine.low %v3555, %v3587
      %v3595 = vcombine.high %v3555, %v3587
      %v3596 = vcombine.low %v1597, %v1601
      %v3597 = vcombine.high %v1597, %v1601
      %v3599 = vunpack.c.l.s4 1983009808
      %v3600 = vunpack.c.0.s8 %v3599
      %v3601 = vlaneseq
      %v3602 = vshrl.u32 %v3601, 7
      %v3603 = vsub.s32 %v3600, %v3602
      %v3604 = vrot.slane %v3596, %v3603
      %v3606 = vunpack.c.l.s4 1983009808
      %v3607 = vunpack.c.0.s8 %v3606
      %v3608 = vlaneseq
      %v3609 = vshrl.u32 %v3608, 7
      %v3610 = vsub.s32 %v3607, %v3609
      %v3611 = vrot.slane %v3597, %v3610
      %v3612 = vcombine.low %v1599, %v1603
      %v3613 = vcombine.high %v1599, %v1603
      %v3615 = vunpack.c.l.s4 1983009808
      %v3616 = vunpack.c.0.s8 %v3615
      %v3617 = vlaneseq
      %v3618 = vshrl.u32 %v3617, 7
      %v3619 = vsub.s32 %v3616, %v3618
      %v3620 = vrot.slane %v3612, %v3619
      %v3622 = vunpack.c.l.s4 1983009808
      %v3623 = vunpack.c.0.s8 %v3622
      %v3624 = vlaneseq
      %v3625 = vshrl.u32 %v3624, 7
      %v3626 = vsub.s32 %v3623, %v3625
      %v3627 = vrot.slane %v3613, %v3626
      %v3628 = vcombine.low %v1605, %v1609
      %v3629 = vcombine.high %v1605, %v1609
      %v3631 = vunpack.c.l.s4 1983009808
      %v3632 = vunpack.c.0.s8 %v3631
      %v3633 = vlaneseq
      %v3634 = vshrl.u32 %v3633, 7
      %v3635 = vsub.s32 %v3632, %v3634
      %v3636 = vrot.slane %v3628, %v3635
      %v3638 = vunpack.c.l.s4 1983009808
      %v3639 = vunpack.c.0.s8 %v3638
      %v3640 = vlaneseq
      %v3641 = vshrl.u32 %v3640, 7
      %v3642 = vsub.s32 %v3639, %v3641
      %v3643 = vrot.slane %v3629, %v3642
      %v3644 = vcombine.low %v1607, %v1611
      %v3645 = vcombine.high %v1607, %v1611
      %v3647 = vunpack.c.l.s4 1983009808
      %v3648 = vunpack.c.0.s8 %v3647
      %v3649 = vlaneseq
      %v3650 = vshrl.u32 %v3649, 7
      %v3651 = vsub.s32 %v3648, %v3650
      %v3652 = vrot.slane %v3644, %v3651
      %v3654 = vunpack.c.l.s4 1983009808
      %v3655 = vunpack.c.0.s8 %v3654
      %v3656 = vlaneseq
      %v3657 = vshrl.u32 %v3656, 7
      %v3658 = vsub.s32 %v3655, %v3657
      %v3659 = vrot.slane %v3645, %v3658
      %v3660 = vcombine.low %v3604, %v3620
      %v3661 = vcombine.high %v3604, %v3620
      %v3663 = vunpack.c.l.s4 1934713408
      %v3664 = vunpack.c.0.s8 %v3663
      %v3665 = vlaneseq
      %v3666 = vshrl.u32 %v3665, 7
      %v3667 = vsub.s32 %v3664, %v3666
      %v3668 = vrot.slane %v3660, %v3667
      %v3670 = vunpack.c.l.s4 1934713408
      %v3671 = vunpack.c.0.s8 %v3670
      %v3672 = vlaneseq
      %v3673 = vshrl.u32 %v3672, 7
      %v3674 = vsub.s32 %v3671, %v3673
      %v3675 = vrot.slane %v3661, %v3674
      %v3676 = vcombine.low %v3611, %v3627
      %v3677 = vcombine.high %v3611, %v3627
      %v3679 = vunpack.c.l.s4 1934713408
      %v3680 = vunpack.c.0.s8 %v3679
      %v3681 = vlaneseq
      %v3682 = vshrl.u32 %v3681, 7
      %v3683 = vsub.s32 %v3680, %v3682
      %v3684 = vrot.slane %v3676, %v3683
      %v3686 = vunpack.c.l.s4 1934713408
      %v3687 = vunpack.c.0.s8 %v3686
      %v3688 = vlaneseq
      %v3689 = vshrl.u32 %v3688, 7
      %v3690 = vsub.s32 %v3687, %v3689
      %v3691 = vrot.slane %v3677, %v3690
      %v3692 = vcombine.low %v3636, %v3652
      %v3693 = vcombine.high %v3636, %v3652
      %v3695 = vunpack.c.l.s4 1934713408
      %v3696 = vunpack.c.0.s8 %v3695
      %v3697 = vlaneseq
      %v3698 = vshrl.u32 %v3697, 7
      %v3699 = vsub.s32 %v3696, %v3698
      %v3700 = vrot.slane %v3692, %v3699
      %v3702 = vunpack.c.l.s4 1934713408
      %v3703 = vunpack.c.0.s8 %v3702
      %v3704 = vlaneseq
      %v3705 = vshrl.u32 %v3704, 7
      %v3706 = vsub.s32 %v3703, %v3705
      %v3707 = vrot.slane %v3693, %v3706
      %v3708 = vcombine.low %v3643, %v3659
      %v3709 = vcombine.high %v3643, %v3659
      %v3711 = vunpack.c.l.s4 1934713408
      %v3712 = vunpack.c.0.s8 %v3711
      %v3713 = vlaneseq
      %v3714 = vshrl.u32 %v3713, 7
      %v3715 = vsub.s32 %v3712, %v3714
      %v3716 = vrot.slane %v3708, %v3715
      %v3718 = vunpack.c.l.s4 1934713408
      %v3719 = vunpack.c.0.s8 %v3718
      %v3720 = vlaneseq
      %v3721 = vshrl.u32 %v3720, 7
      %v3722 = vsub.s32 %v3719, %v3721
      %v3723 = vrot.slane %v3709, %v3722
      %v3724 = vcombine.low %v3668, %v3700
      %v3725 = vcombine.high %v3668, %v3700
      %v3726 = vcombine.low %v3675, %v3707
      %v3727 = vcombine.high %v3675, %v3707
      %v3728 = vcombine.low %v3684, %v3716
      %v3729 = vcombine.high %v3684, %v3716
      %v3730 = vcombine.low %v3691, %v3723
      %v3731 = vcombine.high %v3691, %v3723
      %v3732 = vcombine.low %v1613, %v1617
      %v3733 = vcombine.high %v1613, %v1617
      %v3735 = vunpack.c.l.s4 1983009808
      %v3736 = vunpack.c.0.s8 %v3735
      %v3737 = vlaneseq
      %v3738 = vshrl.u32 %v3737, 7
      %v3739 = vsub.s32 %v3736, %v3738
      %v3740 = vrot.slane %v3732, %v3739
      %v3742 = vunpack.c.l.s4 1983009808
      %v3743 = vunpack.c.0.s8 %v3742
      %v3744 = vlaneseq
      %v3745 = vshrl.u32 %v3744, 7
      %v3746 = vsub.s32 %v3743, %v3745
      %v3747 = vrot.slane %v3733, %v3746
      %v3748 = vcombine.low %v1615, %v1619
      %v3749 = vcombine.high %v1615, %v1619
      %v3751 = vunpack.c.l.s4 1983009808
      %v3752 = vunpack.c.0.s8 %v3751
      %v3753 = vlaneseq
      %v3754 = vshrl.u32 %v3753, 7
      %v3755 = vsub.s32 %v3752, %v3754
      %v3756 = vrot.slane %v3748, %v3755
      %v3758 = vunpack.c.l.s4 1983009808
      %v3759 = vunpack.c.0.s8 %v3758
      %v3760 = vlaneseq
      %v3761 = vshrl.u32 %v3760, 7
      %v3762 = vsub.s32 %v3759, %v3761
      %v3763 = vrot.slane %v3749, %v3762
      %v3764 = vcombine.low %v1621, %v1625
      %v3765 = vcombine.high %v1621, %v1625
      %v3767 = vunpack.c.l.s4 1983009808
      %v3768 = vunpack.c.0.s8 %v3767
      %v3769 = vlaneseq
      %v3770 = vshrl.u32 %v3769, 7
      %v3771 = vsub.s32 %v3768, %v3770
      %v3772 = vrot.slane %v3764, %v3771
      %v3774 = vunpack.c.l.s4 1983009808
      %v3775 = vunpack.c.0.s8 %v3774
      %v3776 = vlaneseq
      %v3777 = vshrl.u32 %v3776, 7
      %v3778 = vsub.s32 %v3775, %v3777
      %v3779 = vrot.slane %v3765, %v3778
      %v3780 = vcombine.low %v1623, %v1627
      %v3781 = vcombine.high %v1623, %v1627
      %v3783 = vunpack.c.l.s4 1983009808
      %v3784 = vunpack.c.0.s8 %v3783
      %v3785 = vlaneseq
      %v3786 = vshrl.u32 %v3785, 7
      %v3787 = vsub.s32 %v3784, %v3786
      %v3788 = vrot.slane %v3780, %v3787
      %v3790 = vunpack.c.l.s4 1983009808
      %v3791 = vunpack.c.0.s8 %v3790
      %v3792 = vlaneseq
      %v3793 = vshrl.u32 %v3792, 7
      %v3794 = vsub.s32 %v3791, %v3793
      %v3795 = vrot.slane %v3781, %v3794
      %v3796 = vcombine.low %v3740, %v3756
      %v3797 = vcombine.high %v3740, %v3756
      %v3799 = vunpack.c.l.s4 1934713408
      %v3800 = vunpack.c.0.s8 %v3799
      %v3801 = vlaneseq
      %v3802 = vshrl.u32 %v3801, 7
      %v3803 = vsub.s32 %v3800, %v3802
      %v3804 = vrot.slane %v3796, %v3803
      %v3806 = vunpack.c.l.s4 1934713408
      %v3807 = vunpack.c.0.s8 %v3806
      %v3808 = vlaneseq
      %v3809 = vshrl.u32 %v3808, 7
      %v3810 = vsub.s32 %v3807, %v3809
      %v3811 = vrot.slane %v3797, %v3810
      %v3812 = vcombine.low %v3747, %v3763
      %v3813 = vcombine.high %v3747, %v3763
      %v3815 = vunpack.c.l.s4 1934713408
      %v3816 = vunpack.c.0.s8 %v3815
      %v3817 = vlaneseq
      %v3818 = vshrl.u32 %v3817, 7
      %v3819 = vsub.s32 %v3816, %v3818
      %v3820 = vrot.slane %v3812, %v3819
      %v3822 = vunpack.c.l.s4 1934713408
      %v3823 = vunpack.c.0.s8 %v3822
      %v3824 = vlaneseq
      %v3825 = vshrl.u32 %v3824, 7
      %v3826 = vsub.s32 %v3823, %v3825
      %v3827 = vrot.slane %v3813, %v3826
      %v3828 = vcombine.low %v3772, %v3788
      %v3829 = vcombine.high %v3772, %v3788
      %v3831 = vunpack.c.l.s4 1934713408
      %v3832 = vunpack.c.0.s8 %v3831
      %v3833 = vlaneseq
      %v3834 = vshrl.u32 %v3833, 7
      %v3835 = vsub.s32 %v3832, %v3834
      %v3836 = vrot.slane %v3828, %v3835
      %v3838 = vunpack.c.l.s4 1934713408
      %v3839 = vunpack.c.0.s8 %v3838
      %v3840 = vlaneseq
      %v3841 = vshrl.u32 %v3840, 7
      %v3842 = vsub.s32 %v3839, %v3841
      %v3843 = vrot.slane %v3829, %v3842
      %v3844 = vcombine.low %v3779, %v3795
      %v3845 = vcombine.high %v3779, %v3795
      %v3847 = vunpack.c.l.s4 1934713408
      %v3848 = vunpack.c.0.s8 %v3847
      %v3849 = vlaneseq
      %v3850 = vshrl.u32 %v3849, 7
      %v3851 = vsub.s32 %v3848, %v3850
      %v3852 = vrot.slane %v3844, %v3851
      %v3854 = vunpack.c.l.s4 1934713408
      %v3855 = vunpack.c.0.s8 %v3854
      %v3856 = vlaneseq
      %v3857 = vshrl.u32 %v3856, 7
      %v3858 = vsub.s32 %v3855, %v3857
      %v3859 = vrot.slane %v3845, %v3858
      %v3860 = vcombine.low %v3804, %v3836
      %v3861 = vcombine.high %v3804, %v3836
      %v3862 = vcombine.low %v3811, %v3843
      %v3863 = vcombine.high %v3811, %v3843
      %v3864 = vcombine.low %v3820, %v3852
      %v3865 = vcombine.high %v3820, %v3852
      %v3866 = vcombine.low %v3827, %v3859
      %v3867 = vcombine.high %v3827, %v3859
      %v3868 = vcombine.low %v1645, %v1649
      %v3869 = vcombine.high %v1645, %v1649
      %v3871 = vunpack.c.l.s4 1983009808
      %v3872 = vunpack.c.0.s8 %v3871
      %v3873 = vlaneseq
      %v3874 = vshrl.u32 %v3873, 7
      %v3875 = vsub.s32 %v3872, %v3874
      %v3876 = vrot.slane %v3868, %v3875
      %v3878 = vunpack.c.l.s4 1983009808
      %v3879 = vunpack.c.0.s8 %v3878
      %v3880 = vlaneseq
      %v3881 = vshrl.u32 %v3880, 7
      %v3882 = vsub.s32 %v3879, %v3881
      %v3883 = vrot.slane %v3869, %v3882
      %v3884 = vcombine.low %v1647, %v1651
      %v3885 = vcombine.high %v1647, %v1651
      %v3887 = vunpack.c.l.s4 1983009808
      %v3888 = vunpack.c.0.s8 %v3887
      %v3889 = vlaneseq
      %v3890 = vshrl.u32 %v3889, 7
      %v3891 = vsub.s32 %v3888, %v3890
      %v3892 = vrot.slane %v3884, %v3891
      %v3894 = vunpack.c.l.s4 1983009808
      %v3895 = vunpack.c.0.s8 %v3894
      %v3896 = vlaneseq
      %v3897 = vshrl.u32 %v3896, 7
      %v3898 = vsub.s32 %v3895, %v3897
      %v3899 = vrot.slane %v3885, %v3898
      %v3900 = vcombine.low %v1653, %v1657
      %v3901 = vcombine.high %v1653, %v1657
      %v3903 = vunpack.c.l.s4 1983009808
      %v3904 = vunpack.c.0.s8 %v3903
      %v3905 = vlaneseq
      %v3906 = vshrl.u32 %v3905, 7
      %v3907 = vsub.s32 %v3904, %v3906
      %v3908 = vrot.slane %v3900, %v3907
      %v3910 = vunpack.c.l.s4 1983009808
      %v3911 = vunpack.c.0.s8 %v3910
      %v3912 = vlaneseq
      %v3913 = vshrl.u32 %v3912, 7
      %v3914 = vsub.s32 %v3911, %v3913
      %v3915 = vrot.slane %v3901, %v3914
      %v3916 = vcombine.low %v1655, %v1659
      %v3917 = vcombine.high %v1655, %v1659
      %v3919 = vunpack.c.l.s4 1983009808
      %v3920 = vunpack.c.0.s8 %v3919
      %v3921 = vlaneseq
      %v3922 = vshrl.u32 %v3921, 7
      %v3923 = vsub.s32 %v3920, %v3922
      %v3924 = vrot.slane %v3916, %v3923
      %v3926 = vunpack.c.l.s4 1983009808
      %v3927 = vunpack.c.0.s8 %v3926
      %v3928 = vlaneseq
      %v3929 = vshrl.u32 %v3928, 7
      %v3930 = vsub.s32 %v3927, %v3929
      %v3931 = vrot.slane %v3917, %v3930
      %v3932 = vcombine.low %v3876, %v3892
      %v3933 = vcombine.high %v3876, %v3892
      %v3935 = vunpack.c.l.s4 1934713408
      %v3936 = vunpack.c.0.s8 %v3935
      %v3937 = vlaneseq
      %v3938 = vshrl.u32 %v3937, 7
      %v3939 = vsub.s32 %v3936, %v3938
      %v3940 = vrot.slane %v3932, %v3939
      %v3942 = vunpack.c.l.s4 1934713408
      %v3943 = vunpack.c.0.s8 %v3942
      %v3944 = vlaneseq
      %v3945 = vshrl.u32 %v3944, 7
      %v3946 = vsub.s32 %v3943, %v3945
      %v3947 = vrot.slane %v3933, %v3946
      %v3948 = vcombine.low %v3883, %v3899
      %v3949 = vcombine.high %v3883, %v3899
      %v3951 = vunpack.c.l.s4 1934713408
      %v3952 = vunpack.c.0.s8 %v3951
      %v3953 = vlaneseq
      %v3954 = vshrl.u32 %v3953, 7
      %v3955 = vsub.s32 %v3952, %v3954
      %v3956 = vrot.slane %v3948, %v3955
      %v3958 = vunpack.c.l.s4 1934713408
      %v3959 = vunpack.c.0.s8 %v3958
      %v3960 = vlaneseq
      %v3961 = vshrl.u32 %v3960, 7
      %v3962 = vsub.s32 %v3959, %v3961
      %v3963 = vrot.slane %v3949, %v3962
      %v3964 = vcombine.low %v3908, %v3924
      %v3965 = vcombine.high %v3908, %v3924
      %v3967 = vunpack.c.l.s4 1934713408
      %v3968 = vunpack.c.0.s8 %v3967
      %v3969 = vlaneseq
      %v3970 = vshrl.u32 %v3969, 7
      %v3971 = vsub.s32 %v3968, %v3970
      %v3972 = vrot.slane %v3964, %v3971
      %v3974 = vunpack.c.l.s4 1934713408
      %v3975 = vunpack.c.0.s8 %v3974
      %v3976 = vlaneseq
      %v3977 = vshrl.u32 %v3976, 7
      %v3978 = vsub.s32 %v3975, %v3977
      %v3979 = vrot.slane %v3965, %v3978
      %v3980 = vcombine.low %v3915, %v3931
      %v3981 = vcombine.high %v3915, %v3931
      %v3983 = vunpack.c.l.s4 1934713408
      %v3984 = vunpack.c.0.s8 %v3983
      %v3985 = vlaneseq
      %v3986 = vshrl.u32 %v3985, 7
      %v3987 = vsub.s32 %v3984, %v3986
      %v3988 = vrot.slane %v3980, %v3987
      %v3990 = vunpack.c.l.s4 1934713408
      %v3991 = vunpack.c.0.s8 %v3990
      %v3992 = vlaneseq
      %v3993 = vshrl.u32 %v3992, 7
      %v3994 = vsub.s32 %v3991, %v3993
      %v3995 = vrot.slane %v3981, %v3994
      %v3996 = vcombine.low %v3940, %v3972
      %v3997 = vcombine.high %v3940, %v3972
      %v3998 = vcombine.low %v3947, %v3979
      %v3999 = vcombine.high %v3947, %v3979
      %v4000 = vcombine.low %v3956, %v3988
      %v4001 = vcombine.high %v3956, %v3988
      %v4002 = vcombine.low %v3963, %v3995
      %v4003 = vcombine.high %v3963, %v3995
      %v4004 = vcombine.low %v1661, %v1665
      %v4005 = vcombine.high %v1661, %v1665
      %v4007 = vunpack.c.l.s4 1983009808
      %v4008 = vunpack.c.0.s8 %v4007
      %v4009 = vlaneseq
      %v4010 = vshrl.u32 %v4009, 7
      %v4011 = vsub.s32 %v4008, %v4010
      %v4012 = vrot.slane %v4004, %v4011
      %v4014 = vunpack.c.l.s4 1983009808
      %v4015 = vunpack.c.0.s8 %v4014
      %v4016 = vlaneseq
      %v4017 = vshrl.u32 %v4016, 7
      %v4018 = vsub.s32 %v4015, %v4017
      %v4019 = vrot.slane %v4005, %v4018
      %v4020 = vcombine.low %v1663, %v1667
      %v4021 = vcombine.high %v1663, %v1667
      %v4023 = vunpack.c.l.s4 1983009808
      %v4024 = vunpack.c.0.s8 %v4023
      %v4025 = vlaneseq
      %v4026 = vshrl.u32 %v4025, 7
      %v4027 = vsub.s32 %v4024, %v4026
      %v4028 = vrot.slane %v4020, %v4027
      %v4030 = vunpack.c.l.s4 1983009808
      %v4031 = vunpack.c.0.s8 %v4030
      %v4032 = vlaneseq
      %v4033 = vshrl.u32 %v4032, 7
      %v4034 = vsub.s32 %v4031, %v4033
      %v4035 = vrot.slane %v4021, %v4034
      %v4036 = vcombine.low %v1669, %v1673
      %v4037 = vcombine.high %v1669, %v1673
      %v4039 = vunpack.c.l.s4 1983009808
      %v4040 = vunpack.c.0.s8 %v4039
      %v4041 = vlaneseq
      %v4042 = vshrl.u32 %v4041, 7
      %v4043 = vsub.s32 %v4040, %v4042
      %v4044 = vrot.slane %v4036, %v4043
      %v4046 = vunpack.c.l.s4 1983009808
      %v4047 = vunpack.c.0.s8 %v4046
      %v4048 = vlaneseq
      %v4049 = vshrl.u32 %v4048, 7
      %v4050 = vsub.s32 %v4047, %v4049
      %v4051 = vrot.slane %v4037, %v4050
      %v4052 = vcombine.low %v1671, %v1675
      %v4053 = vcombine.high %v1671, %v1675
      %v4055 = vunpack.c.l.s4 1983009808
      %v4056 = vunpack.c.0.s8 %v4055
      %v4057 = vlaneseq
      %v4058 = vshrl.u32 %v4057, 7
      %v4059 = vsub.s32 %v4056, %v4058
      %v4060 = vrot.slane %v4052, %v4059
      %v4062 = vunpack.c.l.s4 1983009808
      %v4063 = vunpack.c.0.s8 %v4062
      %v4064 = vlaneseq
      %v4065 = vshrl.u32 %v4064, 7
      %v4066 = vsub.s32 %v4063, %v4065
      %v4067 = vrot.slane %v4053, %v4066
      %v4068 = vcombine.low %v4012, %v4028
      %v4069 = vcombine.high %v4012, %v4028
      %v4071 = vunpack.c.l.s4 1934713408
      %v4072 = vunpack.c.0.s8 %v4071
      %v4073 = vlaneseq
      %v4074 = vshrl.u32 %v4073, 7
      %v4075 = vsub.s32 %v4072, %v4074
      %v4076 = vrot.slane %v4068, %v4075
      %v4078 = vunpack.c.l.s4 1934713408
      %v4079 = vunpack.c.0.s8 %v4078
      %v4080 = vlaneseq
      %v4081 = vshrl.u32 %v4080, 7
      %v4082 = vsub.s32 %v4079, %v4081
      %v4083 = vrot.slane %v4069, %v4082
      %v4084 = vcombine.low %v4019, %v4035
      %v4085 = vcombine.high %v4019, %v4035
      %v4087 = vunpack.c.l.s4 1934713408
      %v4088 = vunpack.c.0.s8 %v4087
      %v4089 = vlaneseq
      %v4090 = vshrl.u32 %v4089, 7
      %v4091 = vsub.s32 %v4088, %v4090
      %v4092 = vrot.slane %v4084, %v4091
      %v4094 = vunpack.c.l.s4 1934713408
      %v4095 = vunpack.c.0.s8 %v4094
      %v4096 = vlaneseq
      %v4097 = vshrl.u32 %v4096, 7
      %v4098 = vsub.s32 %v4095, %v4097
      %v4099 = vrot.slane %v4085, %v4098
      %v4100 = vcombine.low %v4044, %v4060
      %v4101 = vcombine.high %v4044, %v4060
      %v4103 = vunpack.c.l.s4 1934713408
      %v4104 = vunpack.c.0.s8 %v4103
      %v4105 = vlaneseq
      %v4106 = vshrl.u32 %v4105, 7
      %v4107 = vsub.s32 %v4104, %v4106
      %v4108 = vrot.slane %v4100, %v4107
      %v4110 = vunpack.c.l.s4 1934713408
      %v4111 = vunpack.c.0.s8 %v4110
      %v4112 = vlaneseq
      %v4113 = vshrl.u32 %v4112, 7
      %v4114 = vsub.s32 %v4111, %v4113
      %v4115 = vrot.slane %v4101, %v4114
      %v4116 = vcombine.low %v4051, %v4067
      %v4117 = vcombine.high %v4051, %v4067
      %v4119 = vunpack.c.l.s4 1934713408
      %v4120 = vunpack.c.0.s8 %v4119
      %v4121 = vlaneseq
      %v4122 = vshrl.u32 %v4121, 7
      %v4123 = vsub.s32 %v4120, %v4122
      %v4124 = vrot.slane %v4116, %v4123
      %v4126 = vunpack.c.l.s4 1934713408
      %v4127 = vunpack.c.0.s8 %v4126
      %v4128 = vlaneseq
      %v4129 = vshrl.u32 %v4128, 7
      %v4130 = vsub.s32 %v4127, %v4129
      %v4131 = vrot.slane %v4117, %v4130
      %v4132 = vcombine.low %v4076, %v4108
      %v4133 = vcombine.high %v4076, %v4108
      %v4134 = vcombine.low %v4083, %v4115
      %v4135 = vcombine.high %v4083, %v4115
      %v4136 = vcombine.low %v4092, %v4124
      %v4137 = vcombine.high %v4092, %v4124
      %v4138 = vcombine.low %v4099, %v4131
      %v4139 = vcombine.high %v4099, %v4131
      %4158 = vrot.lane.b32.xlu0 %v1821, 8
      %v4159 = vpop.permute.xlu0 %4158
      %4160 = vrot.lane.b32.xlu0 %v1957, 8
      %v4161 = vpop.permute.xlu0 %4160
      %4162 = vrot.lane.b32.xlu0 %v2093, 8
      %v4163 = vpop.permute.xlu0 %4162
      %4164 = vrot.lane.b32.xlu0 %v2229, 8
      %v4165 = vpop.permute.xlu0 %4164
      %4166 = vrot.lane.b32.xlu0 %v2365, 8
      %v4167 = vpop.permute.xlu0 %4166
      %4168 = vrot.lane.b32.xlu0 %v2501, 8
      %v4169 = vpop.permute.xlu0 %4168
      %4170 = vrot.lane.b32.xlu0 %v2637, 8
      %v4171 = vpop.permute.xlu0 %4170
      %4172 = vrot.lane.b32.xlu0 %v2773, 8
      %v4173 = vpop.permute.xlu0 %4172
      %4174 = vrot.lane.b32.xlu0 %v2909, 8
      %v4175 = vpop.permute.xlu0 %4174
      %4176 = vrot.lane.b32.xlu0 %v3045, 8
      %v4177 = vpop.permute.xlu0 %4176
      %4178 = vrot.lane.b32.xlu0 %v3181, 8
      %v4179 = vpop.permute.xlu0 %4178
      %4180 = vrot.lane.b32.xlu0 %v3317, 8
      %v4181 = vpop.permute.xlu0 %4180
      %4182 = vrot.lane.b32.xlu0 %v3453, 8
      %v4183 = vpop.permute.xlu0 %4182
      %4184 = vrot.lane.b32.xlu0 %v3589, 8
      %v4185 = vpop.permute.xlu0 %4184
      %4186 = vrot.lane.b32.xlu0 %v3725, 8
      %v4187 = vpop.permute.xlu0 %4186
      %4188 = vrot.lane.b32.xlu0 %v3861, 8
      %v4189 = vpop.permute.xlu0 %4188
      %4190 = vrot.lane.b32.xlu0 %v3997, 8
      %v4191 = vpop.permute.xlu0 %4190
      %4192 = vrot.lane.b32.xlu0 %v4133, 8
      %v4193 = vpop.permute.xlu0 %4192
      %4230 = vrot.lane.b32.xlu0 %v1822, 16
      %v4231 = vpop.permute.xlu0 %4230
      %4232 = vrot.lane.b32.xlu0 %v1958, 16
      %v4233 = vpop.permute.xlu0 %4232
      %4234 = vrot.lane.b32.xlu0 %v2094, 16
      %v4235 = vpop.permute.xlu0 %4234
      %4236 = vrot.lane.b32.xlu0 %v2230, 16
      %v4237 = vpop.permute.xlu0 %4236
      %4238 = vrot.lane.b32.xlu0 %v2366, 16
      %v4239 = vpop.permute.xlu0 %4238
      %4240 = vrot.lane.b32.xlu0 %v2502, 16
      %v4241 = vpop.permute.xlu0 %4240
      %4242 = vrot.lane.b32.xlu0 %v2638, 16
      %v4243 = vpop.permute.xlu0 %4242
      %4244 = vrot.lane.b32.xlu0 %v2774, 16
      %v4245 = vpop.permute.xlu0 %4244
      %4246 = vrot.lane.b32.xlu0 %v2910, 16
      %v4247 = vpop.permute.xlu0 %4246
      %4248 = vrot.lane.b32.xlu0 %v3046, 16
      %v4249 = vpop.permute.xlu0 %4248
      %4250 = vrot.lane.b32.xlu0 %v3182, 16
      %v4251 = vpop.permute.xlu0 %4250
      %4252 = vrot.lane.b32.xlu0 %v3318, 16
      %v4253 = vpop.permute.xlu0 %4252
      %4254 = vrot.lane.b32.xlu0 %v3454, 16
      %v4255 = vpop.permute.xlu0 %4254
      %4256 = vrot.lane.b32.xlu0 %v3590, 16
      %v4257 = vpop.permute.xlu0 %4256
      %4258 = vrot.lane.b32.xlu0 %v3726, 16
      %v4259 = vpop.permute.xlu0 %4258
      %4260 = vrot.lane.b32.xlu0 %v3862, 16
      %v4261 = vpop.permute.xlu0 %4260
      %4262 = vrot.lane.b32.xlu0 %v3998, 16
      %v4263 = vpop.permute.xlu0 %4262
      %4264 = vrot.lane.b32.xlu0 %v4134, 16
      %v4265 = vpop.permute.xlu0 %4264
      %4302 = vrot.lane.b32.xlu0 %v1823, 24
      %v4303 = vpop.permute.xlu0 %4302
      %4304 = vrot.lane.b32.xlu0 %v1959, 24
      %v4305 = vpop.permute.xlu0 %4304
      %4306 = vrot.lane.b32.xlu0 %v2095, 24
      %v4307 = vpop.permute.xlu0 %4306
      %4308 = vrot.lane.b32.xlu0 %v2231, 24
      %v4309 = vpop.permute.xlu0 %4308
      %4310 = vrot.lane.b32.xlu0 %v2367, 24
      %v4311 = vpop.permute.xlu0 %4310
      %4312 = vrot.lane.b32.xlu0 %v2503, 24
      %v4313 = vpop.permute.xlu0 %4312
      %4314 = vrot.lane.b32.xlu0 %v2639, 24
      %v4315 = vpop.permute.xlu0 %4314
      %4316 = vrot.lane.b32.xlu0 %v2775, 24
      %v4317 = vpop.permute.xlu0 %4316
      %4318 = vrot.lane.b32.xlu0 %v2911, 24
      %v4319 = vpop.permute.xlu0 %4318
      %4320 = vrot.lane.b32.xlu0 %v3047, 24
      %v4321 = vpop.permute.xlu0 %4320
      %4322 = vrot.lane.b32.xlu0 %v3183, 24
      %v4323 = vpop.permute.xlu0 %4322
      %4324 = vrot.lane.b32.xlu0 %v3319, 24
      %v4325 = vpop.permute.xlu0 %4324
      %4326 = vrot.lane.b32.xlu0 %v3455, 24
      %v4327 = vpop.permute.xlu0 %4326
      %4328 = vrot.lane.b32.xlu0 %v3591, 24
      %v4329 = vpop.permute.xlu0 %4328
      %4330 = vrot.lane.b32.xlu0 %v3727, 24
      %v4331 = vpop.permute.xlu0 %4330
      %4332 = vrot.lane.b32.xlu0 %v3863, 24
      %v4333 = vpop.permute.xlu0 %4332
      %4334 = vrot.lane.b32.xlu0 %v3999, 24
      %v4335 = vpop.permute.xlu0 %4334
      %4336 = vrot.lane.b32.xlu0 %v4135, 24
      %v4337 = vpop.permute.xlu0 %4336
      %4374 = vrot.lane.b32.xlu0 %v1824, 32
      %v4375 = vpop.permute.xlu0 %4374
      %4376 = vrot.lane.b32.xlu0 %v1960, 32
      %v4377 = vpop.permute.xlu0 %4376
      %4378 = vrot.lane.b32.xlu0 %v2096, 32
      %v4379 = vpop.permute.xlu0 %4378
      %4380 = vrot.lane.b32.xlu0 %v2232, 32
      %v4381 = vpop.permute.xlu0 %4380
      %4382 = vrot.lane.b32.xlu0 %v2368, 32
      %v4383 = vpop.permute.xlu0 %4382
      %4384 = vrot.lane.b32.xlu0 %v2504, 32
      %v4385 = vpop.permute.xlu0 %4384
      %4386 = vrot.lane.b32.xlu0 %v2640, 32
      %v4387 = vpop.permute.xlu0 %4386
      %4388 = vrot.lane.b32.xlu0 %v2776, 32
      %v4389 = vpop.permute.xlu0 %4388
      %4390 = vrot.lane.b32.xlu0 %v2912, 32
      %v4391 = vpop.permute.xlu0 %4390
      %4392 = vrot.lane.b32.xlu0 %v3048, 32
      %v4393 = vpop.permute.xlu0 %4392
      %4394 = vrot.lane.b32.xlu0 %v3184, 32
      %v4395 = vpop.permute.xlu0 %4394
      %4396 = vrot.lane.b32.xlu0 %v3320, 32
      %v4397 = vpop.permute.xlu0 %4396
      %4398 = vrot.lane.b32.xlu0 %v3456, 32
      %v4399 = vpop.permute.xlu0 %4398
      %4400 = vrot.lane.b32.xlu0 %v3592, 32
      %v4401 = vpop.permute.xlu0 %4400
      %4402 = vrot.lane.b32.xlu0 %v3728, 32
      %v4403 = vpop.permute.xlu0 %4402
      %4404 = vrot.lane.b32.xlu0 %v3864, 32
      %v4405 = vpop.permute.xlu0 %4404
      %4406 = vrot.lane.b32.xlu0 %v4000, 32
      %v4407 = vpop.permute.xlu0 %4406
      %4408 = vrot.lane.b32.xlu0 %v4136, 32
      %v4409 = vpop.permute.xlu0 %4408
      %4446 = vrot.lane.b32.xlu0 %v1825, 40
      %v4447 = vpop.permute.xlu0 %4446
      %4448 = vrot.lane.b32.xlu0 %v1961, 40
      %v4449 = vpop.permute.xlu0 %4448
      %4450 = vrot.lane.b32.xlu0 %v2097, 40
      %v4451 = vpop.permute.xlu0 %4450
      %4452 = vrot.lane.b32.xlu0 %v2233, 40
      %v4453 = vpop.permute.xlu0 %4452
      %4454 = vrot.lane.b32.xlu0 %v2369, 40
      %v4455 = vpop.permute.xlu0 %4454
      %4456 = vrot.lane.b32.xlu0 %v2505, 40
      %v4457 = vpop.permute.xlu0 %4456
      %4458 = vrot.lane.b32.xlu0 %v2641, 40
      %v4459 = vpop.permute.xlu0 %4458
      %4460 = vrot.lane.b32.xlu0 %v2777, 40
      %v4461 = vpop.permute.xlu0 %4460
      %4462 = vrot.lane.b32.xlu0 %v2913, 40
      %v4463 = vpop.permute.xlu0 %4462
      %4464 = vrot.lane.b32.xlu0 %v3049, 40
      %v4465 = vpop.permute.xlu0 %4464
      %4466 = vrot.lane.b32.xlu0 %v3185, 40
      %v4467 = vpop.permute.xlu0 %4466
      %4468 = vrot.lane.b32.xlu0 %v3321, 40
      %v4469 = vpop.permute.xlu0 %4468
      %4470 = vrot.lane.b32.xlu0 %v3457, 40
      %v4471 = vpop.permute.xlu0 %4470
      %4472 = vrot.lane.b32.xlu0 %v3593, 40
      %v4473 = vpop.permute.xlu0 %4472
      %4474 = vrot.lane.b32.xlu0 %v3729, 40
      %v4475 = vpop.permute.xlu0 %4474
      %4476 = vrot.lane.b32.xlu0 %v3865, 40
      %v4477 = vpop.permute.xlu0 %4476
      %4478 = vrot.lane.b32.xlu0 %v4001, 40
      %v4479 = vpop.permute.xlu0 %4478
      %4480 = vrot.lane.b32.xlu0 %v4137, 40
      %v4481 = vpop.permute.xlu0 %4480
      %4518 = vrot.lane.b32.xlu0 %v1826, 48
      %v4519 = vpop.permute.xlu0 %4518
      %4520 = vrot.lane.b32.xlu0 %v1962, 48
      %v4521 = vpop.permute.xlu0 %4520
      %4522 = vrot.lane.b32.xlu0 %v2098, 48
      %v4523 = vpop.permute.xlu0 %4522
      %4524 = vrot.lane.b32.xlu0 %v2234, 48
      %v4525 = vpop.permute.xlu0 %4524
      %4526 = vrot.lane.b32.xlu0 %v2370, 48
      %v4527 = vpop.permute.xlu0 %4526
      %4528 = vrot.lane.b32.xlu0 %v2506, 48
      %v4529 = vpop.permute.xlu0 %4528
      %4530 = vrot.lane.b32.xlu0 %v2642, 48
      %v4531 = vpop.permute.xlu0 %4530
      %4532 = vrot.lane.b32.xlu0 %v2778, 48
      %v4533 = vpop.permute.xlu0 %4532
      %4534 = vrot.lane.b32.xlu0 %v2914, 48
      %v4535 = vpop.permute.xlu0 %4534
      %4536 = vrot.lane.b32.xlu0 %v3050, 48
      %v4537 = vpop.permute.xlu0 %4536
      %4538 = vrot.lane.b32.xlu0 %v3186, 48
      %v4539 = vpop.permute.xlu0 %4538
      %4540 = vrot.lane.b32.xlu0 %v3322, 48
      %v4541 = vpop.permute.xlu0 %4540
      %4542 = vrot.lane.b32.xlu0 %v3458, 48
      %v4543 = vpop.permute.xlu0 %4542
      %4544 = vrot.lane.b32.xlu0 %v3594, 48
      %v4545 = vpop.permute.xlu0 %4544
      %4546 = vrot.lane.b32.xlu0 %v3730, 48
      %v4547 = vpop.permute.xlu0 %4546
      %4548 = vrot.lane.b32.xlu0 %v3866, 48
      %v4549 = vpop.permute.xlu0 %4548
      %4550 = vrot.lane.b32.xlu0 %v4002, 48
      %v4551 = vpop.permute.xlu0 %4550
      %4552 = vrot.lane.b32.xlu0 %v4138, 48
      %v4553 = vpop.permute.xlu0 %4552
      %4590 = vrot.lane.b32.xlu0 %v1827, 56
      %v4591 = vpop.permute.xlu0 %4590
      %4592 = vrot.lane.b32.xlu0 %v1963, 56
      %v4593 = vpop.permute.xlu0 %4592
      %4594 = vrot.lane.b32.xlu0 %v2099, 56
      %v4595 = vpop.permute.xlu0 %4594
      %4596 = vrot.lane.b32.xlu0 %v2235, 56
      %v4597 = vpop.permute.xlu0 %4596
      %4598 = vrot.lane.b32.xlu0 %v2371, 56
      %v4599 = vpop.permute.xlu0 %4598
      %4600 = vrot.lane.b32.xlu0 %v2507, 56
      %v4601 = vpop.permute.xlu0 %4600
      %4602 = vrot.lane.b32.xlu0 %v2643, 56
      %v4603 = vpop.permute.xlu0 %4602
      %4604 = vrot.lane.b32.xlu0 %v2779, 56
      %v4605 = vpop.permute.xlu0 %4604
      %4606 = vrot.lane.b32.xlu0 %v2915, 56
      %v4607 = vpop.permute.xlu0 %4606
      %4608 = vrot.lane.b32.xlu0 %v3051, 56
      %v4609 = vpop.permute.xlu0 %4608
      %4610 = vrot.lane.b32.xlu0 %v3187, 56
      %v4611 = vpop.permute.xlu0 %4610
      %4612 = vrot.lane.b32.xlu0 %v3323, 56
      %v4613 = vpop.permute.xlu0 %4612
      %4614 = vrot.lane.b32.xlu0 %v3459, 56
      %v4615 = vpop.permute.xlu0 %4614
      %4616 = vrot.lane.b32.xlu0 %v3595, 56
      %v4617 = vpop.permute.xlu0 %4616
      %4618 = vrot.lane.b32.xlu0 %v3731, 56
      %v4619 = vpop.permute.xlu0 %4618
      %4620 = vrot.lane.b32.xlu0 %v3867, 56
      %v4621 = vpop.permute.xlu0 %4620
      %4622 = vrot.lane.b32.xlu0 %v4003, 56
      %v4623 = vpop.permute.xlu0 %4622
      %4624 = vrot.lane.b32.xlu0 %v4139, 56
      %v4625 = vpop.permute.xlu0 %4624
      %vm4644 = vcmask 64512
      %v4645 = vsel %vm4644, %v1820, %v4159
      %v4646 = vsel %vm4644, %v1956, %v4161
      %v4647 = vsel %vm4644, %v2092, %v4163
      %v4648 = vsel %vm4644, %v2228, %v4165
      %v4649 = vsel %vm4644, %v2364, %v4167
      %v4650 = vsel %vm4644, %v2500, %v4169
      %v4651 = vsel %vm4644, %v2636, %v4171
      %v4652 = vsel %vm4644, %v2772, %v4173
      %v4653 = vsel %vm4644, %v2908, %v4175
      %v4654 = vsel %vm4644, %v3044, %v4177
      %v4655 = vsel %vm4644, %v3180, %v4179
      %v4656 = vsel %vm4644, %v3316, %v4181
      %v4657 = vsel %vm4644, %v3452, %v4183
      %v4658 = vsel %vm4644, %v3588, %v4185
      %v4659 = vsel %vm4644, %v3724, %v4187
      %v4660 = vsel %vm4644, %v3860, %v4189
      %v4661 = vsel %vm4644, %v3996, %v4191
      %v4662 = vsel %vm4644, %v4132, %v4193
      %v4663 = vsel %vm236, %v4645, %v4231
      %v4664 = vsel %vm236, %v4646, %v4233
      %v4665 = vsel %vm236, %v4647, %v4235
      %v4666 = vsel %vm236, %v4648, %v4237
      %v4667 = vsel %vm236, %v4649, %v4239
      %v4668 = vsel %vm236, %v4650, %v4241
      %v4669 = vsel %vm236, %v4651, %v4243
      %v4670 = vsel %vm236, %v4652, %v4245
      %v4671 = vsel %vm236, %v4653, %v4247
      %v4672 = vsel %vm236, %v4654, %v4249
      %v4673 = vsel %vm236, %v4655, %v4251
      %v4674 = vsel %vm236, %v4656, %v4253
      %v4675 = vsel %vm236, %v4657, %v4255
      %v4676 = vsel %vm236, %v4658, %v4257
      %v4677 = vsel %vm236, %v4659, %v4259
      %v4678 = vsel %vm236, %v4660, %v4261
      %v4679 = vsel %vm236, %v4661, %v4263
      %v4680 = vsel %vm236, %v4662, %v4265
      %vm4681 = vcmask 195584
      %v4682 = vsel %vm4681, %v4663, %v4303
      %v4683 = vsel %vm4681, %v4664, %v4305
      %v4684 = vsel %vm4681, %v4665, %v4307
      %v4685 = vsel %vm4681, %v4666, %v4309
      %v4686 = vsel %vm4681, %v4667, %v4311
      %v4687 = vsel %vm4681, %v4668, %v4313
      %v4688 = vsel %vm4681, %v4669, %v4315
      %v4689 = vsel %vm4681, %v4670, %v4317
      %v4690 = vsel %vm4681, %v4671, %v4319
      %v4691 = vsel %vm4681, %v4672, %v4321
      %v4692 = vsel %vm4681, %v4673, %v4323
      %v4693 = vsel %vm4681, %v4674, %v4325
      %v4694 = vsel %vm4681, %v4675, %v4327
      %v4695 = vsel %vm4681, %v4676, %v4329
      %v4696 = vsel %vm4681, %v4677, %v4331
      %v4697 = vsel %vm4681, %v4678, %v4333
      %v4698 = vsel %vm4681, %v4679, %v4335
      %v4699 = vsel %vm4681, %v4680, %v4337
      %vm4700 = vcmask 261120
      %v4701 = vsel %vm4700, %v4682, %v4375
      %v4702 = vsel %vm4700, %v4683, %v4377
      %v4703 = vsel %vm4700, %v4684, %v4379
      %v4704 = vsel %vm4700, %v4685, %v4381
      %v4705 = vsel %vm4700, %v4686, %v4383
      %v4706 = vsel %vm4700, %v4687, %v4385
      %v4707 = vsel %vm4700, %v4688, %v4387
      %v4708 = vsel %vm4700, %v4689, %v4389
      %v4709 = vsel %vm4700, %v4690, %v4391
      %v4710 = vsel %vm4700, %v4691, %v4393
      %v4711 = vsel %vm4700, %v4692, %v4395
      %v4712 = vsel %vm4700, %v4693, %v4397
      %v4713 = vsel %vm4700, %v4694, %v4399
      %v4714 = vsel %vm4700, %v4695, %v4401
      %v4715 = vsel %vm4700, %v4696, %v4403
      %v4716 = vsel %vm4700, %v4697, %v4405
      %v4717 = vsel %vm4700, %v4698, %v4407
      %v4718 = vsel %vm4700, %v4699, %v4409
      %vm4719 = vcmask 326656
      %v4720 = vsel %vm4719, %v4701, %v4447
      %v4721 = vsel %vm4719, %v4702, %v4449
      %v4722 = vsel %vm4719, %v4703, %v4451
      %v4723 = vsel %vm4719, %v4704, %v4453
      %v4724 = vsel %vm4719, %v4705, %v4455
      %v4725 = vsel %vm4719, %v4706, %v4457
      %v4726 = vsel %vm4719, %v4707, %v4459
      %v4727 = vsel %vm4719, %v4708, %v4461
      %v4728 = vsel %vm4719, %v4709, %v4463
      %v4729 = vsel %vm4719, %v4710, %v4465
      %v4730 = vsel %vm4719, %v4711, %v4467
      %v4731 = vsel %vm4719, %v4712, %v4469
      %v4732 = vsel %vm4719, %v4713, %v4471
      %v4733 = vsel %vm4719, %v4714, %v4473
      %v4734 = vsel %vm4719, %v4715, %v4475
      %v4735 = vsel %vm4719, %v4716, %v4477
      %v4736 = vsel %vm4719, %v4717, %v4479
      %v4737 = vsel %vm4719, %v4718, %v4481
      %vm4738 = vcmask 392192
      %v4739 = vsel %vm4738, %v4720, %v4519
      %v4740 = vsel %vm4738, %v4721, %v4521
      %v4741 = vsel %vm4738, %v4722, %v4523
      %v4742 = vsel %vm4738, %v4723, %v4525
      %v4743 = vsel %vm4738, %v4724, %v4527
      %v4744 = vsel %vm4738, %v4725, %v4529
      %v4745 = vsel %vm4738, %v4726, %v4531
      %v4746 = vsel %vm4738, %v4727, %v4533
      %v4747 = vsel %vm4738, %v4728, %v4535
      %v4748 = vsel %vm4738, %v4729, %v4537
      %v4749 = vsel %vm4738, %v4730, %v4539
      %v4750 = vsel %vm4738, %v4731, %v4541
      %v4751 = vsel %vm4738, %v4732, %v4543
      %v4752 = vsel %vm4738, %v4733, %v4545
      %v4753 = vsel %vm4738, %v4734, %v4547
      %v4754 = vsel %vm4738, %v4735, %v4549
      %v4755 = vsel %vm4738, %v4736, %v4551
      %v4756 = vsel %vm4738, %v4737, %v4553
      %vm4757 = vcmask 457728
      %v4758 = vsel %vm4757, %v4739, %v4591
      %v4759 = vsel %vm4757, %v4740, %v4593
      %v4760 = vsel %vm4757, %v4741, %v4595
      %v4761 = vsel %vm4757, %v4742, %v4597
      %v4762 = vsel %vm4757, %v4743, %v4599
      %v4763 = vsel %vm4757, %v4744, %v4601
      %v4764 = vsel %vm4757, %v4745, %v4603
      %v4765 = vsel %vm4757, %v4746, %v4605
      %v4766 = vsel %vm4757, %v4747, %v4607
      %v4767 = vsel %vm4757, %v4748, %v4609
      %v4768 = vsel %vm4757, %v4749, %v4611
      %v4769 = vsel %vm4757, %v4750, %v4613
      %v4770 = vsel %vm4757, %v4751, %v4615
      %v4771 = vsel %vm4757, %v4752, %v4617
      %v4772 = vsel %vm4757, %v4753, %v4619
      %v4773 = vsel %vm4757, %v4754, %v4621
      %v4774 = vsel %vm4757, %v4755, %v4623
      %v4775 = vsel %vm4757, %v4756, %v4625
      %v4777 = vsel %vm236, %v201, 0
      %4779 = vmatprep.subr.mxu0 0.0
      %v4780 = vand.u32 %v4758, 4294901760
      %4781 = vmatpush1.msra.mxu0 %v4780
      %4782 = vmatprep.subr.mxu0 0.0
      %v4783 = vand.u32 %v4759, 4294901760
      %4784 = vmatpush1.msra.mxu0 %v4783
      %4785 = vmatprep.subr.mxu0 0.0
      %v4786 = vand.u32 %v4760, 4294901760
      %4787 = vmatpush1.msra.mxu0 %v4786
      %4788 = vmatprep.subr.mxu0 0.0
      %v4789 = vand.u32 %v4761, 4294901760
      %4790 = vmatpush1.msra.mxu0 %v4789
      %4791 = vmatprep.subr.mxu0 0.0
      %v4792 = vand.u32 %v4762, 4294901760
      %4793 = vmatpush1.msra.mxu0 %v4792
      %4794 = vmatprep.subr.mxu0 0.0
      %v4795 = vand.u32 %v4763, 4294901760
      %4796 = vmatpush1.msra.mxu0 %v4795
      %4797 = vmatprep.subr.mxu0 0.0
      %v4798 = vand.u32 %v4764, 4294901760
      %4799 = vmatpush1.msra.mxu0 %v4798
      %4800 = vmatprep.subr.mxu0 0.0
      %v4801 = vand.u32 %v4765, 4294901760
      %4802 = vmatpush1.msra.mxu0 %v4801
      %4803 = vmatprep.subr.mxu0 0.0
      %v4804 = vand.u32 %v4766, 4294901760
      %4805 = vmatpush1.msra.mxu0 %v4804
      %4806 = vmatprep.subr.mxu0 0.0
      %v4807 = vand.u32 %v4767, 4294901760
      %4808 = vmatpush1.msra.mxu0 %v4807
      %4809 = vmatprep.subr.mxu0 0.0
      %v4810 = vand.u32 %v4768, 4294901760
      %4811 = vmatpush1.msra.mxu0 %v4810
      %4812 = vmatprep.subr.mxu0 0.0
      %v4813 = vand.u32 %v4769, 4294901760
      %4814 = vmatpush1.msra.mxu0 %v4813
      %4815 = vmatprep.subr.mxu0 0.0
      %v4816 = vand.u32 %v4770, 4294901760
      %4817 = vmatpush1.msra.mxu0 %v4816
      %4818 = vmatprep.subr.mxu0 0.0
      %v4819 = vand.u32 %v4771, 4294901760
      %4820 = vmatpush1.msra.mxu0 %v4819
      %4821 = vmatprep.subr.mxu0 0.0
      %v4822 = vand.u32 %v4772, 4294901760
      %4823 = vmatpush1.msra.mxu0 %v4822
      %4824 = vmatprep.subr.mxu0 0.0
      %v4825 = vand.u32 %v4773, 4294901760
      %4826 = vmatpush1.msra.mxu0 %v4825
      %4827 = vmatprep.subr.mxu0 0.0
      %v4828 = vand.u32 %v4774, 4294901760
      %4829 = vmatpush1.msra.mxu0 %v4828
      %4830 = vmatprep.subr.mxu0 0.0
      %v4831 = vand.u32 %v4775, 4294901760
      %4832 = vmatpush1.msra.mxu0 %v4831
      %4833 = vmatprep.subr.mxu0 0.0
      %4834 = vmatpush1.msra.mxu0 0.0
      %4835 = vmatprep.subr.mxu0 0.0
      %4836 = vmatpush1.msra.mxu0 0.0
      %4837 = vmatprep.subr.mxu0 0.0
      %4838 = vmatpush1.msra.mxu0 0.0
      %4839 = vmatprep.subr.mxu0 0.0
      %4840 = vmatpush1.msra.mxu0 0.0
      %4841 = vmatprep.subr.mxu0 0.0
      %4842 = vmatpush1.msra.mxu0 0.0
      %4843 = vmatprep.subr.mxu0 0.0
      %4844 = vmatpush1.msra.mxu0 0.0
      %4845 = vmatprep.subr.mxu0 0.0
      %4846 = vmatpush1.msra.mxu0 0.0
      %4847 = vmatprep.subr.mxu0 0.0
      %4848 = vmatpush1.msra.mxu0 0.0
      %4849 = vmatprep.subr.mxu0 0.0
      %4850 = vmatpush1.msra.mxu0 0.0
      %4851 = vmatprep.subr.mxu0 0.0
      %4852 = vmatpush1.msra.mxu0 0.0
      %4853 = vmatprep.subr.mxu0 0.0
      %4854 = vmatpush1.msra.mxu0 0.0
      %4855 = vmatprep.subr.mxu0 0.0
      %4856 = vmatpush1.msra.mxu0 0.0
      %4857 = vmatprep.subr.mxu0 0.0
      %4858 = vmatpush1.msra.mxu0 0.0
      %4859 = vmatprep.subr.mxu0 0.0
      %4860 = vmatpush1.msra.mxu0 0.0
      %v4861 = vand.u32 %v4777, 4294901760
      %v4862 = vsub.f32 %v4777, %v4861
      %v4863 = vand.u32 %v4862, 4294901760
      %v4864 = vsub.f32 %v4862, %v4863
      %v4865 = vand.u32 %v4864, 4294901760
      %4866 = vmatprep.mubr.f32.mxu0 %v4865
      %v4867 = vand.u32 %v200, 4294901760
      %v4868 = vsub.f32 %v200, %v4867
      %v4869 = vand.u32 %v4868, 4294901760
      %v4870 = vsub.f32 %v4868, %v4869
      %v4871 = vand.u32 %v4870, 4294901760
      %4872 = vmatmul.mubr.f32.gmra.mrb[0].mxu0 %v4871
      %v4873 = vpop.f32.mrb[0].mxu0
      %v4874 = vadd.f32 0.0, %v4873
      %v4875 = vpop.f32.mrb[0].mxu0
      %4876 = vdwg.mxu0
      %4877 = vmatprep.subr.mxu0 0.0
      %v4878 = vand.u32 %v4758, 4294901760
      %v4879 = vsub.f32 %v4758, %v4878
      %v4880 = vand.u32 %v4879, 4294901760
      %v4881 = vsub.f32 %v4879, %v4880
      %v4882 = vand.u32 %v4881, 4294901760
      %4883 = vmatpush1.msra.mxu0 %v4882
      %4884 = vmatprep.subr.mxu0 0.0
      %v4885 = vand.u32 %v4759, 4294901760
      %v4886 = vsub.f32 %v4759, %v4885
      %v4887 = vand.u32 %v4886, 4294901760
      %v4888 = vsub.f32 %v4886, %v4887
      %v4889 = vand.u32 %v4888, 4294901760
      %4890 = vmatpush1.msra.mxu0 %v4889
      %4891 = vmatprep.subr.mxu0 0.0
      %v4892 = vand.u32 %v4760, 4294901760
      %v4893 = vsub.f32 %v4760, %v4892
      %v4894 = vand.u32 %v4893, 4294901760
      %v4895 = vsub.f32 %v4893, %v4894
      %v4896 = vand.u32 %v4895, 4294901760
      %4897 = vmatpush1.msra.mxu0 %v4896
      %4898 = vmatprep.subr.mxu0 0.0
      %v4899 = vand.u32 %v4761, 4294901760
      %v4900 = vsub.f32 %v4761, %v4899
      %v4901 = vand.u32 %v4900, 4294901760
      %v4902 = vsub.f32 %v4900, %v4901
      %v4903 = vand.u32 %v4902, 4294901760
      %4904 = vmatpush1.msra.mxu0 %v4903
      %4905 = vmatprep.subr.mxu0 0.0
      %v4906 = vand.u32 %v4762, 4294901760
      %v4907 = vsub.f32 %v4762, %v4906
      %v4908 = vand.u32 %v4907, 4294901760
      %v4909 = vsub.f32 %v4907, %v4908
      %v4910 = vand.u32 %v4909, 4294901760
      %4911 = vmatpush1.msra.mxu0 %v4910
      %4912 = vmatprep.subr.mxu0 0.0
      %v4913 = vand.u32 %v4763, 4294901760
      %v4914 = vsub.f32 %v4763, %v4913
      %v4915 = vand.u32 %v4914, 4294901760
      %v4916 = vsub.f32 %v4914, %v4915
      %v4917 = vand.u32 %v4916, 4294901760
      %4918 = vmatpush1.msra.mxu0 %v4917
      %4919 = vmatprep.subr.mxu0 0.0
      %v4920 = vand.u32 %v4764, 4294901760
      %v4921 = vsub.f32 %v4764, %v4920
      %v4922 = vand.u32 %v4921, 4294901760
      %v4923 = vsub.f32 %v4921, %v4922
      %v4924 = vand.u32 %v4923, 4294901760
      %4925 = vmatpush1.msra.mxu0 %v4924
      %4926 = vmatprep.subr.mxu0 0.0
      %v4927 = vand.u32 %v4765, 4294901760
      %v4928 = vsub.f32 %v4765, %v4927
      %v4929 = vand.u32 %v4928, 4294901760
      %v4930 = vsub.f32 %v4928, %v4929
      %v4931 = vand.u32 %v4930, 4294901760
      %4932 = vmatpush1.msra.mxu0 %v4931
      %4933 = vmatprep.subr.mxu0 0.0
      %v4934 = vand.u32 %v4766, 4294901760
      %v4935 = vsub.f32 %v4766, %v4934
      %v4936 = vand.u32 %v4935, 4294901760
      %v4937 = vsub.f32 %v4935, %v4936
      %v4938 = vand.u32 %v4937, 4294901760
      %4939 = vmatpush1.msra.mxu0 %v4938
      %4940 = vmatprep.subr.mxu0 0.0
      %v4941 = vand.u32 %v4767, 4294901760
      %v4942 = vsub.f32 %v4767, %v4941
      %v4943 = vand.u32 %v4942, 4294901760
      %v4944 = vsub.f32 %v4942, %v4943
      %v4945 = vand.u32 %v4944, 4294901760
      %4946 = vmatpush1.msra.mxu0 %v4945
      %4947 = vmatprep.subr.mxu0 0.0
      %v4948 = vand.u32 %v4768, 4294901760
      %v4949 = vsub.f32 %v4768, %v4948
      %v4950 = vand.u32 %v4949, 4294901760
      %v4951 = vsub.f32 %v4949, %v4950
      %v4952 = vand.u32 %v4951, 4294901760
      %4953 = vmatpush1.msra.mxu0 %v4952
      %4954 = vmatprep.subr.mxu0 0.0
      %v4955 = vand.u32 %v4769, 4294901760
      %v4956 = vsub.f32 %v4769, %v4955
      %v4957 = vand.u32 %v4956, 4294901760
      %v4958 = vsub.f32 %v4956, %v4957
      %v4959 = vand.u32 %v4958, 4294901760
      %4960 = vmatpush1.msra.mxu0 %v4959
      %4961 = vmatprep.subr.mxu0 0.0
      %v4962 = vand.u32 %v4770, 4294901760
      %v4963 = vsub.f32 %v4770, %v4962
      %v4964 = vand.u32 %v4963, 4294901760
      %v4965 = vsub.f32 %v4963, %v4964
      %v4966 = vand.u32 %v4965, 4294901760
      %4967 = vmatpush1.msra.mxu0 %v4966
      %4968 = vmatprep.subr.mxu0 0.0
      %v4969 = vand.u32 %v4771, 4294901760
      %v4970 = vsub.f32 %v4771, %v4969
      %v4971 = vand.u32 %v4970, 4294901760
      %v4972 = vsub.f32 %v4970, %v4971
      %v4973 = vand.u32 %v4972, 4294901760
      %4974 = vmatpush1.msra.mxu0 %v4973
      %4975 = vmatprep.subr.mxu0 0.0
      %v4976 = vand.u32 %v4772, 4294901760
      %v4977 = vsub.f32 %v4772, %v4976
      %v4978 = vand.u32 %v4977, 4294901760
      %v4979 = vsub.f32 %v4977, %v4978
      %v4980 = vand.u32 %v4979, 4294901760
      %4981 = vmatpush1.msra.mxu0 %v4980
      %4982 = vmatprep.subr.mxu0 0.0
      %v4983 = vand.u32 %v4773, 4294901760
      %v4984 = vsub.f32 %v4773, %v4983
      %v4985 = vand.u32 %v4984, 4294901760
      %v4986 = vsub.f32 %v4984, %v4985
      %v4987 = vand.u32 %v4986, 4294901760
      %4988 = vmatpush1.msra.mxu0 %v4987
      %4989 = vmatprep.subr.mxu0 0.0
      %v4990 = vand.u32 %v4774, 4294901760
      %v4991 = vsub.f32 %v4774, %v4990
      %v4992 = vand.u32 %v4991, 4294901760
      %v4993 = vsub.f32 %v4991, %v4992
      %v4994 = vand.u32 %v4993, 4294901760
      %4995 = vmatpush1.msra.mxu0 %v4994
      %4996 = vmatprep.subr.mxu0 0.0
      %v4997 = vand.u32 %v4775, 4294901760
      %v4998 = vsub.f32 %v4775, %v4997
      %v4999 = vand.u32 %v4998, 4294901760
      %v5000 = vsub.f32 %v4998, %v4999
      %v5001 = vand.u32 %v5000, 4294901760
      %5002 = vmatpush1.msra.mxu0 %v5001
      %5003 = vmatprep.subr.mxu0 0.0
      %5004 = vmatpush1.msra.mxu0 0.0
      %5005 = vmatprep.subr.mxu0 0.0
      %5006 = vmatpush1.msra.mxu0 0.0
      %5007 = vmatprep.subr.mxu0 0.0
      %5008 = vmatpush1.msra.mxu0 0.0
      %5009 = vmatprep.subr.mxu0 0.0
      %5010 = vmatpush1.msra.mxu0 0.0
      %5011 = vmatprep.subr.mxu0 0.0
      %5012 = vmatpush1.msra.mxu0 0.0
      %5013 = vmatprep.subr.mxu0 0.0
      %5014 = vmatpush1.msra.mxu0 0.0
      %5015 = vmatprep.subr.mxu0 0.0
      %5016 = vmatpush1.msra.mxu0 0.0
      %5017 = vmatprep.subr.mxu0 0.0
      %5018 = vmatpush1.msra.mxu0 0.0
      %5019 = vmatprep.subr.mxu0 0.0
      %5020 = vmatpush1.msra.mxu0 0.0
      %5021 = vmatprep.subr.mxu0 0.0
      %5022 = vmatpush1.msra.mxu0 0.0
      %5023 = vmatprep.subr.mxu0 0.0
      %5024 = vmatpush1.msra.mxu0 0.0
      %5025 = vmatprep.subr.mxu0 0.0
      %5026 = vmatpush1.msra.mxu0 0.0
      %5027 = vmatprep.subr.mxu0 0.0
      %5028 = vmatpush1.msra.mxu0 0.0
      %5029 = vmatprep.subr.mxu0 0.0
      %5030 = vmatpush1.msra.mxu0 0.0
      %v5031 = vand.u32 %v4777, 4294901760
      %5032 = vmatprep.mubr.f32.mxu0 %v5031
      %v5033 = vand.u32 %v200, 4294901760
      %5034 = vmatmul.mubr.f32.gmra.mrb[0].mxu0 %v5033
      %v5035 = vpop.f32.mrb[0].mxu0
      %v5036 = vadd.f32 %v4874, %v5035
      %v5037 = vpop.f32.mrb[0].mxu0
      %5038 = vdwg.mxu0
      %5039 = vmatprep.subr.mxu0 0.0
      %v5040 = vand.u32 %v4758, 4294901760
      %v5041 = vsub.f32 %v4758, %v5040
      %5042 = vmatpush1.msra.mxu0 %v5041
      %5043 = vmatprep.subr.mxu0 0.0
      %v5044 = vand.u32 %v4759, 4294901760
      %v5045 = vsub.f32 %v4759, %v5044
      %5046 = vmatpush1.msra.mxu0 %v5045
      %5047 = vmatprep.subr.mxu0 0.0
      %v5048 = vand.u32 %v4760, 4294901760
      %v5049 = vsub.f32 %v4760, %v5048
      %5050 = vmatpush1.msra.mxu0 %v5049
      %5051 = vmatprep.subr.mxu0 0.0
      %v5052 = vand.u32 %v4761, 4294901760
      %v5053 = vsub.f32 %v4761, %v5052
      %5054 = vmatpush1.msra.mxu0 %v5053
      %5055 = vmatprep.subr.mxu0 0.0
      %v5056 = vand.u32 %v4762, 4294901760
      %v5057 = vsub.f32 %v4762, %v5056
      %5058 = vmatpush1.msra.mxu0 %v5057
      %5059 = vmatprep.subr.mxu0 0.0
      %v5060 = vand.u32 %v4763, 4294901760
      %v5061 = vsub.f32 %v4763, %v5060
      %5062 = vmatpush1.msra.mxu0 %v5061
      %5063 = vmatprep.subr.mxu0 0.0
      %v5064 = vand.u32 %v4764, 4294901760
      %v5065 = vsub.f32 %v4764, %v5064
      %5066 = vmatpush1.msra.mxu0 %v5065
      %5067 = vmatprep.subr.mxu0 0.0
      %v5068 = vand.u32 %v4765, 4294901760
      %v5069 = vsub.f32 %v4765, %v5068
      %5070 = vmatpush1.msra.mxu0 %v5069
      %5071 = vmatprep.subr.mxu0 0.0
      %v5072 = vand.u32 %v4766, 4294901760
      %v5073 = vsub.f32 %v4766, %v5072
      %5074 = vmatpush1.msra.mxu0 %v5073
      %5075 = vmatprep.subr.mxu0 0.0
      %v5076 = vand.u32 %v4767, 4294901760
      %v5077 = vsub.f32 %v4767, %v5076
      %5078 = vmatpush1.msra.mxu0 %v5077
      %5079 = vmatprep.subr.mxu0 0.0
      %v5080 = vand.u32 %v4768, 4294901760
      %v5081 = vsub.f32 %v4768, %v5080
      %5082 = vmatpush1.msra.mxu0 %v5081
      %5083 = vmatprep.subr.mxu0 0.0
      %v5084 = vand.u32 %v4769, 4294901760
      %v5085 = vsub.f32 %v4769, %v5084
      %5086 = vmatpush1.msra.mxu0 %v5085
      %5087 = vmatprep.subr.mxu0 0.0
      %v5088 = vand.u32 %v4770, 4294901760
      %v5089 = vsub.f32 %v4770, %v5088
      %5090 = vmatpush1.msra.mxu0 %v5089
      %5091 = vmatprep.subr.mxu0 0.0
      %v5092 = vand.u32 %v4771, 4294901760
      %v5093 = vsub.f32 %v4771, %v5092
      %5094 = vmatpush1.msra.mxu0 %v5093
      %5095 = vmatprep.subr.mxu0 0.0
      %v5096 = vand.u32 %v4772, 4294901760
      %v5097 = vsub.f32 %v4772, %v5096
      %5098 = vmatpush1.msra.mxu0 %v5097
      %5099 = vmatprep.subr.mxu0 0.0
      %v5100 = vand.u32 %v4773, 4294901760
      %v5101 = vsub.f32 %v4773, %v5100
      %5102 = vmatpush1.msra.mxu0 %v5101
      %5103 = vmatprep.subr.mxu0 0.0
      %v5104 = vand.u32 %v4774, 4294901760
      %v5105 = vsub.f32 %v4774, %v5104
      %5106 = vmatpush1.msra.mxu0 %v5105
      %5107 = vmatprep.subr.mxu0 0.0
      %v5108 = vand.u32 %v4775, 4294901760
      %v5109 = vsub.f32 %v4775, %v5108
      %5110 = vmatpush1.msra.mxu0 %v5109
      %5111 = vmatprep.subr.mxu0 0.0
      %5112 = vmatpush1.msra.mxu0 0.0
      %5113 = vmatprep.subr.mxu0 0.0
      %5114 = vmatpush1.msra.mxu0 0.0
      %5115 = vmatprep.subr.mxu0 0.0
      %5116 = vmatpush1.msra.mxu0 0.0
      %5117 = vmatprep.subr.mxu0 0.0
      %5118 = vmatpush1.msra.mxu0 0.0
      %5119 = vmatprep.subr.mxu0 0.0
      %5120 = vmatpush1.msra.mxu0 0.0
      %5121 = vmatprep.subr.mxu0 0.0
      %5122 = vmatpush1.msra.mxu0 0.0
      %5123 = vmatprep.subr.mxu0 0.0
      %5124 = vmatpush1.msra.mxu0 0.0
      %5125 = vmatprep.subr.mxu0 0.0
      %5126 = vmatpush1.msra.mxu0 0.0
      %5127 = vmatprep.subr.mxu0 0.0
      %5128 = vmatpush1.msra.mxu0 0.0
      %5129 = vmatprep.subr.mxu0 0.0
      %5130 = vmatpush1.msra.mxu0 0.0
      %5131 = vmatprep.subr.mxu0 0.0
      %5132 = vmatpush1.msra.mxu0 0.0
      %5133 = vmatprep.subr.mxu0 0.0
      %5134 = vmatpush1.msra.mxu0 0.0
      %5135 = vmatprep.subr.mxu0 0.0
      %5136 = vmatpush1.msra.mxu0 0.0
      %5137 = vmatprep.subr.mxu0 0.0
      %5138 = vmatpush1.msra.mxu0 0.0
      %v5139 = vand.u32 %v4777, 4294901760
      %v5140 = vsub.f32 %v4777, %v5139
      %5141 = vmatprep.mubr.f32.mxu0 %v5140
      %v5142 = vand.u32 %v200, 4294901760
      %v5143 = vsub.f32 %v200, %v5142
      %5144 = vmatmul.mubr.f32.gmra.mrb[0].mxu0 %v5143
      %v5145 = vpop.f32.mrb[0].mxu0
      %v5146 = vadd.f32 %v5036, %v5145
      %v5147 = vpop.f32.mrb[0].mxu0
      %5148 = vdwg.mxu0
      %5149 = vmatprep.subr.mxu0 0.0
      %v5150 = vand.u32 %v4758, 4294901760
      %5151 = vmatpush1.msra.mxu0 %v5150
      %5152 = vmatprep.subr.mxu0 0.0
      %v5153 = vand.u32 %v4759, 4294901760
      %5154 = vmatpush1.msra.mxu0 %v5153
      %5155 = vmatprep.subr.mxu0 0.0
      %v5156 = vand.u32 %v4760, 4294901760
      %5157 = vmatpush1.msra.mxu0 %v5156
      %5158 = vmatprep.subr.mxu0 0.0
      %v5159 = vand.u32 %v4761, 4294901760
      %5160 = vmatpush1.msra.mxu0 %v5159
      %5161 = vmatprep.subr.mxu0 0.0
      %v5162 = vand.u32 %v4762, 4294901760
      %5163 = vmatpush1.msra.mxu0 %v5162
      %5164 = vmatprep.subr.mxu0 0.0
      %v5165 = vand.u32 %v4763, 4294901760
      %5166 = vmatpush1.msra.mxu0 %v5165
      %5167 = vmatprep.subr.mxu0 0.0
      %v5168 = vand.u32 %v4764, 4294901760
      %5169 = vmatpush1.msra.mxu0 %v5168
      %5170 = vmatprep.subr.mxu0 0.0
      %v5171 = vand.u32 %v4765, 4294901760
      %5172 = vmatpush1.msra.mxu0 %v5171
      %5173 = vmatprep.subr.mxu0 0.0
      %v5174 = vand.u32 %v4766, 4294901760
      %5175 = vmatpush1.msra.mxu0 %v5174
      %5176 = vmatprep.subr.mxu0 0.0
      %v5177 = vand.u32 %v4767, 4294901760
      %5178 = vmatpush1.msra.mxu0 %v5177
      %5179 = vmatprep.subr.mxu0 0.0
      %v5180 = vand.u32 %v4768, 4294901760
      %5181 = vmatpush1.msra.mxu0 %v5180
      %5182 = vmatprep.subr.mxu0 0.0
      %v5183 = vand.u32 %v4769, 4294901760
      %5184 = vmatpush1.msra.mxu0 %v5183
      %5185 = vmatprep.subr.mxu0 0.0
      %v5186 = vand.u32 %v4770, 4294901760
      %5187 = vmatpush1.msra.mxu0 %v5186
      %5188 = vmatprep.subr.mxu0 0.0
      %v5189 = vand.u32 %v4771, 4294901760
      %5190 = vmatpush1.msra.mxu0 %v5189
      %5191 = vmatprep.subr.mxu0 0.0
      %v5192 = vand.u32 %v4772, 4294901760
      %5193 = vmatpush1.msra.mxu0 %v5192
      %5194 = vmatprep.subr.mxu0 0.0
      %v5195 = vand.u32 %v4773, 4294901760
      %5196 = vmatpush1.msra.mxu0 %v5195
      %5197 = vmatprep.subr.mxu0 0.0
      %v5198 = vand.u32 %v4774, 4294901760
      %5199 = vmatpush1.msra.mxu0 %v5198
      %5200 = vmatprep.subr.mxu0 0.0
      %v5201 = vand.u32 %v4775, 4294901760
      %5202 = vmatpush1.msra.mxu0 %v5201
      %5203 = vmatprep.subr.mxu0 0.0
      %5204 = vmatpush1.msra.mxu0 0.0
      %5205 = vmatprep.subr.mxu0 0.0
      %5206 = vmatpush1.msra.mxu0 0.0
      %5207 = vmatprep.subr.mxu0 0.0
      %5208 = vmatpush1.msra.mxu0 0.0
      %5209 = vmatprep.subr.mxu0 0.0
      %5210 = vmatpush1.msra.mxu0 0.0
      %5211 = vmatprep.subr.mxu0 0.0
      %5212 = vmatpush1.msra.mxu0 0.0
      %5213 = vmatprep.subr.mxu0 0.0
      %5214 = vmatpush1.msra.mxu0 0.0
      %5215 = vmatprep.subr.mxu0 0.0
      %5216 = vmatpush1.msra.mxu0 0.0
      %5217 = vmatprep.subr.mxu0 0.0
      %5218 = vmatpush1.msra.mxu0 0.0
      %5219 = vmatprep.subr.mxu0 0.0
      %5220 = vmatpush1.msra.mxu0 0.0
      %5221 = vmatprep.subr.mxu0 0.0
      %5222 = vmatpush1.msra.mxu0 0.0
      %5223 = vmatprep.subr.mxu0 0.0
      %5224 = vmatpush1.msra.mxu0 0.0
      %5225 = vmatprep.subr.mxu0 0.0
      %5226 = vmatpush1.msra.mxu0 0.0
      %5227 = vmatprep.subr.mxu0 0.0
      %5228 = vmatpush1.msra.mxu0 0.0
      %5229 = vmatprep.subr.mxu0 0.0
      %5230 = vmatpush1.msra.mxu0 0.0
      %v5231 = vand.u32 %v4777, 4294901760
      %v5232 = vsub.f32 %v4777, %v5231
      %v5233 = vand.u32 %v5232, 4294901760
      %5234 = vmatprep.mubr.f32.mxu0 %v5233
      %v5235 = vand.u32 %v200, 4294901760
      %v5236 = vsub.f32 %v200, %v5235
      %v5237 = vand.u32 %v5236, 4294901760
      %5238 = vmatmul.mubr.f32.gmra.mrb[0].mxu0 %v5237
      %v5239 = vpop.f32.mrb[0].mxu0
      %v5240 = vadd.f32 %v5146, %v5239
      %v5241 = vpop.f32.mrb[0].mxu0
      %5242 = vdwg.mxu0
      %5243 = vmatprep.subr.mxu0 0.0
      %v5244 = vand.u32 %v4758, 4294901760
      %v5245 = vsub.f32 %v4758, %v5244
      %v5246 = vand.u32 %v5245, 4294901760
      %5247 = vmatpush1.msra.mxu0 %v5246
      %5248 = vmatprep.subr.mxu0 0.0
      %v5249 = vand.u32 %v4759, 4294901760
      %v5250 = vsub.f32 %v4759, %v5249
      %v5251 = vand.u32 %v5250, 4294901760
      %5252 = vmatpush1.msra.mxu0 %v5251
      %5253 = vmatprep.subr.mxu0 0.0
      %v5254 = vand.u32 %v4760, 4294901760
      %v5255 = vsub.f32 %v4760, %v5254
      %v5256 = vand.u32 %v5255, 4294901760
      %5257 = vmatpush1.msra.mxu0 %v5256
      %5258 = vmatprep.subr.mxu0 0.0
      %v5259 = vand.u32 %v4761, 4294901760
      %v5260 = vsub.f32 %v4761, %v5259
      %v5261 = vand.u32 %v5260, 4294901760
      %5262 = vmatpush1.msra.mxu0 %v5261
      %5263 = vmatprep.subr.mxu0 0.0
      %v5264 = vand.u32 %v4762, 4294901760
      %v5265 = vsub.f32 %v4762, %v5264
      %v5266 = vand.u32 %v5265, 4294901760
      %5267 = vmatpush1.msra.mxu0 %v5266
      %5268 = vmatprep.subr.mxu0 0.0
      %v5269 = vand.u32 %v4763, 4294901760
      %v5270 = vsub.f32 %v4763, %v5269
      %v5271 = vand.u32 %v5270, 4294901760
      %5272 = vmatpush1.msra.mxu0 %v5271
      %5273 = vmatprep.subr.mxu0 0.0
      %v5274 = vand.u32 %v4764, 4294901760
      %v5275 = vsub.f32 %v4764, %v5274
      %v5276 = vand.u32 %v5275, 4294901760
      %5277 = vmatpush1.msra.mxu0 %v5276
      %5278 = vmatprep.subr.mxu0 0.0
      %v5279 = vand.u32 %v4765, 4294901760
      %v5280 = vsub.f32 %v4765, %v5279
      %v5281 = vand.u32 %v5280, 4294901760
      %5282 = vmatpush1.msra.mxu0 %v5281
      %5283 = vmatprep.subr.mxu0 0.0
      %v5284 = vand.u32 %v4766, 4294901760
      %v5285 = vsub.f32 %v4766, %v5284
      %v5286 = vand.u32 %v5285, 4294901760
      %5287 = vmatpush1.msra.mxu0 %v5286
      %5288 = vmatprep.subr.mxu0 0.0
      %v5289 = vand.u32 %v4767, 4294901760
      %v5290 = vsub.f32 %v4767, %v5289
      %v5291 = vand.u32 %v5290, 4294901760
      %5292 = vmatpush1.msra.mxu0 %v5291
      %5293 = vmatprep.subr.mxu0 0.0
      %v5294 = vand.u32 %v4768, 4294901760
      %v5295 = vsub.f32 %v4768, %v5294
      %v5296 = vand.u32 %v5295, 4294901760
      %5297 = vmatpush1.msra.mxu0 %v5296
      %5298 = vmatprep.subr.mxu0 0.0
      %v5299 = vand.u32 %v4769, 4294901760
      %v5300 = vsub.f32 %v4769, %v5299
      %v5301 = vand.u32 %v5300, 4294901760
      %5302 = vmatpush1.msra.mxu0 %v5301
      %5303 = vmatprep.subr.mxu0 0.0
      %v5304 = vand.u32 %v4770, 4294901760
      %v5305 = vsub.f32 %v4770, %v5304
      %v5306 = vand.u32 %v5305, 4294901760
      %5307 = vmatpush1.msra.mxu0 %v5306
      %5308 = vmatprep.subr.mxu0 0.0
      %v5309 = vand.u32 %v4771, 4294901760
      %v5310 = vsub.f32 %v4771, %v5309
      %v5311 = vand.u32 %v5310, 4294901760
      %5312 = vmatpush1.msra.mxu0 %v5311
      %5313 = vmatprep.subr.mxu0 0.0
      %v5314 = vand.u32 %v4772, 4294901760
      %v5315 = vsub.f32 %v4772, %v5314
      %v5316 = vand.u32 %v5315, 4294901760
      %5317 = vmatpush1.msra.mxu0 %v5316
      %5318 = vmatprep.subr.mxu0 0.0
      %v5319 = vand.u32 %v4773, 4294901760
      %v5320 = vsub.f32 %v4773, %v5319
      %v5321 = vand.u32 %v5320, 4294901760
      %5322 = vmatpush1.msra.mxu0 %v5321
      %5323 = vmatprep.subr.mxu0 0.0
      %v5324 = vand.u32 %v4774, 4294901760
      %v5325 = vsub.f32 %v4774, %v5324
      %v5326 = vand.u32 %v5325, 4294901760
      %5327 = vmatpush1.msra.mxu0 %v5326
      %5328 = vmatprep.subr.mxu0 0.0
      %v5329 = vand.u32 %v4775, 4294901760
      %v5330 = vsub.f32 %v4775, %v5329
      %v5331 = vand.u32 %v5330, 4294901760
      %5332 = vmatpush1.msra.mxu0 %v5331
      %5333 = vmatprep.subr.mxu0 0.0
      %5334 = vmatpush1.msra.mxu0 0.0
      %5335 = vmatprep.subr.mxu0 0.0
      %5336 = vmatpush1.msra.mxu0 0.0
      %5337 = vmatprep.subr.mxu0 0.0
      %5338 = vmatpush1.msra.mxu0 0.0
      %5339 = vmatprep.subr.mxu0 0.0
      %5340 = vmatpush1.msra.mxu0 0.0
      %5341 = vmatprep.subr.mxu0 0.0
      %5342 = vmatpush1.msra.mxu0 0.0
      %5343 = vmatprep.subr.mxu0 0.0
      %5344 = vmatpush1.msra.mxu0 0.0
      %5345 = vmatprep.subr.mxu0 0.0
      %5346 = vmatpush1.msra.mxu0 0.0
      %5347 = vmatprep.subr.mxu0 0.0
      %5348 = vmatpush1.msra.mxu0 0.0
      %5349 = vmatprep.subr.mxu0 0.0
      %5350 = vmatpush1.msra.mxu0 0.0
      %5351 = vmatprep.subr.mxu0 0.0
      %5352 = vmatpush1.msra.mxu0 0.0
      %5353 = vmatprep.subr.mxu0 0.0
      %5354 = vmatpush1.msra.mxu0 0.0
      %5355 = vmatprep.subr.mxu0 0.0
      %5356 = vmatpush1.msra.mxu0 0.0
      %5357 = vmatprep.subr.mxu0 0.0
      %5358 = vmatpush1.msra.mxu0 0.0
      %5359 = vmatprep.subr.mxu0 0.0
      %5360 = vmatpush1.msra.mxu0 0.0
      %v5361 = vand.u32 %v4777, 4294901760
      %5362 = vmatprep.mubr.f32.mxu0 %v5361
      %v5363 = vand.u32 %v200, 4294901760
      %5364 = vmatmul.mubr.f32.gmra.mrb[0].mxu0 %v5363
      %v5365 = vpop.f32.mrb[0].mxu0
      %v5366 = vadd.f32 %v5240, %v5365
      %v5367 = vpop.f32.mrb[0].mxu0
      %5368 = vdwg.mxu0
      %5369 = vmatprep.subr.mxu0 0.0
      %v5370 = vand.u32 %v4758, 4294901760
      %5371 = vmatpush1.msra.mxu0 %v5370
      %5372 = vmatprep.subr.mxu0 0.0
      %v5373 = vand.u32 %v4759, 4294901760
      %5374 = vmatpush1.msra.mxu0 %v5373
      %5375 = vmatprep.subr.mxu0 0.0
      %v5376 = vand.u32 %v4760, 4294901760
      %5377 = vmatpush1.msra.mxu0 %v5376
      %5378 = vmatprep.subr.mxu0 0.0
      %v5379 = vand.u32 %v4761, 4294901760
      %5380 = vmatpush1.msra.mxu0 %v5379
      %5381 = vmatprep.subr.mxu0 0.0
      %v5382 = vand.u32 %v4762, 4294901760
      %5383 = vmatpush1.msra.mxu0 %v5382
      %5384 = vmatprep.subr.mxu0 0.0
      %v5385 = vand.u32 %v4763, 4294901760
      %5386 = vmatpush1.msra.mxu0 %v5385
      %5387 = vmatprep.subr.mxu0 0.0
      %v5388 = vand.u32 %v4764, 4294901760
      %5389 = vmatpush1.msra.mxu0 %v5388
      %5390 = vmatprep.subr.mxu0 0.0
      %v5391 = vand.u32 %v4765, 4294901760
      %5392 = vmatpush1.msra.mxu0 %v5391
      %5393 = vmatprep.subr.mxu0 0.0
      %v5394 = vand.u32 %v4766, 4294901760
      %5395 = vmatpush1.msra.mxu0 %v5394
      %5396 = vmatprep.subr.mxu0 0.0
      %v5397 = vand.u32 %v4767, 4294901760
      %5398 = vmatpush1.msra.mxu0 %v5397
      %5399 = vmatprep.subr.mxu0 0.0
      %v5400 = vand.u32 %v4768, 4294901760
      %5401 = vmatpush1.msra.mxu0 %v5400
      %5402 = vmatprep.subr.mxu0 0.0
      %v5403 = vand.u32 %v4769, 4294901760
      %5404 = vmatpush1.msra.mxu0 %v5403
      %5405 = vmatprep.subr.mxu0 0.0
      %v5406 = vand.u32 %v4770, 4294901760
      %5407 = vmatpush1.msra.mxu0 %v5406
      %5408 = vmatprep.subr.mxu0 0.0
      %v5409 = vand.u32 %v4771, 4294901760
      %5410 = vmatpush1.msra.mxu0 %v5409
      %5411 = vmatprep.subr.mxu0 0.0
      %v5412 = vand.u32 %v4772, 4294901760
      %5413 = vmatpush1.msra.mxu0 %v5412
      %5414 = vmatprep.subr.mxu0 0.0
      %v5415 = vand.u32 %v4773, 4294901760
      %5416 = vmatpush1.msra.mxu0 %v5415
      %5417 = vmatprep.subr.mxu0 0.0
      %v5418 = vand.u32 %v4774, 4294901760
      %5419 = vmatpush1.msra.mxu0 %v5418
      %5420 = vmatprep.subr.mxu0 0.0
      %v5421 = vand.u32 %v4775, 4294901760
      %5422 = vmatpush1.msra.mxu0 %v5421
      %5423 = vmatprep.subr.mxu0 0.0
      %5424 = vmatpush1.msra.mxu0 0.0
      %5425 = vmatprep.subr.mxu0 0.0
      %5426 = vmatpush1.msra.mxu0 0.0
      %5427 = vmatprep.subr.mxu0 0.0
      %5428 = vmatpush1.msra.mxu0 0.0
      %5429 = vmatprep.subr.mxu0 0.0
      %5430 = vmatpush1.msra.mxu0 0.0
      %5431 = vmatprep.subr.mxu0 0.0
      %5432 = vmatpush1.msra.mxu0 0.0
      %5433 = vmatprep.subr.mxu0 0.0
      %5434 = vmatpush1.msra.mxu0 0.0
      %5435 = vmatprep.subr.mxu0 0.0
      %5436 = vmatpush1.msra.mxu0 0.0
      %5437 = vmatprep.subr.mxu0 0.0
      %5438 = vmatpush1.msra.mxu0 0.0
      %5439 = vmatprep.subr.mxu0 0.0
      %5440 = vmatpush1.msra.mxu0 0.0
      %5441 = vmatprep.subr.mxu0 0.0
      %5442 = vmatpush1.msra.mxu0 0.0
      %5443 = vmatprep.subr.mxu0 0.0
      %5444 = vmatpush1.msra.mxu0 0.0
      %5445 = vmatprep.subr.mxu0 0.0
      %5446 = vmatpush1.msra.mxu0 0.0
      %5447 = vmatprep.subr.mxu0 0.0
      %5448 = vmatpush1.msra.mxu0 0.0
      %5449 = vmatprep.subr.mxu0 0.0
      %5450 = vmatpush1.msra.mxu0 0.0
      %v5451 = vand.u32 %v4777, 4294901760
      %5452 = vmatprep.mubr.f32.mxu0 %v5451
      %v5453 = vand.u32 %v200, 4294901760
      %5454 = vmatmul.mubr.f32.gmra.mrb[0].mxu0 %v5453
      %v5455 = vpop.f32.mrb[0].mxu0
      %v5456 = vadd.f32 %v5366, %v5455
      %v5457 = vpop.f32.mrb[0].mxu0
      %5458 = vdwg.mxu0
      %vm5459 = vcmask 523264
      %5460 = vst.msk [vmem:[%s195] sm:$0xff] %vm5459, %v5456
      %p5461 = scmp.lt.s32.totalorder %s15, 1
      %s5462 = scalar_select %p5461, %s15, 1
      %s5463 = smul.addr %s5462, 8
      %s5464 = scalar_lea.vmem %s4, %s5463
      // Predicated region
      $region37: #{_lambda_.1} parent=35 // pred_check
        %p5465 = pneg %p122
      $region38: #{_lambda_.1} parent=35 // pred_check_branch
        %5467 = sbr.rel (%p5465) target = $region40
      $region39: #{_lambda_.1} parent=35 // pred_region
        _
      $region40: #{_lambda_.1} parent=35 // pred_fallthru
        _
    $region36: #{_lambda_.1} parent=5 // pred_fallthru
      _
    %p5468 = scmp.le.s32.totalorder 2, %s10
    // Predicated region
    $region41: #{_lambda_.1} parent=5 // pred_check
      %p5469 = pneg %p5468
    $region42: #{_lambda_.1} parent=5 // pred_check_branch
      %5471 = sbr.rel (%p5469) target = $region44
    $region43: #{_lambda_.1} parent=5 // pred_region
      %s5472 = ssub.s32 %s10, 2
      // Predicated region
      $region45: #{_lambda_.1} parent=43 // pred_check
        %p5473 = pneg %p128
      $region46: #{_lambda_.1} parent=43 // pred_check_branch
        %5475 = sbr.rel (%p5473) target = $region48
      $region47: #{_lambda_.1} parent=43 // pred_region
        %p5476 = scmp.lt.s32.totalorder %s16, 1
        %s5477 = scalar_select %p5476, %s16, 1
        %s5478 = smul.addr %s5477, 8
        %s5479 = scalar_lea.vmem %s4, %s5478
      $region48: #{_lambda_.1} parent=43 // pred_fallthru
        _
    $region44: #{_lambda_.1} parent=5 // pred_fallthru
      _
  $region6: #{_lambda_.1} parent=0 // loop_footer
    %s14 = sadd.s32 1, %s10
  $region7: #{_lambda_.1} parent=0 // loop_footer_branch
    %9 = sbr.rel target = $region3
  $region8: #{_lambda_.1} parent=0 // loop_exit
    _

</llo_original>
